<compile_context>
chip_gen: v6e
topology: v6e:2x2x1
jax: 0.10.0
libtpu: 0.0.40
codegen_flags: <defaults>
</compile_context>

<pallas_src>
import functools

import jax
import jax.numpy as jnp
from jax.experimental import pallas as pl
from jax.experimental.pallas import tpu as pltpu


def _dwconv3d_gelu_kernel(x_main_ref, x_prev_ref, x_next_ref, w_ref, b_ref,
                          o_ref, *acc_scratch, C, D, TD, full_unroll, hoist_w,
                          exact_gelu):
    # x_main_ref: (TD, H, W*C)    depth planes [t*TD, t*TD+TD) of batch b
    # x_prev_ref: (H, W*C)        plane t*TD-1   (clamped; zeroed when t == 0)
    # x_next_ref: (H, W*C)        plane t*TD+TD  (clamped; zeroed on last tile)
    # w_ref:      (3, 9, 1, W*C)  f32 taps (kd, kh*3+kw), lane-tiled, with the
    #                             kw edge masks folded in
    # b_ref:      (1, W*C)        f32 bias, lane-tiled
    # o_ref:      (TD, H, W*C)
    # acc_scratch: () if full_unroll else a (2, H, W*C) f32 rolling accumulator
    _, H, WC = o_ref.shape
    f32 = jnp.float32
    t = pl.program_id(1)
    n_t = pl.num_programs(1)

    prev_ok = t > 0                  # is plane t*TD-1 inside the volume?
    next_ok = t < n_t - 1            # is plane t*TD+TD inside the volume?

    bias = b_ref[...]                # (1, WC) f32
    zero_plane = jnp.zeros((H, WC), f32)

    if hoist_w:
        # WC <= 128: all 27 taps fit in ~27 vregs -> hoist once at kernel start.
        w_all = w_ref[...]

        def W(kd, kh, kw):
            return w_all[kd, kh * 3 + kw]          # (1, WC)
    else:
        # Large WC: per-tap (1, WC) VMEM loads; vld slots are idle in this
        # VALU-bound body and this avoids pinning 27*ceil(WC/128) vregs.
        def W(kd, kh, kw):
            return w_ref[kd, kh * 3 + kw]          # (1, WC)

    # Row predicates for the h-1 / h+1 taps (selects, not 0-multiplies, so an
    # Inf/NaN in the wrapped row cannot leak through as 0*Inf).
    row = jax.lax.broadcasted_iota(jnp.int32, (H, 1), 0)
    m_top = row > 0
    m_bot = row < H - 1

    need_tail_mask = (D % TD) != 0   # only a partial last tile needs it

    def load_main(j):
        p = x_main_ref[j].astype(f32)
        if need_tail_mask:
            p = jnp.where(t * TD + j < D, p, zero_plane)
        return p

    def shifts(p):
        # 8 XLU rolls + 2 selects per *input* plane; reused by all (up to)
        # three output planes this plane feeds.
        up = jnp.where(m_top, pltpu.roll(p, 1, axis=0), zero_plane)       # x[h-1]
        dn = jnp.where(m_bot, pltpu.roll(p, H - 1, axis=0), zero_plane)   # x[h+1]
        return tuple(
            (pltpu.roll(q, C, axis=1),        # x[w-1]  (wrapped lanes killed
             q,                               #          by the folded kw mask)
             pltpu.roll(q, WC - C, axis=1))   # x[w+1]
            for q in (up, p, dn))

    def contrib(S, kd):
        # 9-tap contribution of one input plane to one output plane: three
        # short independent chains (one per kh) + a tree sum, keeping the VALU
        # issue-bound instead of latency-bound.
        parts = []
        for kh in range(3):
            s0, s1, s2 = S[kh]
            parts.append(s0 * W(kd, kh, 0) + s1 * W(kd, kh, 1)
                         + s2 * W(kd, kh, 2))
        return (parts[0] + parts[1]) + parts[2]

    inv_sqrt2 = f32(0.7071067811865476)

    def gelu_store(o_idx, acc):
        a = acc + bias
        if exact_gelu:
            # Exact erf GELU == torch.nn.GELU() default numerics.
            out = 0.5 * a * (1.0 + jax.lax.erf(a * inv_sqrt2))
        else:
            # tanh GELU: transcendental runs on the otherwise-idle EUP slot.
            out = jax.nn.gelu(a, approximate=True)
        o_ref[o_idx] = out.astype(o_ref.dtype)

    # --- depth pipeline -----------------------------------------------------
    # Output plane o needs input planes o-1 (kd=0), o (kd=1), o+1 (kd=2).
    # Walk the input planes once; scatter each plane's contributions into a
    # 2-slot rolling accumulator and retire one output plane per step.
    p_prev = jnp.where(prev_ok, x_prev_ref[...].astype(f32), zero_plane)
    S_prev = shifts(p_prev)                      # only its kd=0 tap is needed
    S0 = shifts(load_main(0))
    A = contrib(S_prev, 0) + contrib(S0, 1)      # partial sum for output 0
    Bacc = contrib(S0, 0)                        # partial sum for output 1

    if full_unroll:
        # Small planes / small TD: carry the two partial sums in vregs.
        for o in range(TD - 1):
            S = shifts(load_main(o + 1))
            gelu_store(o, A + contrib(S, 2))
            A = Bacc + contrib(S, 1)
            Bacc = contrib(S, 0)
        p_next = jnp.where(next_ok, x_next_ref[...].astype(f32), zero_plane)
        gelu_store(TD - 1, A + contrib(shifts(p_next), 2))
    else:
        # Larger tiles: keep the rolling partial sums in a small VMEM ring.
        acc_ref, = acc_scratch                   # (2, H, WC) f32
        acc_ref[0] = A
        acc_ref[1] = Bacc

        def body(o, carry):
            S = shifts(load_main(o + 1))
            gelu_store(o, acc_ref[o & 1] + contrib(S, 2))
            acc_ref[(o + 1) & 1] = acc_ref[(o + 1) & 1] + contrib(S, 1)
            acc_ref[o & 1] = contrib(S, 0)
            return carry

        jax.lax.fori_loop(0, TD - 1, body, 0, unroll=2)

        p_next = jnp.where(next_ok, x_next_ref[...].astype(f32), zero_plane)
        gelu_store(TD - 1, acc_ref[(TD - 1) & 1] + contrib(shifts(p_next), 2))


def _vmem_capacity_bytes():
    try:
        return int(pltpu.get_tpu_info().vmem_capacity_bytes)
    except Exception:
        return 64 << 20  # conservative fallback: smallest (v7x per-TC) VMEM


def _pick_d_tile(B, D, plane_bytes, vmem_cap):
    """cdiv-based depth tile, as large as the generation's VMEM comfortably
    allows (footprint ~= 4x tile for double-buffered in+out), with at least
    two grid steps overall so a v7x megacore never sits half idle."""
    tile_target = (12 << 20) if vmem_cap >= (96 << 20) else (8 << 20)
    td = max(1, min(D, tile_target // max(plane_bytes, 1)))
    n_t = pl.cdiv(D, td)
    if B * n_t < 2 and D > 1:            # guarantee >= 2 grid steps
        td = pl.cdiv(D, 2)
        n_t = pl.cdiv(D, td)
    if (B % 2 == 1) and ((B * n_t) % 2 == 1) and n_t < D:
        td = pl.cdiv(D, n_t + 1)          # bias toward an even step count
    return td


def dwconv3d_forward(x, x_size, weight, bias, *, approximate_gelu=False):
    """x: (B, L, C); x_size: (D, H, W); weight: (C,1,3,3,3); bias: (C,)."""
    B, L, C = x.shape
    D, H, W = x_size
    assert L == D * H * W, "L must equal D*H*W"
    WC = W * C

    # Free layout change: (B, L, C) row-major over (d,h,w,c) == (B, D, H, W*C).
    x_r = x.reshape(B, D, H, WC)

    # Per-tap weight lane vectors: lane l = w*C + c depends only on c, so tile
    # each (C,) tap W times along lanes.  Fold the kw edge masks (w-1 invalid
    # at w==0, w+1 invalid at w==W-1) into the weights so lane-roll wrap
    # elements are multiplied by zero instead of needing extra selects.
    w_t = jnp.transpose(weight[:, 0], (1, 2, 3, 0)).astype(jnp.float32)  # (3,3,3,C)
    w_lanes = jnp.tile(w_t, (1, 1, 1, W))                                # (3,3,3,WC)
    lane = jnp.arange(WC)
    kw_mask = jnp.stack([
        (lane >= C).astype(jnp.float32),       # valid lanes for the w-1 tap
        jnp.ones((WC,), jnp.float32),          # center tap
        (lane < WC - C).astype(jnp.float32),   # valid lanes for the w+1 tap
    ])                                          # (3, WC)
    w_eff = (w_lanes * kw_mask[None, None, :, :]).reshape(3, 9, 1, WC)
    b_eff = jnp.tile(bias.astype(jnp.float32), W).reshape(1, WC)

    plane_bytes = H * WC * x.dtype.itemsize
    vmem_cap = _vmem_capacity_bytes()
    TD = _pick_d_tile(B, D, plane_bytes, vmem_cap)
    nT = pl.cdiv(D, TD)

    plane_vregs = pl.cdiv(H, 8) * pl.cdiv(WC, 128)
    full_unroll = (TD <= 8) and (plane_vregs <= 2)   # carry accumulators in vregs
    hoist_w = (WC <= 128)                            # 27 taps ~ 27 vregs only then

    # VMEM budget: double-buffered main-in + out (~4x tile) + halo planes +
    # accumulator ring + slack, capped per generation (v7x: 64 MiB physical).
    acc_bytes = 0 if full_unroll else 2 * H * WC * 4
    need = 4 * TD * plane_bytes + 8 * plane_bytes + acc_bytes + (2 << 20)
    cap_limit = (80 << 20) if vmem_cap >= (96 << 20) else (48 << 20)
    vmem_limit = int(min(cap_limit, max(32 << 20, need)))

    kernel = functools.partial(
        _dwconv3d_gelu_kernel, C=C, D=D, TD=TD, full_unroll=full_unroll,
        hoist_w=hoist_w, exact_gelu=not approximate_gelu)

    scratch = [] if full_unroll else [pltpu.VMEM((2, H, WC), jnp.float32)]

    out = pl.pallas_call(
        kernel,
        out_shape=jax.ShapeDtypeStruct((B, D, H, WC), x.dtype),
        grid_spec=pltpu.PrefetchScalarGridSpec(
            num_scalar_prefetch=0,
            grid=(B, nT),
            in_specs=[
                # Main tile: TD depth planes of batch b (the tail tile is
                # padded by Pallas; the kernel masks out-of-range planes).
                pl.BlockSpec((None, TD, H, WC), lambda b, t: (b, t, 0, 0)),
                # Depth halo: single plane just below / above the tile
                # (clamped at the volume edge; the kernel zeroes it there).
                pl.BlockSpec((None, None, H, WC),
                             lambda b, t: (b, jnp.maximum(t * TD - 1, 0), 0, 0)),
                pl.BlockSpec((None, None, H, WC),
                             lambda b, t: (b, jnp.minimum(t * TD + TD, D - 1), 0, 0)),
                pl.BlockSpec((3, 9, 1, WC), lambda b, t: (0, 0, 0, 0)),
                pl.BlockSpec((1, WC), lambda b, t: (0, 0)),
            ],
            out_specs=pl.BlockSpec((None, TD, H, WC), lambda b, t: (b, t, 0, 0)),
            scratch_shapes=scratch,
        ),
        compiler_params=pltpu.CompilerParams(
            dimension_semantics=("parallel", "parallel"),
            vmem_limit_bytes=vmem_limit,
        ),
    )(x_r, x_r, x_r, w_eff, b_eff)

    return out.reshape(B, L, C)


def _reference(x, x_size, weight, bias):
    """Pure-JAX reference of the PyTorch forward (channel-last conv)."""
    B, L, C = x.shape
    D, H, W = x_size
    x_ndhwc = x.reshape(B, D, H, W, C)
    rhs = jnp.transpose(weight[:, 0], (1, 2, 3, 0))[..., None, :]  # (3,3,3,1,C)
    y = jax.lax.conv_general_dilated(
        x_ndhwc, rhs, window_strides=(1, 1, 1),
        padding=((1, 1), (1, 1), (1, 1)),
        dimension_numbers=("NDHWC", "DHWIO", "NDHWC"),
        feature_group_count=C)
    y = y + bias
    y = 0.5 * y * (1.0 + jax.lax.erf(y * jnp.float32(0.7071067811865476)))
    return y.reshape(B, L, C)


if __name__ == "__main__":
    key = jax.random.PRNGKey(0)
    B, C = 2, 16                # hidden_features = C = 16  ->  W*C = 128 lanes
    D = H = W = 8
    L = D * H * W

    k1, k2, k3 = jax.random.split(key, 3)
    x = jax.random.normal(k1, (B, L, C), jnp.float32)

    # Deterministic params mirroring nn.Conv3d(C, C, 3, groups=C) init shapes.
    fan_in = 1 * 3 * 3 * 3
    bound = 1.0 / (fan_in ** 0.5)
    weight = jax.random.uniform(k2, (C, 1, 3, 3, 3), jnp.float32, -bound, bound)
    bias = jax.random.uniform(k3, (C,), jnp.float32, -bound, bound)

    out = dwconv3d_forward(x, (D, H, W), weight, bias)
    out = jax.block_until_ready(out)

    ref = _reference(x, (D, H, W), weight, bias)
    assert out.shape == (B, L, C)
    assert jnp.allclose(out, ref, atol=1e-4, rtol=1e-4), "mismatch vs reference"

    print("KERNEL_OK")
</pallas_src>

<mosaic_0001>
module attributes {stable_mosaic.version = 11 : i64} {
  func.func @_dwconv3d_gelu_kernel(%arg0: i32, %arg1: i32, %arg2: memref<1x8x8x128xf32, #tpu.memory_space<vmem>>, %arg3: memref<1x1x8x128xf32, #tpu.memory_space<vmem>>, %arg4: memref<1x1x8x128xf32, #tpu.memory_space<vmem>>, %arg5: memref<3x9x1x128xf32, #tpu.memory_space<vmem>>, %arg6: memref<1x128xf32, #tpu.memory_space<vmem>>, %arg7: memref<1x8x8x128xf32, #tpu.memory_space<vmem>>) attributes {dimension_semantics = [#tpu.dimension_semantics<parallel>, #tpu.dimension_semantics<parallel>], iteration_bounds = array<i64: 2, 1>, scalar_prefetch = 0 : i64, scratch_operands = 0 : i64, tpu.core_type = #tpu.core_type<tc>, window_params = [{transform_indices = @transform_0, window_bounds = array<i64: 1, 8, 8, 128>}, {transform_indices = @transform_1, window_bounds = array<i64: 1, 1, 8, 128>}, {transform_indices = @transform_2, window_bounds = array<i64: 1, 1, 8, 128>}, {pipeline_mode = #tpu.pipeline_mode<synchronous>, transform_indices = @transform_3, window_bounds = array<i64: 3, 9, 1, 128>}, {pipeline_mode = #tpu.pipeline_mode<synchronous>, transform_indices = @transform_4, window_bounds = array<i64: 1, 128>}, {transform_indices = @transform_5, window_bounds = array<i64: 1, 8, 8, 128>}]} {
    %c0_i32 = arith.constant 0 : i32
    %0 = arith.cmpi sgt, %arg1, %c0_i32 : i32
    %c0_i32_0 = arith.constant 0 : i32
    %1 = arith.cmpi slt, %arg1, %c0_i32_0 : i32
    %c0 = arith.constant 0 : index
    %c0_1 = arith.constant 0 : index
    %2 = vector.load %arg6[%c0, %c0_1] : memref<1x128xf32, #tpu.memory_space<vmem>>, vector<1x128xf32>
    %cst = arith.constant 0.000000e+00 : f32
    %3 = vector.broadcast %cst : f32 to vector<8x128xf32>
    %c0_2 = arith.constant 0 : index
    %c0_3 = arith.constant 0 : index
    %c0_4 = arith.constant 0 : index
    %c0_5 = arith.constant 0 : index
    %4 = vector.load %arg5[%c0_2, %c0_3, %c0_4, %c0_5] : memref<3x9x1x128xf32, #tpu.memory_space<vmem>>, vector<3x9x1x128xf32>
    %5 = tpu.iota {dimensions = array<i32: 0>} : vector<8x1xi32>
    %c0_i32_6 = arith.constant 0 : i32
    %6 = vector.broadcast %c0_i32_6 : i32 to vector<8x1xi32>
    %7 = arith.cmpi sgt, %5, %6 : vector<8x1xi32>
    %c7_i32 = arith.constant 7 : i32
    %8 = vector.broadcast %c7_i32 : i32 to vector<8x1xi32>
    %9 = arith.cmpi slt, %5, %8 : vector<8x1xi32>
    %c0_7 = arith.constant 0 : index
    %c0_8 = arith.constant 0 : index
    %c0_9 = arith.constant 0 : index
    %c0_10 = arith.constant 0 : index
    %10 = vector.load %arg3[%c0_7, %c0_8, %c0_9, %c0_10] : memref<1x1x8x128xf32, #tpu.memory_space<vmem>>, vector<1x1x8x128xf32>
    %11 = vector.shape_cast %10 : vector<1x1x8x128xf32> to vector<8x128xf32>
    %12 = arith.select %0, %11, %3 : vector<8x128xf32>
    %c1_i32 = arith.constant 1 : i32
    %13 = tpu.dynamic_rotate %12 by %c1_i32 dim 0 : vector<8x128xf32>, i32 -> vector<8x128xf32>
    %14 = vector.shape_cast %7 : vector<8x1xi1> to vector<8x1xi1>
    %15 = vector.broadcast %14 : vector<8x1xi1> to vector<8x128xi1>
    %16 = arith.select %15, %13, %3 : vector<8x128xi1>, vector<8x128xf32>
    %c7_i32_11 = arith.constant 7 : i32
    %17 = tpu.dynamic_rotate %12 by %c7_i32_11 dim 0 : vector<8x128xf32>, i32 -> vector<8x128xf32>
    %18 = vector.shape_cast %9 : vector<8x1xi1> to vector<8x1xi1>
    %19 = vector.broadcast %18 : vector<8x1xi1> to vector<8x128xi1>
    %20 = arith.select %19, %17, %3 : vector<8x128xi1>, vector<8x128xf32>
    %c16_i32 = arith.constant 16 : i32
    %21 = tpu.dynamic_rotate %16 by %c16_i32 dim 1 : vector<8x128xf32>, i32 -> vector<8x128xf32>
    %c112_i32 = arith.constant 112 : i32
    %22 = tpu.dynamic_rotate %16 by %c112_i32 dim 1 : vector<8x128xf32>, i32 -> vector<8x128xf32>
    %c16_i32_12 = arith.constant 16 : i32
    %23 = tpu.dynamic_rotate %12 by %c16_i32_12 dim 1 : vector<8x128xf32>, i32 -> vector<8x128xf32>
    %c112_i32_13 = arith.constant 112 : i32
    %24 = tpu.dynamic_rotate %12 by %c112_i32_13 dim 1 : vector<8x128xf32>, i32 -> vector<8x128xf32>
    %c16_i32_14 = arith.constant 16 : i32
    %25 = tpu.dynamic_rotate %20 by %c16_i32_14 dim 1 : vector<8x128xf32>, i32 -> vector<8x128xf32>
    %c112_i32_15 = arith.constant 112 : i32
    %26 = tpu.dynamic_rotate %20 by %c112_i32_15 dim 1 : vector<8x128xf32>, i32 -> vector<8x128xf32>
    %c0_16 = arith.constant 0 : index
    %c0_17 = arith.constant 0 : index
    %c0_18 = arith.constant 0 : index
    %c0_19 = arith.constant 0 : index
    %27 = vector.load %arg2[%c0_16, %c0_17, %c0_18, %c0_19] : memref<1x8x8x128xf32, #tpu.memory_space<vmem>>, vector<1x1x8x128xf32>
    %28 = vector.shape_cast %27 : vector<1x1x8x128xf32> to vector<8x128xf32>
    %c1_i32_20 = arith.constant 1 : i32
    %29 = tpu.dynamic_rotate %28 by %c1_i32_20 dim 0 : vector<8x128xf32>, i32 -> vector<8x128xf32>
    %30 = vector.shape_cast %7 : vector<8x1xi1> to vector<8x1xi1>
    %31 = vector.broadcast %30 : vector<8x1xi1> to vector<8x128xi1>
    %32 = arith.select %31, %29, %3 : vector<8x128xi1>, vector<8x128xf32>
    %c7_i32_21 = arith.constant 7 : i32
    %33 = tpu.dynamic_rotate %28 by %c7_i32_21 dim 0 : vector<8x128xf32>, i32 -> vector<8x128xf32>
    %34 = vector.shape_cast %9 : vector<8x1xi1> to vector<8x1xi1>
    %35 = vector.broadcast %34 : vector<8x1xi1> to vector<8x128xi1>
    %36 = arith.select %35, %33, %3 : vector<8x128xi1>, vector<8x128xf32>
    %c16_i32_22 = arith.constant 16 : i32
    %37 = tpu.dynamic_rotate %32 by %c16_i32_22 dim 1 : vector<8x128xf32>, i32 -> vector<8x128xf32>
    %c112_i32_23 = arith.constant 112 : i32
    %38 = tpu.dynamic_rotate %32 by %c112_i32_23 dim 1 : vector<8x128xf32>, i32 -> vector<8x128xf32>
    %c16_i32_24 = arith.constant 16 : i32
    %39 = tpu.dynamic_rotate %28 by %c16_i32_24 dim 1 : vector<8x128xf32>, i32 -> vector<8x128xf32>
    %c112_i32_25 = arith.constant 112 : i32
    %40 = tpu.dynamic_rotate %28 by %c112_i32_25 dim 1 : vector<8x128xf32>, i32 -> vector<8x128xf32>
    %c16_i32_26 = arith.constant 16 : i32
    %41 = tpu.dynamic_rotate %36 by %c16_i32_26 dim 1 : vector<8x128xf32>, i32 -> vector<8x128xf32>
    %c112_i32_27 = arith.constant 112 : i32
    %42 = tpu.dynamic_rotate %36 by %c112_i32_27 dim 1 : vector<8x128xf32>, i32 -> vector<8x128xf32>
    %43 = vector.extract_strided_slice %4 {offsets = [0, 0, 0, 0], sizes = [1, 1, 1, 128], strides = [1, 1, 1, 1]} : vector<3x9x1x128xf32> to vector<1x1x1x128xf32>
    %44 = vector.shape_cast %43 : vector<1x1x1x128xf32> to vector<1x128xf32>
    %45 = vector.broadcast %44 : vector<1x128xf32> to vector<8x128xf32>
    %46 = arith.mulf %21, %45 : vector<8x128xf32>
    %47 = vector.extract_strided_slice %4 {offsets = [0, 1, 0, 0], sizes = [1, 1, 1, 128], strides = [1, 1, 1, 1]} : vector<3x9x1x128xf32> to vector<1x1x1x128xf32>
    %48 = vector.shape_cast %47 : vector<1x1x1x128xf32> to vector<1x128xf32>
    %49 = vector.broadcast %48 : vector<1x128xf32> to vector<8x128xf32>
    %50 = arith.mulf %16, %49 : vector<8x128xf32>
    %51 = arith.addf %46, %50 : vector<8x128xf32>
    %52 = vector.extract_strided_slice %4 {offsets = [0, 2, 0, 0], sizes = [1, 1, 1, 128], strides = [1, 1, 1, 1]} : vector<3x9x1x128xf32> to vector<1x1x1x128xf32>
    %53 = vector.shape_cast %52 : vector<1x1x1x128xf32> to vector<1x128xf32>
    %54 = vector.broadcast %53 : vector<1x128xf32> to vector<8x128xf32>
    %55 = arith.mulf %22, %54 : vector<8x128xf32>
    %56 = arith.addf %51, %55 : vector<8x128xf32>
    %57 = vector.extract_strided_slice %4 {offsets = [0, 3, 0, 0], sizes = [1, 1, 1, 128], strides = [1, 1, 1, 1]} : vector<3x9x1x128xf32> to vector<1x1x1x128xf32>
    %58 = vector.shape_cast %57 : vector<1x1x1x128xf32> to vector<1x128xf32>
    %59 = vector.broadcast %58 : vector<1x128xf32> to vector<8x128xf32>
    %60 = arith.mulf %23, %59 : vector<8x128xf32>
    %61 = vector.extract_strided_slice %4 {offsets = [0, 4, 0, 0], sizes = [1, 1, 1, 128], strides = [1, 1, 1, 1]} : vector<3x9x1x128xf32> to vector<1x1x1x128xf32>
    %62 = vector.shape_cast %61 : vector<1x1x1x128xf32> to vector<1x128xf32>
    %63 = vector.broadcast %62 : vector<1x128xf32> to vector<8x128xf32>
    %64 = arith.mulf %12, %63 : vector<8x128xf32>
    %65 = arith.addf %60, %64 : vector<8x128xf32>
    %66 = vector.extract_strided_slice %4 {offsets = [0, 5, 0, 0], sizes = [1, 1, 1, 128], strides = [1, 1, 1, 1]} : vector<3x9x1x128xf32> to vector<1x1x1x128xf32>
    %67 = vector.shape_cast %66 : vector<1x1x1x128xf32> to vector<1x128xf32>
    %68 = vector.broadcast %67 : vector<1x128xf32> to vector<8x128xf32>
    %69 = arith.mulf %24, %68 : vector<8x128xf32>
    %70 = arith.addf %65, %69 : vector<8x128xf32>
    %71 = vector.extract_strided_slice %4 {offsets = [0, 6, 0, 0], sizes = [1, 1, 1, 128], strides = [1, 1, 1, 1]} : vector<3x9x1x128xf32> to vector<1x1x1x128xf32>
    %72 = vector.shape_cast %71 : vector<1x1x1x128xf32> to vector<1x128xf32>
    %73 = vector.broadcast %72 : vector<1x128xf32> to vector<8x128xf32>
    %74 = arith.mulf %25, %73 : vector<8x128xf32>
    %75 = vector.extract_strided_slice %4 {offsets = [0, 7, 0, 0], sizes = [1, 1, 1, 128], strides = [1, 1, 1, 1]} : vector<3x9x1x128xf32> to vector<1x1x1x128xf32>
    %76 = vector.shape_cast %75 : vector<1x1x1x128xf32> to vector<1x128xf32>
    %77 = vector.broadcast %76 : vector<1x128xf32> to vector<8x128xf32>
    %78 = arith.mulf %20, %77 : vector<8x128xf32>
    %79 = arith.addf %74, %78 : vector<8x128xf32>
    %80 = vector.extract_strided_slice %4 {offsets = [0, 8, 0, 0], sizes = [1, 1, 1, 128], strides = [1, 1, 1, 1]} : vector<3x9x1x128xf32> to vector<1x1x1x128xf32>
    %81 = vector.shape_cast %80 : vector<1x1x1x128xf32> to vector<1x128xf32>
    %82 = vector.broadcast %81 : vector<1x128xf32> to vector<8x128xf32>
    %83 = arith.mulf %26, %82 : vector<8x128xf32>
    %84 = arith.addf %79, %83 : vector<8x128xf32>
    %85 = arith.addf %56, %70 : vector<8x128xf32>
    %86 = arith.addf %85, %84 : vector<8x128xf32>
    %87 = vector.extract_strided_slice %4 {offsets = [1, 0, 0, 0], sizes = [1, 1, 1, 128], strides = [1, 1, 1, 1]} : vector<3x9x1x128xf32> to vector<1x1x1x128xf32>
    %88 = vector.shape_cast %87 : vector<1x1x1x128xf32> to vector<1x128xf32>
    %89 = vector.broadcast %88 : vector<1x128xf32> to vector<8x128xf32>
    %90 = arith.mulf %37, %89 : vector<8x128xf32>
    %91 = vector.extract_strided_slice %4 {offsets = [1, 1, 0, 0], sizes = [1, 1, 1, 128], strides = [1, 1, 1, 1]} : vector<3x9x1x128xf32> to vector<1x1x1x128xf32>
    %92 = vector.shape_cast %91 : vector<1x1x1x128xf32> to vector<1x128xf32>
    %93 = vector.broadcast %92 : vector<1x128xf32> to vector<8x128xf32>
    %94 = arith.mulf %32, %93 : vector<8x128xf32>
    %95 = arith.addf %90, %94 : vector<8x128xf32>
    %96 = vector.extract_strided_slice %4 {offsets = [1, 2, 0, 0], sizes = [1, 1, 1, 128], strides = [1, 1, 1, 1]} : vector<3x9x1x128xf32> to vector<1x1x1x128xf32>
    %97 = vector.shape_cast %96 : vector<1x1x1x128xf32> to vector<1x128xf32>
    %98 = vector.broadcast %97 : vector<1x128xf32> to vector<8x128xf32>
    %99 = arith.mulf %38, %98 : vector<8x128xf32>
    %100 = arith.addf %95, %99 : vector<8x128xf32>
    %101 = vector.extract_strided_slice %4 {offsets = [1, 3, 0, 0], sizes = [1, 1, 1, 128], strides = [1, 1, 1, 1]} : vector<3x9x1x128xf32> to vector<1x1x1x128xf32>
    %102 = vector.shape_cast %101 : vector<1x1x1x128xf32> to vector<1x128xf32>
    %103 = vector.broadcast %102 : vector<1x128xf32> to vector<8x128xf32>
    %104 = arith.mulf %39, %103 : vector<8x128xf32>
    %105 = vector.extract_strided_slice %4 {offsets = [1, 4, 0, 0], sizes = [1, 1, 1, 128], strides = [1, 1, 1, 1]} : vector<3x9x1x128xf32> to vector<1x1x1x128xf32>
    %106 = vector.shape_cast %105 : vector<1x1x1x128xf32> to vector<1x128xf32>
    %107 = vector.broadcast %106 : vector<1x128xf32> to vector<8x128xf32>
    %108 = arith.mulf %28, %107 : vector<8x128xf32>
    %109 = arith.addf %104, %108 : vector<8x128xf32>
    %110 = vector.extract_strided_slice %4 {offsets = [1, 5, 0, 0], sizes = [1, 1, 1, 128], strides = [1, 1, 1, 1]} : vector<3x9x1x128xf32> to vector<1x1x1x128xf32>
    %111 = vector.shape_cast %110 : vector<1x1x1x128xf32> to vector<1x128xf32>
    %112 = vector.broadcast %111 : vector<1x128xf32> to vector<8x128xf32>
    %113 = arith.mulf %40, %112 : vector<8x128xf32>
    %114 = arith.addf %109, %113 : vector<8x128xf32>
    %115 = vector.extract_strided_slice %4 {offsets = [1, 6, 0, 0], sizes = [1, 1, 1, 128], strides = [1, 1, 1, 1]} : vector<3x9x1x128xf32> to vector<1x1x1x128xf32>
    %116 = vector.shape_cast %115 : vector<1x1x1x128xf32> to vector<1x128xf32>
    %117 = vector.broadcast %116 : vector<1x128xf32> to vector<8x128xf32>
    %118 = arith.mulf %41, %117 : vector<8x128xf32>
    %119 = vector.extract_strided_slice %4 {offsets = [1, 7, 0, 0], sizes = [1, 1, 1, 128], strides = [1, 1, 1, 1]} : vector<3x9x1x128xf32> to vector<1x1x1x128xf32>
    %120 = vector.shape_cast %119 : vector<1x1x1x128xf32> to vector<1x128xf32>
    %121 = vector.broadcast %120 : vector<1x128xf32> to vector<8x128xf32>
    %122 = arith.mulf %36, %121 : vector<8x128xf32>
    %123 = arith.addf %118, %122 : vector<8x128xf32>
    %124 = vector.extract_strided_slice %4 {offsets = [1, 8, 0, 0], sizes = [1, 1, 1, 128], strides = [1, 1, 1, 1]} : vector<3x9x1x128xf32> to vector<1x1x1x128xf32>
    %125 = vector.shape_cast %124 : vector<1x1x1x128xf32> to vector<1x128xf32>
    %126 = vector.broadcast %125 : vector<1x128xf32> to vector<8x128xf32>
    %127 = arith.mulf %42, %126 : vector<8x128xf32>
    %128 = arith.addf %123, %127 : vector<8x128xf32>
    %129 = arith.addf %100, %114 : vector<8x128xf32>
    %130 = arith.addf %129, %128 : vector<8x128xf32>
    %131 = arith.addf %86, %130 : vector<8x128xf32>
    %132 = vector.extract_strided_slice %4 {offsets = [0, 0, 0, 0], sizes = [1, 1, 1, 128], strides = [1, 1, 1, 1]} : vector<3x9x1x128xf32> to vector<1x1x1x128xf32>
    %133 = vector.shape_cast %132 : vector<1x1x1x128xf32> to vector<1x128xf32>
    %134 = vector.broadcast %133 : vector<1x128xf32> to vector<8x128xf32>
    %135 = arith.mulf %37, %134 : vector<8x128xf32>
    %136 = vector.extract_strided_slice %4 {offsets = [0, 1, 0, 0], sizes = [1, 1, 1, 128], strides = [1, 1, 1, 1]} : vector<3x9x1x128xf32> to vector<1x1x1x128xf32>
    %137 = vector.shape_cast %136 : vector<1x1x1x128xf32> to vector<1x128xf32>
    %138 = vector.broadcast %137 : vector<1x128xf32> to vector<8x128xf32>
    %139 = arith.mulf %32, %138 : vector<8x128xf32>
    %140 = arith.addf %135, %139 : vector<8x128xf32>
    %141 = vector.extract_strided_slice %4 {offsets = [0, 2, 0, 0], sizes = [1, 1, 1, 128], strides = [1, 1, 1, 1]} : vector<3x9x1x128xf32> to vector<1x1x1x128xf32>
    %142 = vector.shape_cast %141 : vector<1x1x1x128xf32> to vector<1x128xf32>
    %143 = vector.broadcast %142 : vector<1x128xf32> to vector<8x128xf32>
    %144 = arith.mulf %38, %143 : vector<8x128xf32>
    %145 = arith.addf %140, %144 : vector<8x128xf32>
    %146 = vector.extract_strided_slice %4 {offsets = [0, 3, 0, 0], sizes = [1, 1, 1, 128], strides = [1, 1, 1, 1]} : vector<3x9x1x128xf32> to vector<1x1x1x128xf32>
    %147 = vector.shape_cast %146 : vector<1x1x1x128xf32> to vector<1x128xf32>
    %148 = vector.broadcast %147 : vector<1x128xf32> to vector<8x128xf32>
    %149 = arith.mulf %39, %148 : vector<8x128xf32>
    %150 = vector.extract_strided_slice %4 {offsets = [0, 4, 0, 0], sizes = [1, 1, 1, 128], strides = [1, 1, 1, 1]} : vector<3x9x1x128xf32> to vector<1x1x1x128xf32>
    %151 = vector.shape_cast %150 : vector<1x1x1x128xf32> to vector<1x128xf32>
    %152 = vector.broadcast %151 : vector<1x128xf32> to vector<8x128xf32>
    %153 = arith.mulf %28, %152 : vector<8x128xf32>
    %154 = arith.addf %149, %153 : vector<8x128xf32>
    %155 = vector.extract_strided_slice %4 {offsets = [0, 5, 0, 0], sizes = [1, 1, 1, 128], strides = [1, 1, 1, 1]} : vector<3x9x1x128xf32> to vector<1x1x1x128xf32>
    %156 = vector.shape_cast %155 : vector<1x1x1x128xf32> to vector<1x128xf32>
    %157 = vector.broadcast %156 : vector<1x128xf32> to vector<8x128xf32>
    %158 = arith.mulf %40, %157 : vector<8x128xf32>
    %159 = arith.addf %154, %158 : vector<8x128xf32>
    %160 = vector.extract_strided_slice %4 {offsets = [0, 6, 0, 0], sizes = [1, 1, 1, 128], strides = [1, 1, 1, 1]} : vector<3x9x1x128xf32> to vector<1x1x1x128xf32>
    %161 = vector.shape_cast %160 : vector<1x1x1x128xf32> to vector<1x128xf32>
    %162 = vector.broadcast %161 : vector<1x128xf32> to vector<8x128xf32>
    %163 = arith.mulf %41, %162 : vector<8x128xf32>
    %164 = vector.extract_strided_slice %4 {offsets = [0, 7, 0, 0], sizes = [1, 1, 1, 128], strides = [1, 1, 1, 1]} : vector<3x9x1x128xf32> to vector<1x1x1x128xf32>
    %165 = vector.shape_cast %164 : vector<1x1x1x128xf32> to vector<1x128xf32>
    %166 = vector.broadcast %165 : vector<1x128xf32> to vector<8x128xf32>
    %167 = arith.mulf %36, %166 : vector<8x128xf32>
    %168 = arith.addf %163, %167 : vector<8x128xf32>
    %169 = vector.extract_strided_slice %4 {offsets = [0, 8, 0, 0], sizes = [1, 1, 1, 128], strides = [1, 1, 1, 1]} : vector<3x9x1x128xf32> to vector<1x1x1x128xf32>
    %170 = vector.shape_cast %169 : vector<1x1x1x128xf32> to vector<1x128xf32>
    %171 = vector.broadcast %170 : vector<1x128xf32> to vector<8x128xf32>
    %172 = arith.mulf %42, %171 : vector<8x128xf32>
    %173 = arith.addf %168, %172 : vector<8x128xf32>
    %174 = arith.addf %145, %159 : vector<8x128xf32>
    %175 = arith.addf %174, %173 : vector<8x128xf32>
    %c0_28 = arith.constant 0 : index
    %c1 = arith.constant 1 : index
    %c0_29 = arith.constant 0 : index
    %c0_30 = arith.constant 0 : index
    %176 = vector.load %arg2[%c0_28, %c1, %c0_29, %c0_30] : memref<1x8x8x128xf32, #tpu.memory_space<vmem>>, vector<1x1x8x128xf32>
    %177 = vector.shape_cast %176 : vector<1x1x8x128xf32> to vector<8x128xf32>
    %c1_i32_31 = arith.constant 1 : i32
    %178 = tpu.dynamic_rotate %177 by %c1_i32_31 dim 0 : vector<8x128xf32>, i32 -> vector<8x128xf32>
    %179 = vector.shape_cast %7 : vector<8x1xi1> to vector<8x1xi1>
    %180 = vector.broadcast %179 : vector<8x1xi1> to vector<8x128xi1>
    %181 = arith.select %180, %178, %3 : vector<8x128xi1>, vector<8x128xf32>
    %c7_i32_32 = arith.constant 7 : i32
    %182 = tpu.dynamic_rotate %177 by %c7_i32_32 dim 0 : vector<8x128xf32>, i32 -> vector<8x128xf32>
    %183 = vector.shape_cast %9 : vector<8x1xi1> to vector<8x1xi1>
    %184 = vector.broadcast %183 : vector<8x1xi1> to vector<8x128xi1>
    %185 = arith.select %184, %182, %3 : vector<8x128xi1>, vector<8x128xf32>
    %c16_i32_33 = arith.constant 16 : i32
    %186 = tpu.dynamic_rotate %181 by %c16_i32_33 dim 1 : vector<8x128xf32>, i32 -> vector<8x128xf32>
    %c112_i32_34 = arith.constant 112 : i32
    %187 = tpu.dynamic_rotate %181 by %c112_i32_34 dim 1 : vector<8x128xf32>, i32 -> vector<8x128xf32>
    %c16_i32_35 = arith.constant 16 : i32
    %188 = tpu.dynamic_rotate %177 by %c16_i32_35 dim 1 : vector<8x128xf32>, i32 -> vector<8x128xf32>
    %c112_i32_36 = arith.constant 112 : i32
    %189 = tpu.dynamic_rotate %177 by %c112_i32_36 dim 1 : vector<8x128xf32>, i32 -> vector<8x128xf32>
    %c16_i32_37 = arith.constant 16 : i32
    %190 = tpu.dynamic_rotate %185 by %c16_i32_37 dim 1 : vector<8x128xf32>, i32 -> vector<8x128xf32>
    %c112_i32_38 = arith.constant 112 : i32
    %191 = tpu.dynamic_rotate %185 by %c112_i32_38 dim 1 : vector<8x128xf32>, i32 -> vector<8x128xf32>
    %192 = vector.extract_strided_slice %4 {offsets = [2, 0, 0, 0], sizes = [1, 1, 1, 128], strides = [1, 1, 1, 1]} : vector<3x9x1x128xf32> to vector<1x1x1x128xf32>
    %193 = vector.shape_cast %192 : vector<1x1x1x128xf32> to vector<1x128xf32>
    %194 = vector.broadcast %193 : vector<1x128xf32> to vector<8x128xf32>
    %195 = arith.mulf %186, %194 : vector<8x128xf32>
    %196 = vector.extract_strided_slice %4 {offsets = [2, 1, 0, 0], sizes = [1, 1, 1, 128], strides = [1, 1, 1, 1]} : vector<3x9x1x128xf32> to vector<1x1x1x128xf32>
    %197 = vector.shape_cast %196 : vector<1x1x1x128xf32> to vector<1x128xf32>
    %198 = vector.broadcast %197 : vector<1x128xf32> to vector<8x128xf32>
    %199 = arith.mulf %181, %198 : vector<8x128xf32>
    %200 = arith.addf %195, %199 : vector<8x128xf32>
    %201 = vector.extract_strided_slice %4 {offsets = [2, 2, 0, 0], sizes = [1, 1, 1, 128], strides = [1, 1, 1, 1]} : vector<3x9x1x128xf32> to vector<1x1x1x128xf32>
    %202 = vector.shape_cast %201 : vector<1x1x1x128xf32> to vector<1x128xf32>
    %203 = vector.broadcast %202 : vector<1x128xf32> to vector<8x128xf32>
    %204 = arith.mulf %187, %203 : vector<8x128xf32>
    %205 = arith.addf %200, %204 : vector<8x128xf32>
    %206 = vector.extract_strided_slice %4 {offsets = [2, 3, 0, 0], sizes = [1, 1, 1, 128], strides = [1, 1, 1, 1]} : vector<3x9x1x128xf32> to vector<1x1x1x128xf32>
    %207 = vector.shape_cast %206 : vector<1x1x1x128xf32> to vector<1x128xf32>
    %208 = vector.broadcast %207 : vector<1x128xf32> to vector<8x128xf32>
    %209 = arith.mulf %188, %208 : vector<8x128xf32>
    %210 = vector.extract_strided_slice %4 {offsets = [2, 4, 0, 0], sizes = [1, 1, 1, 128], strides = [1, 1, 1, 1]} : vector<3x9x1x128xf32> to vector<1x1x1x128xf32>
    %211 = vector.shape_cast %210 : vector<1x1x1x128xf32> to vector<1x128xf32>
    %212 = vector.broadcast %211 : vector<1x128xf32> to vector<8x128xf32>
    %213 = arith.mulf %177, %212 : vector<8x128xf32>
    %214 = arith.addf %209, %213 : vector<8x128xf32>
    %215 = vector.extract_strided_slice %4 {offsets = [2, 5, 0, 0], sizes = [1, 1, 1, 128], strides = [1, 1, 1, 1]} : vector<3x9x1x128xf32> to vector<1x1x1x128xf32>
    %216 = vector.shape_cast %215 : vector<1x1x1x128xf32> to vector<1x128xf32>
    %217 = vector.broadcast %216 : vector<1x128xf32> to vector<8x128xf32>
    %218 = arith.mulf %189, %217 : vector<8x128xf32>
    %219 = arith.addf %214, %218 : vector<8x128xf32>
    %220 = vector.extract_strided_slice %4 {offsets = [2, 6, 0, 0], sizes = [1, 1, 1, 128], strides = [1, 1, 1, 1]} : vector<3x9x1x128xf32> to vector<1x1x1x128xf32>
    %221 = vector.shape_cast %220 : vector<1x1x1x128xf32> to vector<1x128xf32>
    %222 = vector.broadcast %221 : vector<1x128xf32> to vector<8x128xf32>
    %223 = arith.mulf %190, %222 : vector<8x128xf32>
    %224 = vector.extract_strided_slice %4 {offsets = [2, 7, 0, 0], sizes = [1, 1, 1, 128], strides = [1, 1, 1, 1]} : vector<3x9x1x128xf32> to vector<1x1x1x128xf32>
    %225 = vector.shape_cast %224 : vector<1x1x1x128xf32> to vector<1x128xf32>
    %226 = vector.broadcast %225 : vector<1x128xf32> to vector<8x128xf32>
    %227 = arith.mulf %185, %226 : vector<8x128xf32>
    %228 = arith.addf %223, %227 : vector<8x128xf32>
    %229 = vector.extract_strided_slice %4 {offsets = [2, 8, 0, 0], sizes = [1, 1, 1, 128], strides = [1, 1, 1, 1]} : vector<3x9x1x128xf32> to vector<1x1x1x128xf32>
    %230 = vector.shape_cast %229 : vector<1x1x1x128xf32> to vector<1x128xf32>
    %231 = vector.broadcast %230 : vector<1x128xf32> to vector<8x128xf32>
    %232 = arith.mulf %191, %231 : vector<8x128xf32>
    %233 = arith.addf %228, %232 : vector<8x128xf32>
    %234 = arith.addf %205, %219 : vector<8x128xf32>
    %235 = arith.addf %234, %233 : vector<8x128xf32>
    %236 = arith.addf %131, %235 : vector<8x128xf32>
    %237 = vector.broadcast %2 : vector<1x128xf32> to vector<8x128xf32>
    %238 = arith.addf %236, %237 : vector<8x128xf32>
    %cst_39 = arith.constant 5.000000e-01 : f32
    %239 = vector.broadcast %cst_39 : f32 to vector<8x128xf32>
    %240 = arith.mulf %239, %238 : vector<8x128xf32>
    %cst_40 = arith.constant 0.707106769 : f32
    %241 = vector.broadcast %cst_40 : f32 to vector<8x128xf32>
    %242 = arith.mulf %238, %241 : vector<8x128xf32>
    %243 = math.erf %242 : vector<8x128xf32>
    %cst_41 = arith.constant 1.000000e+00 : f32
    %244 = vector.broadcast %cst_41 : f32 to vector<8x128xf32>
    %245 = arith.addf %244, %243 : vector<8x128xf32>
    %246 = arith.mulf %240, %245 : vector<8x128xf32>
    %c0_42 = arith.constant 0 : index
    %c0_43 = arith.constant 0 : index
    %c0_44 = arith.constant 0 : index
    %c0_45 = arith.constant 0 : index
    %247 = vector.load %arg7[%c0_42, %c0_43, %c0_44, %c0_45] : memref<1x8x8x128xf32, #tpu.memory_space<vmem>>, vector<1x1x8x128xf32>
    %248 = vector.shape_cast %247 : vector<1x1x8x128xf32> to vector<8x128xf32>
    %249 = vector.shape_cast %246 : vector<8x128xf32> to vector<1x1x8x128xf32>
    tpu.vector_store %arg7[%c0_42, %c0_43, %c0_44, %c0_45], %249 {strides = array<i32>} : memref<1x8x8x128xf32, #tpu.memory_space<vmem>>, vector<1x1x8x128xf32>,
    %250 = vector.extract_strided_slice %4 {offsets = [1, 0, 0, 0], sizes = [1, 1, 1, 128], strides = [1, 1, 1, 1]} : vector<3x9x1x128xf32> to vector<1x1x1x128xf32>
    %251 = vector.shape_cast %250 : vector<1x1x1x128xf32> to vector<1x128xf32>
    %252 = vector.broadcast %251 : vector<1x128xf32> to vector<8x128xf32>
    %253 = arith.mulf %186, %252 : vector<8x128xf32>
    %254 = vector.extract_strided_slice %4 {offsets = [1, 1, 0, 0], sizes = [1, 1, 1, 128], strides = [1, 1, 1, 1]} : vector<3x9x1x128xf32> to vector<1x1x1x128xf32>
    %255 = vector.shape_cast %254 : vector<1x1x1x128xf32> to vector<1x128xf32>
    %256 = vector.broadcast %255 : vector<1x128xf32> to vector<8x128xf32>
    %257 = arith.mulf %181, %256 : vector<8x128xf32>
    %258 = arith.addf %253, %257 : vector<8x128xf32>
    %259 = vector.extract_strided_slice %4 {offsets = [1, 2, 0, 0], sizes = [1, 1, 1, 128], strides = [1, 1, 1, 1]} : vector<3x9x1x128xf32> to vector<1x1x1x128xf32>
    %260 = vector.shape_cast %259 : vector<1x1x1x128xf32> to vector<1x128xf32>
    %261 = vector.broadcast %260 : vector<1x128xf32> to vector<8x128xf32>
    %262 = arith.mulf %187, %261 : vector<8x128xf32>
    %263 = arith.addf %258, %262 : vector<8x128xf32>
    %264 = vector.extract_strided_slice %4 {offsets = [1, 3, 0, 0], sizes = [1, 1, 1, 128], strides = [1, 1, 1, 1]} : vector<3x9x1x128xf32> to vector<1x1x1x128xf32>
    %265 = vector.shape_cast %264 : vector<1x1x1x128xf32> to vector<1x128xf32>
    %266 = vector.broadcast %265 : vector<1x128xf32> to vector<8x128xf32>
    %267 = arith.mulf %188, %266 : vector<8x128xf32>
    %268 = vector.extract_strided_slice %4 {offsets = [1, 4, 0, 0], sizes = [1, 1, 1, 128], strides = [1, 1, 1, 1]} : vector<3x9x1x128xf32> to vector<1x1x1x128xf32>
    %269 = vector.shape_cast %268 : vector<1x1x1x128xf32> to vector<1x128xf32>
    %270 = vector.broadcast %269 : vector<1x128xf32> to vector<8x128xf32>
    %271 = arith.mulf %177, %270 : vector<8x128xf32>
    %272 = arith.addf %267, %271 : vector<8x128xf32>
    %273 = vector.extract_strided_slice %4 {offsets = [1, 5, 0, 0], sizes = [1, 1, 1, 128], strides = [1, 1, 1, 1]} : vector<3x9x1x128xf32> to vector<1x1x1x128xf32>
    %274 = vector.shape_cast %273 : vector<1x1x1x128xf32> to vector<1x128xf32>
    %275 = vector.broadcast %274 : vector<1x128xf32> to vector<8x128xf32>
    %276 = arith.mulf %189, %275 : vector<8x128xf32>
    %277 = arith.addf %272, %276 : vector<8x128xf32>
    %278 = vector.extract_strided_slice %4 {offsets = [1, 6, 0, 0], sizes = [1, 1, 1, 128], strides = [1, 1, 1, 1]} : vector<3x9x1x128xf32> to vector<1x1x1x128xf32>
    %279 = vector.shape_cast %278 : vector<1x1x1x128xf32> to vector<1x128xf32>
    %280 = vector.broadcast %279 : vector<1x128xf32> to vector<8x128xf32>
    %281 = arith.mulf %190, %280 : vector<8x128xf32>
    %282 = vector.extract_strided_slice %4 {offsets = [1, 7, 0, 0], sizes = [1, 1, 1, 128], strides = [1, 1, 1, 1]} : vector<3x9x1x128xf32> to vector<1x1x1x128xf32>
    %283 = vector.shape_cast %282 : vector<1x1x1x128xf32> to vector<1x128xf32>
    %284 = vector.broadcast %283 : vector<1x128xf32> to vector<8x128xf32>
    %285 = arith.mulf %185, %284 : vector<8x128xf32>
    %286 = arith.addf %281, %285 : vector<8x128xf32>
    %287 = vector.extract_strided_slice %4 {offsets = [1, 8, 0, 0], sizes = [1, 1, 1, 128], strides = [1, 1, 1, 1]} : vector<3x9x1x128xf32> to vector<1x1x1x128xf32>
    %288 = vector.shape_cast %287 : vector<1x1x1x128xf32> to vector<1x128xf32>
    %289 = vector.broadcast %288 : vector<1x128xf32> to vector<8x128xf32>
    %290 = arith.mulf %191, %289 : vector<8x128xf32>
    %291 = arith.addf %286, %290 : vector<8x128xf32>
    %292 = arith.addf %263, %277 : vector<8x128xf32>
    %293 = arith.addf %292, %291 : vector<8x128xf32>
    %294 = arith.addf %175, %293 : vector<8x128xf32>
    %295 = vector.extract_strided_slice %4 {offsets = [0, 0, 0, 0], sizes = [1, 1, 1, 128], strides = [1, 1, 1, 1]} : vector<3x9x1x128xf32> to vector<1x1x1x128xf32>
    %296 = vector.shape_cast %295 : vector<1x1x1x128xf32> to vector<1x128xf32>
    %297 = vector.broadcast %296 : vector<1x128xf32> to vector<8x128xf32>
    %298 = arith.mulf %186, %297 : vector<8x128xf32>
    %299 = vector.extract_strided_slice %4 {offsets = [0, 1, 0, 0], sizes = [1, 1, 1, 128], strides = [1, 1, 1, 1]} : vector<3x9x1x128xf32> to vector<1x1x1x128xf32>
    %300 = vector.shape_cast %299 : vector<1x1x1x128xf32> to vector<1x128xf32>
    %301 = vector.broadcast %300 : vector<1x128xf32> to vector<8x128xf32>
    %302 = arith.mulf %181, %301 : vector<8x128xf32>
    %303 = arith.addf %298, %302 : vector<8x128xf32>
    %304 = vector.extract_strided_slice %4 {offsets = [0, 2, 0, 0], sizes = [1, 1, 1, 128], strides = [1, 1, 1, 1]} : vector<3x9x1x128xf32> to vector<1x1x1x128xf32>
    %305 = vector.shape_cast %304 : vector<1x1x1x128xf32> to vector<1x128xf32>
    %306 = vector.broadcast %305 : vector<1x128xf32> to vector<8x128xf32>
    %307 = arith.mulf %187, %306 : vector<8x128xf32>
    %308 = arith.addf %303, %307 : vector<8x128xf32>
    %309 = vector.extract_strided_slice %4 {offsets = [0, 3, 0, 0], sizes = [1, 1, 1, 128], strides = [1, 1, 1, 1]} : vector<3x9x1x128xf32> to vector<1x1x1x128xf32>
    %310 = vector.shape_cast %309 : vector<1x1x1x128xf32> to vector<1x128xf32>
    %311 = vector.broadcast %310 : vector<1x128xf32> to vector<8x128xf32>
    %312 = arith.mulf %188, %311 : vector<8x128xf32>
    %313 = vector.extract_strided_slice %4 {offsets = [0, 4, 0, 0], sizes = [1, 1, 1, 128], strides = [1, 1, 1, 1]} : vector<3x9x1x128xf32> to vector<1x1x1x128xf32>
    %314 = vector.shape_cast %313 : vector<1x1x1x128xf32> to vector<1x128xf32>
    %315 = vector.broadcast %314 : vector<1x128xf32> to vector<8x128xf32>
    %316 = arith.mulf %177, %315 : vector<8x128xf32>
    %317 = arith.addf %312, %316 : vector<8x128xf32>
    %318 = vector.extract_strided_slice %4 {offsets = [0, 5, 0, 0], sizes = [1, 1, 1, 128], strides = [1, 1, 1, 1]} : vector<3x9x1x128xf32> to vector<1x1x1x128xf32>
    %319 = vector.shape_cast %318 : vector<1x1x1x128xf32> to vector<1x128xf32>
    %320 = vector.broadcast %319 : vector<1x128xf32> to vector<8x128xf32>
    %321 = arith.mulf %189, %320 : vector<8x128xf32>
    %322 = arith.addf %317, %321 : vector<8x128xf32>
    %323 = vector.extract_strided_slice %4 {offsets = [0, 6, 0, 0], sizes = [1, 1, 1, 128], strides = [1, 1, 1, 1]} : vector<3x9x1x128xf32> to vector<1x1x1x128xf32>
    %324 = vector.shape_cast %323 : vector<1x1x1x128xf32> to vector<1x128xf32>
    %325 = vector.broadcast %324 : vector<1x128xf32> to vector<8x128xf32>
    %326 = arith.mulf %190, %325 : vector<8x128xf32>
    %327 = vector.extract_strided_slice %4 {offsets = [0, 7, 0, 0], sizes = [1, 1, 1, 128], strides = [1, 1, 1, 1]} : vector<3x9x1x128xf32> to vector<1x1x1x128xf32>
    %328 = vector.shape_cast %327 : vector<1x1x1x128xf32> to vector<1x128xf32>
    %329 = vector.broadcast %328 : vector<1x128xf32> to vector<8x128xf32>
    %330 = arith.mulf %185, %329 : vector<8x128xf32>
    %331 = arith.addf %326, %330 : vector<8x128xf32>
    %332 = vector.extract_strided_slice %4 {offsets = [0, 8, 0, 0], sizes = [1, 1, 1, 128], strides = [1, 1, 1, 1]} : vector<3x9x1x128xf32> to vector<1x1x1x128xf32>
    %333 = vector.shape_cast %332 : vector<1x1x1x128xf32> to vector<1x128xf32>
    %334 = vector.broadcast %333 : vector<1x128xf32> to vector<8x128xf32>
    %335 = arith.mulf %191, %334 : vector<8x128xf32>
    %336 = arith.addf %331, %335 : vector<8x128xf32>
    %337 = arith.addf %308, %322 : vector<8x128xf32>
    %338 = arith.addf %337, %336 : vector<8x128xf32>
    %c0_46 = arith.constant 0 : index
    %c2 = arith.constant 2 : index
    %c0_47 = arith.constant 0 : index
    %c0_48 = arith.constant 0 : index
    %339 = vector.load %arg2[%c0_46, %c2, %c0_47, %c0_48] : memref<1x8x8x128xf32, #tpu.memory_space<vmem>>, vector<1x1x8x128xf32>
    %340 = vector.shape_cast %339 : vector<1x1x8x128xf32> to vector<8x128xf32>
    %c1_i32_49 = arith.constant 1 : i32
    %341 = tpu.dynamic_rotate %340 by %c1_i32_49 dim 0 : vector<8x128xf32>, i32 -> vector<8x128xf32>
    %342 = vector.shape_cast %7 : vector<8x1xi1> to vector<8x1xi1>
    %343 = vector.broadcast %342 : vector<8x1xi1> to vector<8x128xi1>
    %344 = arith.select %343, %341, %3 : vector<8x128xi1>, vector<8x128xf32>
    %c7_i32_50 = arith.constant 7 : i32
    %345 = tpu.dynamic_rotate %340 by %c7_i32_50 dim 0 : vector<8x128xf32>, i32 -> vector<8x128xf32>
    %346 = vector.shape_cast %9 : vector<8x1xi1> to vector<8x1xi1>
    %347 = vector.broadcast %346 : vector<8x1xi1> to vector<8x128xi1>
    %348 = arith.select %347, %345, %3 : vector<8x128xi1>, vector<8x128xf32>
    %c16_i32_51 = arith.constant 16 : i32
    %349 = tpu.dynamic_rotate %344 by %c16_i32_51 dim 1 : vector<8x128xf32>, i32 -> vector<8x128xf32>
    %c112_i32_52 = arith.constant 112 : i32
    %350 = tpu.dynamic_rotate %344 by %c112_i32_52 dim 1 : vector<8x128xf32>, i32 -> vector<8x128xf32>
    %c16_i32_53 = arith.constant 16 : i32
    %351 = tpu.dynamic_rotate %340 by %c16_i32_53 dim 1 : vector<8x128xf32>, i32 -> vector<8x128xf32>
    %c112_i32_54 = arith.constant 112 : i32
    %352 = tpu.dynamic_rotate %340 by %c112_i32_54 dim 1 : vector<8x128xf32>, i32 -> vector<8x128xf32>
    %c16_i32_55 = arith.constant 16 : i32
    %353 = tpu.dynamic_rotate %348 by %c16_i32_55 dim 1 : vector<8x128xf32>, i32 -> vector<8x128xf32>
    %c112_i32_56 = arith.constant 112 : i32
    %354 = tpu.dynamic_rotate %348 by %c112_i32_56 dim 1 : vector<8x128xf32>, i32 -> vector<8x128xf32>
    %355 = vector.extract_strided_slice %4 {offsets = [2, 0, 0, 0], sizes = [1, 1, 1, 128], strides = [1, 1, 1, 1]} : vector<3x9x1x128xf32> to vector<1x1x1x128xf32>
    %356 = vector.shape_cast %355 : vector<1x1x1x128xf32> to vector<1x128xf32>
    %357 = vector.broadcast %356 : vector<1x128xf32> to vector<8x128xf32>
    %358 = arith.mulf %349, %357 : vector<8x128xf32>
    %359 = vector.extract_strided_slice %4 {offsets = [2, 1, 0, 0], sizes = [1, 1, 1, 128], strides = [1, 1, 1, 1]} : vector<3x9x1x128xf32> to vector<1x1x1x128xf32>
    %360 = vector.shape_cast %359 : vector<1x1x1x128xf32> to vector<1x128xf32>
    %361 = vector.broadcast %360 : vector<1x128xf32> to vector<8x128xf32>
    %362 = arith.mulf %344, %361 : vector<8x128xf32>
    %363 = arith.addf %358, %362 : vector<8x128xf32>
    %364 = vector.extract_strided_slice %4 {offsets = [2, 2, 0, 0], sizes = [1, 1, 1, 128], strides = [1, 1, 1, 1]} : vector<3x9x1x128xf32> to vector<1x1x1x128xf32>
    %365 = vector.shape_cast %364 : vector<1x1x1x128xf32> to vector<1x128xf32>
    %366 = vector.broadcast %365 : vector<1x128xf32> to vector<8x128xf32>
    %367 = arith.mulf %350, %366 : vector<8x128xf32>
    %368 = arith.addf %363, %367 : vector<8x128xf32>
    %369 = vector.extract_strided_slice %4 {offsets = [2, 3, 0, 0], sizes = [1, 1, 1, 128], strides = [1, 1, 1, 1]} : vector<3x9x1x128xf32> to vector<1x1x1x128xf32>
    %370 = vector.shape_cast %369 : vector<1x1x1x128xf32> to vector<1x128xf32>
    %371 = vector.broadcast %370 : vector<1x128xf32> to vector<8x128xf32>
    %372 = arith.mulf %351, %371 : vector<8x128xf32>
    %373 = vector.extract_strided_slice %4 {offsets = [2, 4, 0, 0], sizes = [1, 1, 1, 128], strides = [1, 1, 1, 1]} : vector<3x9x1x128xf32> to vector<1x1x1x128xf32>
    %374 = vector.shape_cast %373 : vector<1x1x1x128xf32> to vector<1x128xf32>
    %375 = vector.broadcast %374 : vector<1x128xf32> to vector<8x128xf32>
    %376 = arith.mulf %340, %375 : vector<8x128xf32>
    %377 = arith.addf %372, %376 : vector<8x128xf32>
    %378 = vector.extract_strided_slice %4 {offsets = [2, 5, 0, 0], sizes = [1, 1, 1, 128], strides = [1, 1, 1, 1]} : vector<3x9x1x128xf32> to vector<1x1x1x128xf32>
    %379 = vector.shape_cast %378 : vector<1x1x1x128xf32> to vector<1x128xf32>
    %380 = vector.broadcast %379 : vector<1x128xf32> to vector<8x128xf32>
    %381 = arith.mulf %352, %380 : vector<8x128xf32>
    %382 = arith.addf %377, %381 : vector<8x128xf32>
    %383 = vector.extract_strided_slice %4 {offsets = [2, 6, 0, 0], sizes = [1, 1, 1, 128], strides = [1, 1, 1, 1]} : vector<3x9x1x128xf32> to vector<1x1x1x128xf32>
    %384 = vector.shape_cast %383 : vector<1x1x1x128xf32> to vector<1x128xf32>
    %385 = vector.broadcast %384 : vector<1x128xf32> to vector<8x128xf32>
    %386 = arith.mulf %353, %385 : vector<8x128xf32>
    %387 = vector.extract_strided_slice %4 {offsets = [2, 7, 0, 0], sizes = [1, 1, 1, 128], strides = [1, 1, 1, 1]} : vector<3x9x1x128xf32> to vector<1x1x1x128xf32>
    %388 = vector.shape_cast %387 : vector<1x1x1x128xf32> to vector<1x128xf32>
    %389 = vector.broadcast %388 : vector<1x128xf32> to vector<8x128xf32>
    %390 = arith.mulf %348, %389 : vector<8x128xf32>
    %391 = arith.addf %386, %390 : vector<8x128xf32>
    %392 = vector.extract_strided_slice %4 {offsets = [2, 8, 0, 0], sizes = [1, 1, 1, 128], strides = [1, 1, 1, 1]} : vector<3x9x1x128xf32> to vector<1x1x1x128xf32>
    %393 = vector.shape_cast %392 : vector<1x1x1x128xf32> to vector<1x128xf32>
    %394 = vector.broadcast %393 : vector<1x128xf32> to vector<8x128xf32>
    %395 = arith.mulf %354, %394 : vector<8x128xf32>
    %396 = arith.addf %391, %395 : vector<8x128xf32>
    %397 = arith.addf %368, %382 : vector<8x128xf32>
    %398 = arith.addf %397, %396 : vector<8x128xf32>
    %399 = arith.addf %294, %398 : vector<8x128xf32>
    %400 = vector.broadcast %2 : vector<1x128xf32> to vector<8x128xf32>
    %401 = arith.addf %399, %400 : vector<8x128xf32>
    %cst_57 = arith.constant 5.000000e-01 : f32
    %402 = vector.broadcast %cst_57 : f32 to vector<8x128xf32>
    %403 = arith.mulf %402, %401 : vector<8x128xf32>
    %cst_58 = arith.constant 0.707106769 : f32
    %404 = vector.broadcast %cst_58 : f32 to vector<8x128xf32>
    %405 = arith.mulf %401, %404 : vector<8x128xf32>
    %406 = math.erf %405 : vector<8x128xf32>
    %cst_59 = arith.constant 1.000000e+00 : f32
    %407 = vector.broadcast %cst_59 : f32 to vector<8x128xf32>
    %408 = arith.addf %407, %406 : vector<8x128xf32>
    %409 = arith.mulf %403, %408 : vector<8x128xf32>
    %c0_60 = arith.constant 0 : index
    %c1_61 = arith.constant 1 : index
    %c0_62 = arith.constant 0 : index
    %c0_63 = arith.constant 0 : index
    %410 = vector.load %arg7[%c0_60, %c1_61, %c0_62, %c0_63] : memref<1x8x8x128xf32, #tpu.memory_space<vmem>>, vector<1x1x8x128xf32>
    %411 = vector.shape_cast %410 : vector<1x1x8x128xf32> to vector<8x128xf32>
    %412 = vector.shape_cast %409 : vector<8x128xf32> to vector<1x1x8x128xf32>
    tpu.vector_store %arg7[%c0_60, %c1_61, %c0_62, %c0_63], %412 {strides = array<i32>} : memref<1x8x8x128xf32, #tpu.memory_space<vmem>>, vector<1x1x8x128xf32>,
    %413 = vector.extract_strided_slice %4 {offsets = [1, 0, 0, 0], sizes = [1, 1, 1, 128], strides = [1, 1, 1, 1]} : vector<3x9x1x128xf32> to vector<1x1x1x128xf32>
    %414 = vector.shape_cast %413 : vector<1x1x1x128xf32> to vector<1x128xf32>
    %415 = vector.broadcast %414 : vector<1x128xf32> to vector<8x128xf32>
    %416 = arith.mulf %349, %415 : vector<8x128xf32>
    %417 = vector.extract_strided_slice %4 {offsets = [1, 1, 0, 0], sizes = [1, 1, 1, 128], strides = [1, 1, 1, 1]} : vector<3x9x1x128xf32> to vector<1x1x1x128xf32>
    %418 = vector.shape_cast %417 : vector<1x1x1x128xf32> to vector<1x128xf32>
    %419 = vector.broadcast %418 : vector<1x128xf32> to vector<8x128xf32>
    %420 = arith.mulf %344, %419 : vector<8x128xf32>
    %421 = arith.addf %416, %420 : vector<8x128xf32>
    %422 = vector.extract_strided_slice %4 {offsets = [1, 2, 0, 0], sizes = [1, 1, 1, 128], strides = [1, 1, 1, 1]} : vector<3x9x1x128xf32> to vector<1x1x1x128xf32>
    %423 = vector.shape_cast %422 : vector<1x1x1x128xf32> to vector<1x128xf32>
    %424 = vector.broadcast %423 : vector<1x128xf32> to vector<8x128xf32>
    %425 = arith.mulf %350, %424 : vector<8x128xf32>
    %426 = arith.addf %421, %425 : vector<8x128xf32>
    %427 = vector.extract_strided_slice %4 {offsets = [1, 3, 0, 0], sizes = [1, 1, 1, 128], strides = [1, 1, 1, 1]} : vector<3x9x1x128xf32> to vector<1x1x1x128xf32>
    %428 = vector.shape_cast %427 : vector<1x1x1x128xf32> to vector<1x128xf32>
    %429 = vector.broadcast %428 : vector<1x128xf32> to vector<8x128xf32>
    %430 = arith.mulf %351, %429 : vector<8x128xf32>
    %431 = vector.extract_strided_slice %4 {offsets = [1, 4, 0, 0], sizes = [1, 1, 1, 128], strides = [1, 1, 1, 1]} : vector<3x9x1x128xf32> to vector<1x1x1x128xf32>
    %432 = vector.shape_cast %431 : vector<1x1x1x128xf32> to vector<1x128xf32>
    %433 = vector.broadcast %432 : vector<1x128xf32> to vector<8x128xf32>
    %434 = arith.mulf %340, %433 : vector<8x128xf32>
    %435 = arith.addf %430, %434 : vector<8x128xf32>
    %436 = vector.extract_strided_slice %4 {offsets = [1, 5, 0, 0], sizes = [1, 1, 1, 128], strides = [1, 1, 1, 1]} : vector<3x9x1x128xf32> to vector<1x1x1x128xf32>
    %437 = vector.shape_cast %436 : vector<1x1x1x128xf32> to vector<1x128xf32>
    %438 = vector.broadcast %437 : vector<1x128xf32> to vector<8x128xf32>
    %439 = arith.mulf %352, %438 : vector<8x128xf32>
    %440 = arith.addf %435, %439 : vector<8x128xf32>
    %441 = vector.extract_strided_slice %4 {offsets = [1, 6, 0, 0], sizes = [1, 1, 1, 128], strides = [1, 1, 1, 1]} : vector<3x9x1x128xf32> to vector<1x1x1x128xf32>
    %442 = vector.shape_cast %441 : vector<1x1x1x128xf32> to vector<1x128xf32>
    %443 = vector.broadcast %442 : vector<1x128xf32> to vector<8x128xf32>
    %444 = arith.mulf %353, %443 : vector<8x128xf32>
    %445 = vector.extract_strided_slice %4 {offsets = [1, 7, 0, 0], sizes = [1, 1, 1, 128], strides = [1, 1, 1, 1]} : vector<3x9x1x128xf32> to vector<1x1x1x128xf32>
    %446 = vector.shape_cast %445 : vector<1x1x1x128xf32> to vector<1x128xf32>
    %447 = vector.broadcast %446 : vector<1x128xf32> to vector<8x128xf32>
    %448 = arith.mulf %348, %447 : vector<8x128xf32>
    %449 = arith.addf %444, %448 : vector<8x128xf32>
    %450 = vector.extract_strided_slice %4 {offsets = [1, 8, 0, 0], sizes = [1, 1, 1, 128], strides = [1, 1, 1, 1]} : vector<3x9x1x128xf32> to vector<1x1x1x128xf32>
    %451 = vector.shape_cast %450 : vector<1x1x1x128xf32> to vector<1x128xf32>
    %452 = vector.broadcast %451 : vector<1x128xf32> to vector<8x128xf32>
    %453 = arith.mulf %354, %452 : vector<8x128xf32>
    %454 = arith.addf %449, %453 : vector<8x128xf32>
    %455 = arith.addf %426, %440 : vector<8x128xf32>
    %456 = arith.addf %455, %454 : vector<8x128xf32>
    %457 = arith.addf %338, %456 : vector<8x128xf32>
    %458 = vector.extract_strided_slice %4 {offsets = [0, 0, 0, 0], sizes = [1, 1, 1, 128], strides = [1, 1, 1, 1]} : vector<3x9x1x128xf32> to vector<1x1x1x128xf32>
    %459 = vector.shape_cast %458 : vector<1x1x1x128xf32> to vector<1x128xf32>
    %460 = vector.broadcast %459 : vector<1x128xf32> to vector<8x128xf32>
    %461 = arith.mulf %349, %460 : vector<8x128xf32>
    %462 = vector.extract_strided_slice %4 {offsets = [0, 1, 0, 0], sizes = [1, 1, 1, 128], strides = [1, 1, 1, 1]} : vector<3x9x1x128xf32> to vector<1x1x1x128xf32>
    %463 = vector.shape_cast %462 : vector<1x1x1x128xf32> to vector<1x128xf32>
    %464 = vector.broadcast %463 : vector<1x128xf32> to vector<8x128xf32>
    %465 = arith.mulf %344, %464 : vector<8x128xf32>
    %466 = arith.addf %461, %465 : vector<8x128xf32>
    %467 = vector.extract_strided_slice %4 {offsets = [0, 2, 0, 0], sizes = [1, 1, 1, 128], strides = [1, 1, 1, 1]} : vector<3x9x1x128xf32> to vector<1x1x1x128xf32>
    %468 = vector.shape_cast %467 : vector<1x1x1x128xf32> to vector<1x128xf32>
    %469 = vector.broadcast %468 : vector<1x128xf32> to vector<8x128xf32>
    %470 = arith.mulf %350, %469 : vector<8x128xf32>
    %471 = arith.addf %466, %470 : vector<8x128xf32>
    %472 = vector.extract_strided_slice %4 {offsets = [0, 3, 0, 0], sizes = [1, 1, 1, 128], strides = [1, 1, 1, 1]} : vector<3x9x1x128xf32> to vector<1x1x1x128xf32>
    %473 = vector.shape_cast %472 : vector<1x1x1x128xf32> to vector<1x128xf32>
    %474 = vector.broadcast %473 : vector<1x128xf32> to vector<8x128xf32>
    %475 = arith.mulf %351, %474 : vector<8x128xf32>
    %476 = vector.extract_strided_slice %4 {offsets = [0, 4, 0, 0], sizes = [1, 1, 1, 128], strides = [1, 1, 1, 1]} : vector<3x9x1x128xf32> to vector<1x1x1x128xf32>
    %477 = vector.shape_cast %476 : vector<1x1x1x128xf32> to vector<1x128xf32>
    %478 = vector.broadcast %477 : vector<1x128xf32> to vector<8x128xf32>
    %479 = arith.mulf %340, %478 : vector<8x128xf32>
    %480 = arith.addf %475, %479 : vector<8x128xf32>
    %481 = vector.extract_strided_slice %4 {offsets = [0, 5, 0, 0], sizes = [1, 1, 1, 128], strides = [1, 1, 1, 1]} : vector<3x9x1x128xf32> to vector<1x1x1x128xf32>
    %482 = vector.shape_cast %481 : vector<1x1x1x128xf32> to vector<1x128xf32>
    %483 = vector.broadcast %482 : vector<1x128xf32> to vector<8x128xf32>
    %484 = arith.mulf %352, %483 : vector<8x128xf32>
    %485 = arith.addf %480, %484 : vector<8x128xf32>
    %486 = vector.extract_strided_slice %4 {offsets = [0, 6, 0, 0], sizes = [1, 1, 1, 128], strides = [1, 1, 1, 1]} : vector<3x9x1x128xf32> to vector<1x1x1x128xf32>
    %487 = vector.shape_cast %486 : vector<1x1x1x128xf32> to vector<1x128xf32>
    %488 = vector.broadcast %487 : vector<1x128xf32> to vector<8x128xf32>
    %489 = arith.mulf %353, %488 : vector<8x128xf32>
    %490 = vector.extract_strided_slice %4 {offsets = [0, 7, 0, 0], sizes = [1, 1, 1, 128], strides = [1, 1, 1, 1]} : vector<3x9x1x128xf32> to vector<1x1x1x128xf32>
    %491 = vector.shape_cast %490 : vector<1x1x1x128xf32> to vector<1x128xf32>
    %492 = vector.broadcast %491 : vector<1x128xf32> to vector<8x128xf32>
    %493 = arith.mulf %348, %492 : vector<8x128xf32>
    %494 = arith.addf %489, %493 : vector<8x128xf32>
    %495 = vector.extract_strided_slice %4 {offsets = [0, 8, 0, 0], sizes = [1, 1, 1, 128], strides = [1, 1, 1, 1]} : vector<3x9x1x128xf32> to vector<1x1x1x128xf32>
    %496 = vector.shape_cast %495 : vector<1x1x1x128xf32> to vector<1x128xf32>
    %497 = vector.broadcast %496 : vector<1x128xf32> to vector<8x128xf32>
    %498 = arith.mulf %354, %497 : vector<8x128xf32>
    %499 = arith.addf %494, %498 : vector<8x128xf32>
    %500 = arith.addf %471, %485 : vector<8x128xf32>
    %501 = arith.addf %500, %499 : vector<8x128xf32>
    %c0_64 = arith.constant 0 : index
    %c3 = arith.constant 3 : index
    %c0_65 = arith.constant 0 : index
    %c0_66 = arith.constant 0 : index
    %502 = vector.load %arg2[%c0_64, %c3, %c0_65, %c0_66] : memref<1x8x8x128xf32, #tpu.memory_space<vmem>>, vector<1x1x8x128xf32>
    %503 = vector.shape_cast %502 : vector<1x1x8x128xf32> to vector<8x128xf32>
    %c1_i32_67 = arith.constant 1 : i32
    %504 = tpu.dynamic_rotate %503 by %c1_i32_67 dim 0 : vector<8x128xf32>, i32 -> vector<8x128xf32>
    %505 = vector.shape_cast %7 : vector<8x1xi1> to vector<8x1xi1>
    %506 = vector.broadcast %505 : vector<8x1xi1> to vector<8x128xi1>
    %507 = arith.select %506, %504, %3 : vector<8x128xi1>, vector<8x128xf32>
    %c7_i32_68 = arith.constant 7 : i32
    %508 = tpu.dynamic_rotate %503 by %c7_i32_68 dim 0 : vector<8x128xf32>, i32 -> vector<8x128xf32>
    %509 = vector.shape_cast %9 : vector<8x1xi1> to vector<8x1xi1>
    %510 = vector.broadcast %509 : vector<8x1xi1> to vector<8x128xi1>
    %511 = arith.select %510, %508, %3 : vector<8x128xi1>, vector<8x128xf32>
    %c16_i32_69 = arith.constant 16 : i32
    %512 = tpu.dynamic_rotate %507 by %c16_i32_69 dim 1 : vector<8x128xf32>, i32 -> vector<8x128xf32>
    %c112_i32_70 = arith.constant 112 : i32
    %513 = tpu.dynamic_rotate %507 by %c112_i32_70 dim 1 : vector<8x128xf32>, i32 -> vector<8x128xf32>
    %c16_i32_71 = arith.constant 16 : i32
    %514 = tpu.dynamic_rotate %503 by %c16_i32_71 dim 1 : vector<8x128xf32>, i32 -> vector<8x128xf32>
    %c112_i32_72 = arith.constant 112 : i32
    %515 = tpu.dynamic_rotate %503 by %c112_i32_72 dim 1 : vector<8x128xf32>, i32 -> vector<8x128xf32>
    %c16_i32_73 = arith.constant 16 : i32
    %516 = tpu.dynamic_rotate %511 by %c16_i32_73 dim 1 : vector<8x128xf32>, i32 -> vector<8x128xf32>
    %c112_i32_74 = arith.constant 112 : i32
    %517 = tpu.dynamic_rotate %511 by %c112_i32_74 dim 1 : vector<8x128xf32>, i32 -> vector<8x128xf32>
    %518 = vector.extract_strided_slice %4 {offsets = [2, 0, 0, 0], sizes = [1, 1, 1, 128], strides = [1, 1, 1, 1]} : vector<3x9x1x128xf32> to vector<1x1x1x128xf32>
    %519 = vector.shape_cast %518 : vector<1x1x1x128xf32> to vector<1x128xf32>
    %520 = vector.broadcast %519 : vector<1x128xf32> to vector<8x128xf32>
    %521 = arith.mulf %512, %520 : vector<8x128xf32>
    %522 = vector.extract_strided_slice %4 {offsets = [2, 1, 0, 0], sizes = [1, 1, 1, 128], strides = [1, 1, 1, 1]} : vector<3x9x1x128xf32> to vector<1x1x1x128xf32>
    %523 = vector.shape_cast %522 : vector<1x1x1x128xf32> to vector<1x128xf32>
    %524 = vector.broadcast %523 : vector<1x128xf32> to vector<8x128xf32>
    %525 = arith.mulf %507, %524 : vector<8x128xf32>
    %526 = arith.addf %521, %525 : vector<8x128xf32>
    %527 = vector.extract_strided_slice %4 {offsets = [2, 2, 0, 0], sizes = [1, 1, 1, 128], strides = [1, 1, 1, 1]} : vector<3x9x1x128xf32> to vector<1x1x1x128xf32>
    %528 = vector.shape_cast %527 : vector<1x1x1x128xf32> to vector<1x128xf32>
    %529 = vector.broadcast %528 : vector<1x128xf32> to vector<8x128xf32>
    %530 = arith.mulf %513, %529 : vector<8x128xf32>
    %531 = arith.addf %526, %530 : vector<8x128xf32>
    %532 = vector.extract_strided_slice %4 {offsets = [2, 3, 0, 0], sizes = [1, 1, 1, 128], strides = [1, 1, 1, 1]} : vector<3x9x1x128xf32> to vector<1x1x1x128xf32>
    %533 = vector.shape_cast %532 : vector<1x1x1x128xf32> to vector<1x128xf32>
    %534 = vector.broadcast %533 : vector<1x128xf32> to vector<8x128xf32>
    %535 = arith.mulf %514, %534 : vector<8x128xf32>
    %536 = vector.extract_strided_slice %4 {offsets = [2, 4, 0, 0], sizes = [1, 1, 1, 128], strides = [1, 1, 1, 1]} : vector<3x9x1x128xf32> to vector<1x1x1x128xf32>
    %537 = vector.shape_cast %536 : vector<1x1x1x128xf32> to vector<1x128xf32>
    %538 = vector.broadcast %537 : vector<1x128xf32> to vector<8x128xf32>
    %539 = arith.mulf %503, %538 : vector<8x128xf32>
    %540 = arith.addf %535, %539 : vector<8x128xf32>
    %541 = vector.extract_strided_slice %4 {offsets = [2, 5, 0, 0], sizes = [1, 1, 1, 128], strides = [1, 1, 1, 1]} : vector<3x9x1x128xf32> to vector<1x1x1x128xf32>
    %542 = vector.shape_cast %541 : vector<1x1x1x128xf32> to vector<1x128xf32>
    %543 = vector.broadcast %542 : vector<1x128xf32> to vector<8x128xf32>
    %544 = arith.mulf %515, %543 : vector<8x128xf32>
    %545 = arith.addf %540, %544 : vector<8x128xf32>
    %546 = vector.extract_strided_slice %4 {offsets = [2, 6, 0, 0], sizes = [1, 1, 1, 128], strides = [1, 1, 1, 1]} : vector<3x9x1x128xf32> to vector<1x1x1x128xf32>
    %547 = vector.shape_cast %546 : vector<1x1x1x128xf32> to vector<1x128xf32>
    %548 = vector.broadcast %547 : vector<1x128xf32> to vector<8x128xf32>
    %549 = arith.mulf %516, %548 : vector<8x128xf32>
    %550 = vector.extract_strided_slice %4 {offsets = [2, 7, 0, 0], sizes = [1, 1, 1, 128], strides = [1, 1, 1, 1]} : vector<3x9x1x128xf32> to vector<1x1x1x128xf32>
    %551 = vector.shape_cast %550 : vector<1x1x1x128xf32> to vector<1x128xf32>
    %552 = vector.broadcast %551 : vector<1x128xf32> to vector<8x128xf32>
    %553 = arith.mulf %511, %552 : vector<8x128xf32>
    %554 = arith.addf %549, %553 : vector<8x128xf32>
    %555 = vector.extract_strided_slice %4 {offsets = [2, 8, 0, 0], sizes = [1, 1, 1, 128], strides = [1, 1, 1, 1]} : vector<3x9x1x128xf32> to vector<1x1x1x128xf32>
    %556 = vector.shape_cast %555 : vector<1x1x1x128xf32> to vector<1x128xf32>
    %557 = vector.broadcast %556 : vector<1x128xf32> to vector<8x128xf32>
    %558 = arith.mulf %517, %557 : vector<8x128xf32>
    %559 = arith.addf %554, %558 : vector<8x128xf32>
    %560 = arith.addf %531, %545 : vector<8x128xf32>
    %561 = arith.addf %560, %559 : vector<8x128xf32>
    %562 = arith.addf %457, %561 : vector<8x128xf32>
    %563 = vector.broadcast %2 : vector<1x128xf32> to vector<8x128xf32>
    %564 = arith.addf %562, %563 : vector<8x128xf32>
    %cst_75 = arith.constant 5.000000e-01 : f32
    %565 = vector.broadcast %cst_75 : f32 to vector<8x128xf32>
    %566 = arith.mulf %565, %564 : vector<8x128xf32>
    %cst_76 = arith.constant 0.707106769 : f32
    %567 = vector.broadcast %cst_76 : f32 to vector<8x128xf32>
    %568 = arith.mulf %564, %567 : vector<8x128xf32>
    %569 = math.erf %568 : vector<8x128xf32>
    %cst_77 = arith.constant 1.000000e+00 : f32
    %570 = vector.broadcast %cst_77 : f32 to vector<8x128xf32>
    %571 = arith.addf %570, %569 : vector<8x128xf32>
    %572 = arith.mulf %566, %571 : vector<8x128xf32>
    %c0_78 = arith.constant 0 : index
    %c2_79 = arith.constant 2 : index
    %c0_80 = arith.constant 0 : index
    %c0_81 = arith.constant 0 : index
    %573 = vector.load %arg7[%c0_78, %c2_79, %c0_80, %c0_81] : memref<1x8x8x128xf32, #tpu.memory_space<vmem>>, vector<1x1x8x128xf32>
    %574 = vector.shape_cast %573 : vector<1x1x8x128xf32> to vector<8x128xf32>
    %575 = vector.shape_cast %572 : vector<8x128xf32> to vector<1x1x8x128xf32>
    tpu.vector_store %arg7[%c0_78, %c2_79, %c0_80, %c0_81], %575 {strides = array<i32>} : memref<1x8x8x128xf32, #tpu.memory_space<vmem>>, vector<1x1x8x128xf32>,
    %576 = vector.extract_strided_slice %4 {offsets = [1, 0, 0, 0], sizes = [1, 1, 1, 128], strides = [1, 1, 1, 1]} : vector<3x9x1x128xf32> to vector<1x1x1x128xf32>
    %577 = vector.shape_cast %576 : vector<1x1x1x128xf32> to vector<1x128xf32>
    %578 = vector.broadcast %577 : vector<1x128xf32> to vector<8x128xf32>
    %579 = arith.mulf %512, %578 : vector<8x128xf32>
    %580 = vector.extract_strided_slice %4 {offsets = [1, 1, 0, 0], sizes = [1, 1, 1, 128], strides = [1, 1, 1, 1]} : vector<3x9x1x128xf32> to vector<1x1x1x128xf32>
    %581 = vector.shape_cast %580 : vector<1x1x1x128xf32> to vector<1x128xf32>
    %582 = vector.broadcast %581 : vector<1x128xf32> to vector<8x128xf32>
    %583 = arith.mulf %507, %582 : vector<8x128xf32>
    %584 = arith.addf %579, %583 : vector<8x128xf32>
    %585 = vector.extract_strided_slice %4 {offsets = [1, 2, 0, 0], sizes = [1, 1, 1, 128], strides = [1, 1, 1, 1]} : vector<3x9x1x128xf32> to vector<1x1x1x128xf32>
    %586 = vector.shape_cast %585 : vector<1x1x1x128xf32> to vector<1x128xf32>
    %587 = vector.broadcast %586 : vector<1x128xf32> to vector<8x128xf32>
    %588 = arith.mulf %513, %587 : vector<8x128xf32>
    %589 = arith.addf %584, %588 : vector<8x128xf32>
    %590 = vector.extract_strided_slice %4 {offsets = [1, 3, 0, 0], sizes = [1, 1, 1, 128], strides = [1, 1, 1, 1]} : vector<3x9x1x128xf32> to vector<1x1x1x128xf32>
    %591 = vector.shape_cast %590 : vector<1x1x1x128xf32> to vector<1x128xf32>
    %592 = vector.broadcast %591 : vector<1x128xf32> to vector<8x128xf32>
    %593 = arith.mulf %514, %592 : vector<8x128xf32>
    %594 = vector.extract_strided_slice %4 {offsets = [1, 4, 0, 0], sizes = [1, 1, 1, 128], strides = [1, 1, 1, 1]} : vector<3x9x1x128xf32> to vector<1x1x1x128xf32>
    %595 = vector.shape_cast %594 : vector<1x1x1x128xf32> to vector<1x128xf32>
    %596 = vector.broadcast %595 : vector<1x128xf32> to vector<8x128xf32>
    %597 = arith.mulf %503, %596 : vector<8x128xf32>
    %598 = arith.addf %593, %597 : vector<8x128xf32>
    %599 = vector.extract_strided_slice %4 {offsets = [1, 5, 0, 0], sizes = [1, 1, 1, 128], strides = [1, 1, 1, 1]} : vector<3x9x1x128xf32> to vector<1x1x1x128xf32>
    %600 = vector.shape_cast %599 : vector<1x1x1x128xf32> to vector<1x128xf32>
    %601 = vector.broadcast %600 : vector<1x128xf32> to vector<8x128xf32>
    %602 = arith.mulf %515, %601 : vector<8x128xf32>
    %603 = arith.addf %598, %602 : vector<8x128xf32>
    %604 = vector.extract_strided_slice %4 {offsets = [1, 6, 0, 0], sizes = [1, 1, 1, 128], strides = [1, 1, 1, 1]} : vector<3x9x1x128xf32> to vector<1x1x1x128xf32>
    %605 = vector.shape_cast %604 : vector<1x1x1x128xf32> to vector<1x128xf32>
    %606 = vector.broadcast %605 : vector<1x128xf32> to vector<8x128xf32>
    %607 = arith.mulf %516, %606 : vector<8x128xf32>
    %608 = vector.extract_strided_slice %4 {offsets = [1, 7, 0, 0], sizes = [1, 1, 1, 128], strides = [1, 1, 1, 1]} : vector<3x9x1x128xf32> to vector<1x1x1x128xf32>
    %609 = vector.shape_cast %608 : vector<1x1x1x128xf32> to vector<1x128xf32>
    %610 = vector.broadcast %609 : vector<1x128xf32> to vector<8x128xf32>
    %611 = arith.mulf %511, %610 : vector<8x128xf32>
    %612 = arith.addf %607, %611 : vector<8x128xf32>
    %613 = vector.extract_strided_slice %4 {offsets = [1, 8, 0, 0], sizes = [1, 1, 1, 128], strides = [1, 1, 1, 1]} : vector<3x9x1x128xf32> to vector<1x1x1x128xf32>
    %614 = vector.shape_cast %613 : vector<1x1x1x128xf32> to vector<1x128xf32>
    %615 = vector.broadcast %614 : vector<1x128xf32> to vector<8x128xf32>
    %616 = arith.mulf %517, %615 : vector<8x128xf32>
    %617 = arith.addf %612, %616 : vector<8x128xf32>
    %618 = arith.addf %589, %603 : vector<8x128xf32>
    %619 = arith.addf %618, %617 : vector<8x128xf32>
    %620 = arith.addf %501, %619 : vector<8x128xf32>
    %621 = vector.extract_strided_slice %4 {offsets = [0, 0, 0, 0], sizes = [1, 1, 1, 128], strides = [1, 1, 1, 1]} : vector<3x9x1x128xf32> to vector<1x1x1x128xf32>
    %622 = vector.shape_cast %621 : vector<1x1x1x128xf32> to vector<1x128xf32>
    %623 = vector.broadcast %622 : vector<1x128xf32> to vector<8x128xf32>
    %624 = arith.mulf %512, %623 : vector<8x128xf32>
    %625 = vector.extract_strided_slice %4 {offsets = [0, 1, 0, 0], sizes = [1, 1, 1, 128], strides = [1, 1, 1, 1]} : vector<3x9x1x128xf32> to vector<1x1x1x128xf32>
    %626 = vector.shape_cast %625 : vector<1x1x1x128xf32> to vector<1x128xf32>
    %627 = vector.broadcast %626 : vector<1x128xf32> to vector<8x128xf32>
    %628 = arith.mulf %507, %627 : vector<8x128xf32>
    %629 = arith.addf %624, %628 : vector<8x128xf32>
    %630 = vector.extract_strided_slice %4 {offsets = [0, 2, 0, 0], sizes = [1, 1, 1, 128], strides = [1, 1, 1, 1]} : vector<3x9x1x128xf32> to vector<1x1x1x128xf32>
    %631 = vector.shape_cast %630 : vector<1x1x1x128xf32> to vector<1x128xf32>
    %632 = vector.broadcast %631 : vector<1x128xf32> to vector<8x128xf32>
    %633 = arith.mulf %513, %632 : vector<8x128xf32>
    %634 = arith.addf %629, %633 : vector<8x128xf32>
    %635 = vector.extract_strided_slice %4 {offsets = [0, 3, 0, 0], sizes = [1, 1, 1, 128], strides = [1, 1, 1, 1]} : vector<3x9x1x128xf32> to vector<1x1x1x128xf32>
    %636 = vector.shape_cast %635 : vector<1x1x1x128xf32> to vector<1x128xf32>
    %637 = vector.broadcast %636 : vector<1x128xf32> to vector<8x128xf32>
    %638 = arith.mulf %514, %637 : vector<8x128xf32>
    %639 = vector.extract_strided_slice %4 {offsets = [0, 4, 0, 0], sizes = [1, 1, 1, 128], strides = [1, 1, 1, 1]} : vector<3x9x1x128xf32> to vector<1x1x1x128xf32>
    %640 = vector.shape_cast %639 : vector<1x1x1x128xf32> to vector<1x128xf32>
    %641 = vector.broadcast %640 : vector<1x128xf32> to vector<8x128xf32>
    %642 = arith.mulf %503, %641 : vector<8x128xf32>
    %643 = arith.addf %638, %642 : vector<8x128xf32>
    %644 = vector.extract_strided_slice %4 {offsets = [0, 5, 0, 0], sizes = [1, 1, 1, 128], strides = [1, 1, 1, 1]} : vector<3x9x1x128xf32> to vector<1x1x1x128xf32>
    %645 = vector.shape_cast %644 : vector<1x1x1x128xf32> to vector<1x128xf32>
    %646 = vector.broadcast %645 : vector<1x128xf32> to vector<8x128xf32>
    %647 = arith.mulf %515, %646 : vector<8x128xf32>
    %648 = arith.addf %643, %647 : vector<8x128xf32>
    %649 = vector.extract_strided_slice %4 {offsets = [0, 6, 0, 0], sizes = [1, 1, 1, 128], strides = [1, 1, 1, 1]} : vector<3x9x1x128xf32> to vector<1x1x1x128xf32>
    %650 = vector.shape_cast %649 : vector<1x1x1x128xf32> to vector<1x128xf32>
    %651 = vector.broadcast %650 : vector<1x128xf32> to vector<8x128xf32>
    %652 = arith.mulf %516, %651 : vector<8x128xf32>
    %653 = vector.extract_strided_slice %4 {offsets = [0, 7, 0, 0], sizes = [1, 1, 1, 128], strides = [1, 1, 1, 1]} : vector<3x9x1x128xf32> to vector<1x1x1x128xf32>
    %654 = vector.shape_cast %653 : vector<1x1x1x128xf32> to vector<1x128xf32>
    %655 = vector.broadcast %654 : vector<1x128xf32> to vector<8x128xf32>
    %656 = arith.mulf %511, %655 : vector<8x128xf32>
    %657 = arith.addf %652, %656 : vector<8x128xf32>
    %658 = vector.extract_strided_slice %4 {offsets = [0, 8, 0, 0], sizes = [1, 1, 1, 128], strides = [1, 1, 1, 1]} : vector<3x9x1x128xf32> to vector<1x1x1x128xf32>
    %659 = vector.shape_cast %658 : vector<1x1x1x128xf32> to vector<1x128xf32>
    %660 = vector.broadcast %659 : vector<1x128xf32> to vector<8x128xf32>
    %661 = arith.mulf %517, %660 : vector<8x128xf32>
    %662 = arith.addf %657, %661 : vector<8x128xf32>
    %663 = arith.addf %634, %648 : vector<8x128xf32>
    %664 = arith.addf %663, %662 : vector<8x128xf32>
    %c0_82 = arith.constant 0 : index
    %c4 = arith.constant 4 : index
    %c0_83 = arith.constant 0 : index
    %c0_84 = arith.constant 0 : index
    %665 = vector.load %arg2[%c0_82, %c4, %c0_83, %c0_84] : memref<1x8x8x128xf32, #tpu.memory_space<vmem>>, vector<1x1x8x128xf32>
    %666 = vector.shape_cast %665 : vector<1x1x8x128xf32> to vector<8x128xf32>
    %c1_i32_85 = arith.constant 1 : i32
    %667 = tpu.dynamic_rotate %666 by %c1_i32_85 dim 0 : vector<8x128xf32>, i32 -> vector<8x128xf32>
    %668 = vector.shape_cast %7 : vector<8x1xi1> to vector<8x1xi1>
    %669 = vector.broadcast %668 : vector<8x1xi1> to vector<8x128xi1>
    %670 = arith.select %669, %667, %3 : vector<8x128xi1>, vector<8x128xf32>
    %c7_i32_86 = arith.constant 7 : i32
    %671 = tpu.dynamic_rotate %666 by %c7_i32_86 dim 0 : vector<8x128xf32>, i32 -> vector<8x128xf32>
    %672 = vector.shape_cast %9 : vector<8x1xi1> to vector<8x1xi1>
    %673 = vector.broadcast %672 : vector<8x1xi1> to vector<8x128xi1>
    %674 = arith.select %673, %671, %3 : vector<8x128xi1>, vector<8x128xf32>
    %c16_i32_87 = arith.constant 16 : i32
    %675 = tpu.dynamic_rotate %670 by %c16_i32_87 dim 1 : vector<8x128xf32>, i32 -> vector<8x128xf32>
    %c112_i32_88 = arith.constant 112 : i32
    %676 = tpu.dynamic_rotate %670 by %c112_i32_88 dim 1 : vector<8x128xf32>, i32 -> vector<8x128xf32>
    %c16_i32_89 = arith.constant 16 : i32
    %677 = tpu.dynamic_rotate %666 by %c16_i32_89 dim 1 : vector<8x128xf32>, i32 -> vector<8x128xf32>
    %c112_i32_90 = arith.constant 112 : i32
    %678 = tpu.dynamic_rotate %666 by %c112_i32_90 dim 1 : vector<8x128xf32>, i32 -> vector<8x128xf32>
    %c16_i32_91 = arith.constant 16 : i32
    %679 = tpu.dynamic_rotate %674 by %c16_i32_91 dim 1 : vector<8x128xf32>, i32 -> vector<8x128xf32>
    %c112_i32_92 = arith.constant 112 : i32
    %680 = tpu.dynamic_rotate %674 by %c112_i32_92 dim 1 : vector<8x128xf32>, i32 -> vector<8x128xf32>
    %681 = vector.extract_strided_slice %4 {offsets = [2, 0, 0, 0], sizes = [1, 1, 1, 128], strides = [1, 1, 1, 1]} : vector<3x9x1x128xf32> to vector<1x1x1x128xf32>
    %682 = vector.shape_cast %681 : vector<1x1x1x128xf32> to vector<1x128xf32>
    %683 = vector.broadcast %682 : vector<1x128xf32> to vector<8x128xf32>
    %684 = arith.mulf %675, %683 : vector<8x128xf32>
    %685 = vector.extract_strided_slice %4 {offsets = [2, 1, 0, 0], sizes = [1, 1, 1, 128], strides = [1, 1, 1, 1]} : vector<3x9x1x128xf32> to vector<1x1x1x128xf32>
    %686 = vector.shape_cast %685 : vector<1x1x1x128xf32> to vector<1x128xf32>
    %687 = vector.broadcast %686 : vector<1x128xf32> to vector<8x128xf32>
    %688 = arith.mulf %670, %687 : vector<8x128xf32>
    %689 = arith.addf %684, %688 : vector<8x128xf32>
    %690 = vector.extract_strided_slice %4 {offsets = [2, 2, 0, 0], sizes = [1, 1, 1, 128], strides = [1, 1, 1, 1]} : vector<3x9x1x128xf32> to vector<1x1x1x128xf32>
    %691 = vector.shape_cast %690 : vector<1x1x1x128xf32> to vector<1x128xf32>
    %692 = vector.broadcast %691 : vector<1x128xf32> to vector<8x128xf32>
    %693 = arith.mulf %676, %692 : vector<8x128xf32>
    %694 = arith.addf %689, %693 : vector<8x128xf32>
    %695 = vector.extract_strided_slice %4 {offsets = [2, 3, 0, 0], sizes = [1, 1, 1, 128], strides = [1, 1, 1, 1]} : vector<3x9x1x128xf32> to vector<1x1x1x128xf32>
    %696 = vector.shape_cast %695 : vector<1x1x1x128xf32> to vector<1x128xf32>
    %697 = vector.broadcast %696 : vector<1x128xf32> to vector<8x128xf32>
    %698 = arith.mulf %677, %697 : vector<8x128xf32>
    %699 = vector.extract_strided_slice %4 {offsets = [2, 4, 0, 0], sizes = [1, 1, 1, 128], strides = [1, 1, 1, 1]} : vector<3x9x1x128xf32> to vector<1x1x1x128xf32>
    %700 = vector.shape_cast %699 : vector<1x1x1x128xf32> to vector<1x128xf32>
    %701 = vector.broadcast %700 : vector<1x128xf32> to vector<8x128xf32>
    %702 = arith.mulf %666, %701 : vector<8x128xf32>
    %703 = arith.addf %698, %702 : vector<8x128xf32>
    %704 = vector.extract_strided_slice %4 {offsets = [2, 5, 0, 0], sizes = [1, 1, 1, 128], strides = [1, 1, 1, 1]} : vector<3x9x1x128xf32> to vector<1x1x1x128xf32>
    %705 = vector.shape_cast %704 : vector<1x1x1x128xf32> to vector<1x128xf32>
    %706 = vector.broadcast %705 : vector<1x128xf32> to vector<8x128xf32>
    %707 = arith.mulf %678, %706 : vector<8x128xf32>
    %708 = arith.addf %703, %707 : vector<8x128xf32>
    %709 = vector.extract_strided_slice %4 {offsets = [2, 6, 0, 0], sizes = [1, 1, 1, 128], strides = [1, 1, 1, 1]} : vector<3x9x1x128xf32> to vector<1x1x1x128xf32>
    %710 = vector.shape_cast %709 : vector<1x1x1x128xf32> to vector<1x128xf32>
    %711 = vector.broadcast %710 : vector<1x128xf32> to vector<8x128xf32>
    %712 = arith.mulf %679, %711 : vector<8x128xf32>
    %713 = vector.extract_strided_slice %4 {offsets = [2, 7, 0, 0], sizes = [1, 1, 1, 128], strides = [1, 1, 1, 1]} : vector<3x9x1x128xf32> to vector<1x1x1x128xf32>
    %714 = vector.shape_cast %713 : vector<1x1x1x128xf32> to vector<1x128xf32>
    %715 = vector.broadcast %714 : vector<1x128xf32> to vector<8x128xf32>
    %716 = arith.mulf %674, %715 : vector<8x128xf32>
    %717 = arith.addf %712, %716 : vector<8x128xf32>
    %718 = vector.extract_strided_slice %4 {offsets = [2, 8, 0, 0], sizes = [1, 1, 1, 128], strides = [1, 1, 1, 1]} : vector<3x9x1x128xf32> to vector<1x1x1x128xf32>
    %719 = vector.shape_cast %718 : vector<1x1x1x128xf32> to vector<1x128xf32>
    %720 = vector.broadcast %719 : vector<1x128xf32> to vector<8x128xf32>
    %721 = arith.mulf %680, %720 : vector<8x128xf32>
    %722 = arith.addf %717, %721 : vector<8x128xf32>
    %723 = arith.addf %694, %708 : vector<8x128xf32>
    %724 = arith.addf %723, %722 : vector<8x128xf32>
    %725 = arith.addf %620, %724 : vector<8x128xf32>
    %726 = vector.broadcast %2 : vector<1x128xf32> to vector<8x128xf32>
    %727 = arith.addf %725, %726 : vector<8x128xf32>
    %cst_93 = arith.constant 5.000000e-01 : f32
    %728 = vector.broadcast %cst_93 : f32 to vector<8x128xf32>
    %729 = arith.mulf %728, %727 : vector<8x128xf32>
    %cst_94 = arith.constant 0.707106769 : f32
    %730 = vector.broadcast %cst_94 : f32 to vector<8x128xf32>
    %731 = arith.mulf %727, %730 : vector<8x128xf32>
    %732 = math.erf %731 : vector<8x128xf32>
    %cst_95 = arith.constant 1.000000e+00 : f32
    %733 = vector.broadcast %cst_95 : f32 to vector<8x128xf32>
    %734 = arith.addf %733, %732 : vector<8x128xf32>
    %735 = arith.mulf %729, %734 : vector<8x128xf32>
    %c0_96 = arith.constant 0 : index
    %c3_97 = arith.constant 3 : index
    %c0_98 = arith.constant 0 : index
    %c0_99 = arith.constant 0 : index
    %736 = vector.load %arg7[%c0_96, %c3_97, %c0_98, %c0_99] : memref<1x8x8x128xf32, #tpu.memory_space<vmem>>, vector<1x1x8x128xf32>
    %737 = vector.shape_cast %736 : vector<1x1x8x128xf32> to vector<8x128xf32>
    %738 = vector.shape_cast %735 : vector<8x128xf32> to vector<1x1x8x128xf32>
    tpu.vector_store %arg7[%c0_96, %c3_97, %c0_98, %c0_99], %738 {strides = array<i32>} : memref<1x8x8x128xf32, #tpu.memory_space<vmem>>, vector<1x1x8x128xf32>,
    %739 = vector.extract_strided_slice %4 {offsets = [1, 0, 0, 0], sizes = [1, 1, 1, 128], strides = [1, 1, 1, 1]} : vector<3x9x1x128xf32> to vector<1x1x1x128xf32>
    %740 = vector.shape_cast %739 : vector<1x1x1x128xf32> to vector<1x128xf32>
    %741 = vector.broadcast %740 : vector<1x128xf32> to vector<8x128xf32>
    %742 = arith.mulf %675, %741 : vector<8x128xf32>
    %743 = vector.extract_strided_slice %4 {offsets = [1, 1, 0, 0], sizes = [1, 1, 1, 128], strides = [1, 1, 1, 1]} : vector<3x9x1x128xf32> to vector<1x1x1x128xf32>
    %744 = vector.shape_cast %743 : vector<1x1x1x128xf32> to vector<1x128xf32>
    %745 = vector.broadcast %744 : vector<1x128xf32> to vector<8x128xf32>
    %746 = arith.mulf %670, %745 : vector<8x128xf32>
    %747 = arith.addf %742, %746 : vector<8x128xf32>
    %748 = vector.extract_strided_slice %4 {offsets = [1, 2, 0, 0], sizes = [1, 1, 1, 128], strides = [1, 1, 1, 1]} : vector<3x9x1x128xf32> to vector<1x1x1x128xf32>
    %749 = vector.shape_cast %748 : vector<1x1x1x128xf32> to vector<1x128xf32>
    %750 = vector.broadcast %749 : vector<1x128xf32> to vector<8x128xf32>
    %751 = arith.mulf %676, %750 : vector<8x128xf32>
    %752 = arith.addf %747, %751 : vector<8x128xf32>
    %753 = vector.extract_strided_slice %4 {offsets = [1, 3, 0, 0], sizes = [1, 1, 1, 128], strides = [1, 1, 1, 1]} : vector<3x9x1x128xf32> to vector<1x1x1x128xf32>
    %754 = vector.shape_cast %753 : vector<1x1x1x128xf32> to vector<1x128xf32>
    %755 = vector.broadcast %754 : vector<1x128xf32> to vector<8x128xf32>
    %756 = arith.mulf %677, %755 : vector<8x128xf32>
    %757 = vector.extract_strided_slice %4 {offsets = [1, 4, 0, 0], sizes = [1, 1, 1, 128], strides = [1, 1, 1, 1]} : vector<3x9x1x128xf32> to vector<1x1x1x128xf32>
    %758 = vector.shape_cast %757 : vector<1x1x1x128xf32> to vector<1x128xf32>
    %759 = vector.broadcast %758 : vector<1x128xf32> to vector<8x128xf32>
    %760 = arith.mulf %666, %759 : vector<8x128xf32>
    %761 = arith.addf %756, %760 : vector<8x128xf32>
    %762 = vector.extract_strided_slice %4 {offsets = [1, 5, 0, 0], sizes = [1, 1, 1, 128], strides = [1, 1, 1, 1]} : vector<3x9x1x128xf32> to vector<1x1x1x128xf32>
    %763 = vector.shape_cast %762 : vector<1x1x1x128xf32> to vector<1x128xf32>
    %764 = vector.broadcast %763 : vector<1x128xf32> to vector<8x128xf32>
    %765 = arith.mulf %678, %764 : vector<8x128xf32>
    %766 = arith.addf %761, %765 : vector<8x128xf32>
    %767 = vector.extract_strided_slice %4 {offsets = [1, 6, 0, 0], sizes = [1, 1, 1, 128], strides = [1, 1, 1, 1]} : vector<3x9x1x128xf32> to vector<1x1x1x128xf32>
    %768 = vector.shape_cast %767 : vector<1x1x1x128xf32> to vector<1x128xf32>
    %769 = vector.broadcast %768 : vector<1x128xf32> to vector<8x128xf32>
    %770 = arith.mulf %679, %769 : vector<8x128xf32>
    %771 = vector.extract_strided_slice %4 {offsets = [1, 7, 0, 0], sizes = [1, 1, 1, 128], strides = [1, 1, 1, 1]} : vector<3x9x1x128xf32> to vector<1x1x1x128xf32>
    %772 = vector.shape_cast %771 : vector<1x1x1x128xf32> to vector<1x128xf32>
    %773 = vector.broadcast %772 : vector<1x128xf32> to vector<8x128xf32>
    %774 = arith.mulf %674, %773 : vector<8x128xf32>
    %775 = arith.addf %770, %774 : vector<8x128xf32>
    %776 = vector.extract_strided_slice %4 {offsets = [1, 8, 0, 0], sizes = [1, 1, 1, 128], strides = [1, 1, 1, 1]} : vector<3x9x1x128xf32> to vector<1x1x1x128xf32>
    %777 = vector.shape_cast %776 : vector<1x1x1x128xf32> to vector<1x128xf32>
    %778 = vector.broadcast %777 : vector<1x128xf32> to vector<8x128xf32>
    %779 = arith.mulf %680, %778 : vector<8x128xf32>
    %780 = arith.addf %775, %779 : vector<8x128xf32>
    %781 = arith.addf %752, %766 : vector<8x128xf32>
    %782 = arith.addf %781, %780 : vector<8x128xf32>
    %783 = arith.addf %664, %782 : vector<8x128xf32>
    %784 = vector.extract_strided_slice %4 {offsets = [0, 0, 0, 0], sizes = [1, 1, 1, 128], strides = [1, 1, 1, 1]} : vector<3x9x1x128xf32> to vector<1x1x1x128xf32>
    %785 = vector.shape_cast %784 : vector<1x1x1x128xf32> to vector<1x128xf32>
    %786 = vector.broadcast %785 : vector<1x128xf32> to vector<8x128xf32>
    %787 = arith.mulf %675, %786 : vector<8x128xf32>
    %788 = vector.extract_strided_slice %4 {offsets = [0, 1, 0, 0], sizes = [1, 1, 1, 128], strides = [1, 1, 1, 1]} : vector<3x9x1x128xf32> to vector<1x1x1x128xf32>
    %789 = vector.shape_cast %788 : vector<1x1x1x128xf32> to vector<1x128xf32>
    %790 = vector.broadcast %789 : vector<1x128xf32> to vector<8x128xf32>
    %791 = arith.mulf %670, %790 : vector<8x128xf32>
    %792 = arith.addf %787, %791 : vector<8x128xf32>
    %793 = vector.extract_strided_slice %4 {offsets = [0, 2, 0, 0], sizes = [1, 1, 1, 128], strides = [1, 1, 1, 1]} : vector<3x9x1x128xf32> to vector<1x1x1x128xf32>
    %794 = vector.shape_cast %793 : vector<1x1x1x128xf32> to vector<1x128xf32>
    %795 = vector.broadcast %794 : vector<1x128xf32> to vector<8x128xf32>
    %796 = arith.mulf %676, %795 : vector<8x128xf32>
    %797 = arith.addf %792, %796 : vector<8x128xf32>
    %798 = vector.extract_strided_slice %4 {offsets = [0, 3, 0, 0], sizes = [1, 1, 1, 128], strides = [1, 1, 1, 1]} : vector<3x9x1x128xf32> to vector<1x1x1x128xf32>
    %799 = vector.shape_cast %798 : vector<1x1x1x128xf32> to vector<1x128xf32>
    %800 = vector.broadcast %799 : vector<1x128xf32> to vector<8x128xf32>
    %801 = arith.mulf %677, %800 : vector<8x128xf32>
    %802 = vector.extract_strided_slice %4 {offsets = [0, 4, 0, 0], sizes = [1, 1, 1, 128], strides = [1, 1, 1, 1]} : vector<3x9x1x128xf32> to vector<1x1x1x128xf32>
    %803 = vector.shape_cast %802 : vector<1x1x1x128xf32> to vector<1x128xf32>
    %804 = vector.broadcast %803 : vector<1x128xf32> to vector<8x128xf32>
    %805 = arith.mulf %666, %804 : vector<8x128xf32>
    %806 = arith.addf %801, %805 : vector<8x128xf32>
    %807 = vector.extract_strided_slice %4 {offsets = [0, 5, 0, 0], sizes = [1, 1, 1, 128], strides = [1, 1, 1, 1]} : vector<3x9x1x128xf32> to vector<1x1x1x128xf32>
    %808 = vector.shape_cast %807 : vector<1x1x1x128xf32> to vector<1x128xf32>
    %809 = vector.broadcast %808 : vector<1x128xf32> to vector<8x128xf32>
    %810 = arith.mulf %678, %809 : vector<8x128xf32>
    %811 = arith.addf %806, %810 : vector<8x128xf32>
    %812 = vector.extract_strided_slice %4 {offsets = [0, 6, 0, 0], sizes = [1, 1, 1, 128], strides = [1, 1, 1, 1]} : vector<3x9x1x128xf32> to vector<1x1x1x128xf32>
    %813 = vector.shape_cast %812 : vector<1x1x1x128xf32> to vector<1x128xf32>
    %814 = vector.broadcast %813 : vector<1x128xf32> to vector<8x128xf32>
    %815 = arith.mulf %679, %814 : vector<8x128xf32>
    %816 = vector.extract_strided_slice %4 {offsets = [0, 7, 0, 0], sizes = [1, 1, 1, 128], strides = [1, 1, 1, 1]} : vector<3x9x1x128xf32> to vector<1x1x1x128xf32>
    %817 = vector.shape_cast %816 : vector<1x1x1x128xf32> to vector<1x128xf32>
    %818 = vector.broadcast %817 : vector<1x128xf32> to vector<8x128xf32>
    %819 = arith.mulf %674, %818 : vector<8x128xf32>
    %820 = arith.addf %815, %819 : vector<8x128xf32>
    %821 = vector.extract_strided_slice %4 {offsets = [0, 8, 0, 0], sizes = [1, 1, 1, 128], strides = [1, 1, 1, 1]} : vector<3x9x1x128xf32> to vector<1x1x1x128xf32>
    %822 = vector.shape_cast %821 : vector<1x1x1x128xf32> to vector<1x128xf32>
    %823 = vector.broadcast %822 : vector<1x128xf32> to vector<8x128xf32>
    %824 = arith.mulf %680, %823 : vector<8x128xf32>
    %825 = arith.addf %820, %824 : vector<8x128xf32>
    %826 = arith.addf %797, %811 : vector<8x128xf32>
    %827 = arith.addf %826, %825 : vector<8x128xf32>
    %c0_100 = arith.constant 0 : index
    %c5 = arith.constant 5 : index
    %c0_101 = arith.constant 0 : index
    %c0_102 = arith.constant 0 : index
    %828 = vector.load %arg2[%c0_100, %c5, %c0_101, %c0_102] : memref<1x8x8x128xf32, #tpu.memory_space<vmem>>, vector<1x1x8x128xf32>
    %829 = vector.shape_cast %828 : vector<1x1x8x128xf32> to vector<8x128xf32>
    %c1_i32_103 = arith.constant 1 : i32
    %830 = tpu.dynamic_rotate %829 by %c1_i32_103 dim 0 : vector<8x128xf32>, i32 -> vector<8x128xf32>
    %831 = vector.shape_cast %7 : vector<8x1xi1> to vector<8x1xi1>
    %832 = vector.broadcast %831 : vector<8x1xi1> to vector<8x128xi1>
    %833 = arith.select %832, %830, %3 : vector<8x128xi1>, vector<8x128xf32>
    %c7_i32_104 = arith.constant 7 : i32
    %834 = tpu.dynamic_rotate %829 by %c7_i32_104 dim 0 : vector<8x128xf32>, i32 -> vector<8x128xf32>
    %835 = vector.shape_cast %9 : vector<8x1xi1> to vector<8x1xi1>
    %836 = vector.broadcast %835 : vector<8x1xi1> to vector<8x128xi1>
    %837 = arith.select %836, %834, %3 : vector<8x128xi1>, vector<8x128xf32>
    %c16_i32_105 = arith.constant 16 : i32
    %838 = tpu.dynamic_rotate %833 by %c16_i32_105 dim 1 : vector<8x128xf32>, i32 -> vector<8x128xf32>
    %c112_i32_106 = arith.constant 112 : i32
    %839 = tpu.dynamic_rotate %833 by %c112_i32_106 dim 1 : vector<8x128xf32>, i32 -> vector<8x128xf32>
    %c16_i32_107 = arith.constant 16 : i32
    %840 = tpu.dynamic_rotate %829 by %c16_i32_107 dim 1 : vector<8x128xf32>, i32 -> vector<8x128xf32>
    %c112_i32_108 = arith.constant 112 : i32
    %841 = tpu.dynamic_rotate %829 by %c112_i32_108 dim 1 : vector<8x128xf32>, i32 -> vector<8x128xf32>
    %c16_i32_109 = arith.constant 16 : i32
    %842 = tpu.dynamic_rotate %837 by %c16_i32_109 dim 1 : vector<8x128xf32>, i32 -> vector<8x128xf32>
    %c112_i32_110 = arith.constant 112 : i32
    %843 = tpu.dynamic_rotate %837 by %c112_i32_110 dim 1 : vector<8x128xf32>, i32 -> vector<8x128xf32>
    %844 = vector.extract_strided_slice %4 {offsets = [2, 0, 0, 0], sizes = [1, 1, 1, 128], strides = [1, 1, 1, 1]} : vector<3x9x1x128xf32> to vector<1x1x1x128xf32>
    %845 = vector.shape_cast %844 : vector<1x1x1x128xf32> to vector<1x128xf32>
    %846 = vector.broadcast %845 : vector<1x128xf32> to vector<8x128xf32>
    %847 = arith.mulf %838, %846 : vector<8x128xf32>
    %848 = vector.extract_strided_slice %4 {offsets = [2, 1, 0, 0], sizes = [1, 1, 1, 128], strides = [1, 1, 1, 1]} : vector<3x9x1x128xf32> to vector<1x1x1x128xf32>
    %849 = vector.shape_cast %848 : vector<1x1x1x128xf32> to vector<1x128xf32>
    %850 = vector.broadcast %849 : vector<1x128xf32> to vector<8x128xf32>
    %851 = arith.mulf %833, %850 : vector<8x128xf32>
    %852 = arith.addf %847, %851 : vector<8x128xf32>
    %853 = vector.extract_strided_slice %4 {offsets = [2, 2, 0, 0], sizes = [1, 1, 1, 128], strides = [1, 1, 1, 1]} : vector<3x9x1x128xf32> to vector<1x1x1x128xf32>
    %854 = vector.shape_cast %853 : vector<1x1x1x128xf32> to vector<1x128xf32>
    %855 = vector.broadcast %854 : vector<1x128xf32> to vector<8x128xf32>
    %856 = arith.mulf %839, %855 : vector<8x128xf32>
    %857 = arith.addf %852, %856 : vector<8x128xf32>
    %858 = vector.extract_strided_slice %4 {offsets = [2, 3, 0, 0], sizes = [1, 1, 1, 128], strides = [1, 1, 1, 1]} : vector<3x9x1x128xf32> to vector<1x1x1x128xf32>
    %859 = vector.shape_cast %858 : vector<1x1x1x128xf32> to vector<1x128xf32>
    %860 = vector.broadcast %859 : vector<1x128xf32> to vector<8x128xf32>
    %861 = arith.mulf %840, %860 : vector<8x128xf32>
    %862 = vector.extract_strided_slice %4 {offsets = [2, 4, 0, 0], sizes = [1, 1, 1, 128], strides = [1, 1, 1, 1]} : vector<3x9x1x128xf32> to vector<1x1x1x128xf32>
    %863 = vector.shape_cast %862 : vector<1x1x1x128xf32> to vector<1x128xf32>
    %864 = vector.broadcast %863 : vector<1x128xf32> to vector<8x128xf32>
    %865 = arith.mulf %829, %864 : vector<8x128xf32>
    %866 = arith.addf %861, %865 : vector<8x128xf32>
    %867 = vector.extract_strided_slice %4 {offsets = [2, 5, 0, 0], sizes = [1, 1, 1, 128], strides = [1, 1, 1, 1]} : vector<3x9x1x128xf32> to vector<1x1x1x128xf32>
    %868 = vector.shape_cast %867 : vector<1x1x1x128xf32> to vector<1x128xf32>
    %869 = vector.broadcast %868 : vector<1x128xf32> to vector<8x128xf32>
    %870 = arith.mulf %841, %869 : vector<8x128xf32>
    %871 = arith.addf %866, %870 : vector<8x128xf32>
    %872 = vector.extract_strided_slice %4 {offsets = [2, 6, 0, 0], sizes = [1, 1, 1, 128], strides = [1, 1, 1, 1]} : vector<3x9x1x128xf32> to vector<1x1x1x128xf32>
    %873 = vector.shape_cast %872 : vector<1x1x1x128xf32> to vector<1x128xf32>
    %874 = vector.broadcast %873 : vector<1x128xf32> to vector<8x128xf32>
    %875 = arith.mulf %842, %874 : vector<8x128xf32>
    %876 = vector.extract_strided_slice %4 {offsets = [2, 7, 0, 0], sizes = [1, 1, 1, 128], strides = [1, 1, 1, 1]} : vector<3x9x1x128xf32> to vector<1x1x1x128xf32>
    %877 = vector.shape_cast %876 : vector<1x1x1x128xf32> to vector<1x128xf32>
    %878 = vector.broadcast %877 : vector<1x128xf32> to vector<8x128xf32>
    %879 = arith.mulf %837, %878 : vector<8x128xf32>
    %880 = arith.addf %875, %879 : vector<8x128xf32>
    %881 = vector.extract_strided_slice %4 {offsets = [2, 8, 0, 0], sizes = [1, 1, 1, 128], strides = [1, 1, 1, 1]} : vector<3x9x1x128xf32> to vector<1x1x1x128xf32>
    %882 = vector.shape_cast %881 : vector<1x1x1x128xf32> to vector<1x128xf32>
    %883 = vector.broadcast %882 : vector<1x128xf32> to vector<8x128xf32>
    %884 = arith.mulf %843, %883 : vector<8x128xf32>
    %885 = arith.addf %880, %884 : vector<8x128xf32>
    %886 = arith.addf %857, %871 : vector<8x128xf32>
    %887 = arith.addf %886, %885 : vector<8x128xf32>
    %888 = arith.addf %783, %887 : vector<8x128xf32>
    %889 = vector.broadcast %2 : vector<1x128xf32> to vector<8x128xf32>
    %890 = arith.addf %888, %889 : vector<8x128xf32>
    %cst_111 = arith.constant 5.000000e-01 : f32
    %891 = vector.broadcast %cst_111 : f32 to vector<8x128xf32>
    %892 = arith.mulf %891, %890 : vector<8x128xf32>
    %cst_112 = arith.constant 0.707106769 : f32
    %893 = vector.broadcast %cst_112 : f32 to vector<8x128xf32>
    %894 = arith.mulf %890, %893 : vector<8x128xf32>
    %895 = math.erf %894 : vector<8x128xf32>
    %cst_113 = arith.constant 1.000000e+00 : f32
    %896 = vector.broadcast %cst_113 : f32 to vector<8x128xf32>
    %897 = arith.addf %896, %895 : vector<8x128xf32>
    %898 = arith.mulf %892, %897 : vector<8x128xf32>
    %c0_114 = arith.constant 0 : index
    %c4_115 = arith.constant 4 : index
    %c0_116 = arith.constant 0 : index
    %c0_117 = arith.constant 0 : index
    %899 = vector.load %arg7[%c0_114, %c4_115, %c0_116, %c0_117] : memref<1x8x8x128xf32, #tpu.memory_space<vmem>>, vector<1x1x8x128xf32>
    %900 = vector.shape_cast %899 : vector<1x1x8x128xf32> to vector<8x128xf32>
    %901 = vector.shape_cast %898 : vector<8x128xf32> to vector<1x1x8x128xf32>
    tpu.vector_store %arg7[%c0_114, %c4_115, %c0_116, %c0_117], %901 {strides = array<i32>} : memref<1x8x8x128xf32, #tpu.memory_space<vmem>>, vector<1x1x8x128xf32>,
    %902 = vector.extract_strided_slice %4 {offsets = [1, 0, 0, 0], sizes = [1, 1, 1, 128], strides = [1, 1, 1, 1]} : vector<3x9x1x128xf32> to vector<1x1x1x128xf32>
    %903 = vector.shape_cast %902 : vector<1x1x1x128xf32> to vector<1x128xf32>
    %904 = vector.broadcast %903 : vector<1x128xf32> to vector<8x128xf32>
    %905 = arith.mulf %838, %904 : vector<8x128xf32>
    %906 = vector.extract_strided_slice %4 {offsets = [1, 1, 0, 0], sizes = [1, 1, 1, 128], strides = [1, 1, 1, 1]} : vector<3x9x1x128xf32> to vector<1x1x1x128xf32>
    %907 = vector.shape_cast %906 : vector<1x1x1x128xf32> to vector<1x128xf32>
    %908 = vector.broadcast %907 : vector<1x128xf32> to vector<8x128xf32>
    %909 = arith.mulf %833, %908 : vector<8x128xf32>
    %910 = arith.addf %905, %909 : vector<8x128xf32>
    %911 = vector.extract_strided_slice %4 {offsets = [1, 2, 0, 0], sizes = [1, 1, 1, 128], strides = [1, 1, 1, 1]} : vector<3x9x1x128xf32> to vector<1x1x1x128xf32>
    %912 = vector.shape_cast %911 : vector<1x1x1x128xf32> to vector<1x128xf32>
    %913 = vector.broadcast %912 : vector<1x128xf32> to vector<8x128xf32>
    %914 = arith.mulf %839, %913 : vector<8x128xf32>
    %915 = arith.addf %910, %914 : vector<8x128xf32>
    %916 = vector.extract_strided_slice %4 {offsets = [1, 3, 0, 0], sizes = [1, 1, 1, 128], strides = [1, 1, 1, 1]} : vector<3x9x1x128xf32> to vector<1x1x1x128xf32>
    %917 = vector.shape_cast %916 : vector<1x1x1x128xf32> to vector<1x128xf32>
    %918 = vector.broadcast %917 : vector<1x128xf32> to vector<8x128xf32>
    %919 = arith.mulf %840, %918 : vector<8x128xf32>
    %920 = vector.extract_strided_slice %4 {offsets = [1, 4, 0, 0], sizes = [1, 1, 1, 128], strides = [1, 1, 1, 1]} : vector<3x9x1x128xf32> to vector<1x1x1x128xf32>
    %921 = vector.shape_cast %920 : vector<1x1x1x128xf32> to vector<1x128xf32>
    %922 = vector.broadcast %921 : vector<1x128xf32> to vector<8x128xf32>
    %923 = arith.mulf %829, %922 : vector<8x128xf32>
    %924 = arith.addf %919, %923 : vector<8x128xf32>
    %925 = vector.extract_strided_slice %4 {offsets = [1, 5, 0, 0], sizes = [1, 1, 1, 128], strides = [1, 1, 1, 1]} : vector<3x9x1x128xf32> to vector<1x1x1x128xf32>
    %926 = vector.shape_cast %925 : vector<1x1x1x128xf32> to vector<1x128xf32>
    %927 = vector.broadcast %926 : vector<1x128xf32> to vector<8x128xf32>
    %928 = arith.mulf %841, %927 : vector<8x128xf32>
    %929 = arith.addf %924, %928 : vector<8x128xf32>
    %930 = vector.extract_strided_slice %4 {offsets = [1, 6, 0, 0], sizes = [1, 1, 1, 128], strides = [1, 1, 1, 1]} : vector<3x9x1x128xf32> to vector<1x1x1x128xf32>
    %931 = vector.shape_cast %930 : vector<1x1x1x128xf32> to vector<1x128xf32>
    %932 = vector.broadcast %931 : vector<1x128xf32> to vector<8x128xf32>
    %933 = arith.mulf %842, %932 : vector<8x128xf32>
    %934 = vector.extract_strided_slice %4 {offsets = [1, 7, 0, 0], sizes = [1, 1, 1, 128], strides = [1, 1, 1, 1]} : vector<3x9x1x128xf32> to vector<1x1x1x128xf32>
    %935 = vector.shape_cast %934 : vector<1x1x1x128xf32> to vector<1x128xf32>
    %936 = vector.broadcast %935 : vector<1x128xf32> to vector<8x128xf32>
    %937 = arith.mulf %837, %936 : vector<8x128xf32>
    %938 = arith.addf %933, %937 : vector<8x128xf32>
    %939 = vector.extract_strided_slice %4 {offsets = [1, 8, 0, 0], sizes = [1, 1, 1, 128], strides = [1, 1, 1, 1]} : vector<3x9x1x128xf32> to vector<1x1x1x128xf32>
    %940 = vector.shape_cast %939 : vector<1x1x1x128xf32> to vector<1x128xf32>
    %941 = vector.broadcast %940 : vector<1x128xf32> to vector<8x128xf32>
    %942 = arith.mulf %843, %941 : vector<8x128xf32>
    %943 = arith.addf %938, %942 : vector<8x128xf32>
    %944 = arith.addf %915, %929 : vector<8x128xf32>
    %945 = arith.addf %944, %943 : vector<8x128xf32>
    %946 = arith.addf %827, %945 : vector<8x128xf32>
    %947 = vector.extract_strided_slice %4 {offsets = [0, 0, 0, 0], sizes = [1, 1, 1, 128], strides = [1, 1, 1, 1]} : vector<3x9x1x128xf32> to vector<1x1x1x128xf32>
    %948 = vector.shape_cast %947 : vector<1x1x1x128xf32> to vector<1x128xf32>
    %949 = vector.broadcast %948 : vector<1x128xf32> to vector<8x128xf32>
    %950 = arith.mulf %838, %949 : vector<8x128xf32>
    %951 = vector.extract_strided_slice %4 {offsets = [0, 1, 0, 0], sizes = [1, 1, 1, 128], strides = [1, 1, 1, 1]} : vector<3x9x1x128xf32> to vector<1x1x1x128xf32>
    %952 = vector.shape_cast %951 : vector<1x1x1x128xf32> to vector<1x128xf32>
    %953 = vector.broadcast %952 : vector<1x128xf32> to vector<8x128xf32>
    %954 = arith.mulf %833, %953 : vector<8x128xf32>
    %955 = arith.addf %950, %954 : vector<8x128xf32>
    %956 = vector.extract_strided_slice %4 {offsets = [0, 2, 0, 0], sizes = [1, 1, 1, 128], strides = [1, 1, 1, 1]} : vector<3x9x1x128xf32> to vector<1x1x1x128xf32>
    %957 = vector.shape_cast %956 : vector<1x1x1x128xf32> to vector<1x128xf32>
    %958 = vector.broadcast %957 : vector<1x128xf32> to vector<8x128xf32>
    %959 = arith.mulf %839, %958 : vector<8x128xf32>
    %960 = arith.addf %955, %959 : vector<8x128xf32>
    %961 = vector.extract_strided_slice %4 {offsets = [0, 3, 0, 0], sizes = [1, 1, 1, 128], strides = [1, 1, 1, 1]} : vector<3x9x1x128xf32> to vector<1x1x1x128xf32>
    %962 = vector.shape_cast %961 : vector<1x1x1x128xf32> to vector<1x128xf32>
    %963 = vector.broadcast %962 : vector<1x128xf32> to vector<8x128xf32>
    %964 = arith.mulf %840, %963 : vector<8x128xf32>
    %965 = vector.extract_strided_slice %4 {offsets = [0, 4, 0, 0], sizes = [1, 1, 1, 128], strides = [1, 1, 1, 1]} : vector<3x9x1x128xf32> to vector<1x1x1x128xf32>
    %966 = vector.shape_cast %965 : vector<1x1x1x128xf32> to vector<1x128xf32>
    %967 = vector.broadcast %966 : vector<1x128xf32> to vector<8x128xf32>
    %968 = arith.mulf %829, %967 : vector<8x128xf32>
    %969 = arith.addf %964, %968 : vector<8x128xf32>
    %970 = vector.extract_strided_slice %4 {offsets = [0, 5, 0, 0], sizes = [1, 1, 1, 128], strides = [1, 1, 1, 1]} : vector<3x9x1x128xf32> to vector<1x1x1x128xf32>
    %971 = vector.shape_cast %970 : vector<1x1x1x128xf32> to vector<1x128xf32>
    %972 = vector.broadcast %971 : vector<1x128xf32> to vector<8x128xf32>
    %973 = arith.mulf %841, %972 : vector<8x128xf32>
    %974 = arith.addf %969, %973 : vector<8x128xf32>
    %975 = vector.extract_strided_slice %4 {offsets = [0, 6, 0, 0], sizes = [1, 1, 1, 128], strides = [1, 1, 1, 1]} : vector<3x9x1x128xf32> to vector<1x1x1x128xf32>
    %976 = vector.shape_cast %975 : vector<1x1x1x128xf32> to vector<1x128xf32>
    %977 = vector.broadcast %976 : vector<1x128xf32> to vector<8x128xf32>
    %978 = arith.mulf %842, %977 : vector<8x128xf32>
    %979 = vector.extract_strided_slice %4 {offsets = [0, 7, 0, 0], sizes = [1, 1, 1, 128], strides = [1, 1, 1, 1]} : vector<3x9x1x128xf32> to vector<1x1x1x128xf32>
    %980 = vector.shape_cast %979 : vector<1x1x1x128xf32> to vector<1x128xf32>
    %981 = vector.broadcast %980 : vector<1x128xf32> to vector<8x128xf32>
    %982 = arith.mulf %837, %981 : vector<8x128xf32>
    %983 = arith.addf %978, %982 : vector<8x128xf32>
    %984 = vector.extract_strided_slice %4 {offsets = [0, 8, 0, 0], sizes = [1, 1, 1, 128], strides = [1, 1, 1, 1]} : vector<3x9x1x128xf32> to vector<1x1x1x128xf32>
    %985 = vector.shape_cast %984 : vector<1x1x1x128xf32> to vector<1x128xf32>
    %986 = vector.broadcast %985 : vector<1x128xf32> to vector<8x128xf32>
    %987 = arith.mulf %843, %986 : vector<8x128xf32>
    %988 = arith.addf %983, %987 : vector<8x128xf32>
    %989 = arith.addf %960, %974 : vector<8x128xf32>
    %990 = arith.addf %989, %988 : vector<8x128xf32>
    %c0_118 = arith.constant 0 : index
    %c6 = arith.constant 6 : index
    %c0_119 = arith.constant 0 : index
    %c0_120 = arith.constant 0 : index
    %991 = vector.load %arg2[%c0_118, %c6, %c0_119, %c0_120] : memref<1x8x8x128xf32, #tpu.memory_space<vmem>>, vector<1x1x8x128xf32>
    %992 = vector.shape_cast %991 : vector<1x1x8x128xf32> to vector<8x128xf32>
    %c1_i32_121 = arith.constant 1 : i32
    %993 = tpu.dynamic_rotate %992 by %c1_i32_121 dim 0 : vector<8x128xf32>, i32 -> vector<8x128xf32>
    %994 = vector.shape_cast %7 : vector<8x1xi1> to vector<8x1xi1>
    %995 = vector.broadcast %994 : vector<8x1xi1> to vector<8x128xi1>
    %996 = arith.select %995, %993, %3 : vector<8x128xi1>, vector<8x128xf32>
    %c7_i32_122 = arith.constant 7 : i32
    %997 = tpu.dynamic_rotate %992 by %c7_i32_122 dim 0 : vector<8x128xf32>, i32 -> vector<8x128xf32>
    %998 = vector.shape_cast %9 : vector<8x1xi1> to vector<8x1xi1>
    %999 = vector.broadcast %998 : vector<8x1xi1> to vector<8x128xi1>
    %1000 = arith.select %999, %997, %3 : vector<8x128xi1>, vector<8x128xf32>
    %c16_i32_123 = arith.constant 16 : i32
    %1001 = tpu.dynamic_rotate %996 by %c16_i32_123 dim 1 : vector<8x128xf32>, i32 -> vector<8x128xf32>
    %c112_i32_124 = arith.constant 112 : i32
    %1002 = tpu.dynamic_rotate %996 by %c112_i32_124 dim 1 : vector<8x128xf32>, i32 -> vector<8x128xf32>
    %c16_i32_125 = arith.constant 16 : i32
    %1003 = tpu.dynamic_rotate %992 by %c16_i32_125 dim 1 : vector<8x128xf32>, i32 -> vector<8x128xf32>
    %c112_i32_126 = arith.constant 112 : i32
    %1004 = tpu.dynamic_rotate %992 by %c112_i32_126 dim 1 : vector<8x128xf32>, i32 -> vector<8x128xf32>
    %c16_i32_127 = arith.constant 16 : i32
    %1005 = tpu.dynamic_rotate %1000 by %c16_i32_127 dim 1 : vector<8x128xf32>, i32 -> vector<8x128xf32>
    %c112_i32_128 = arith.constant 112 : i32
    %1006 = tpu.dynamic_rotate %1000 by %c112_i32_128 dim 1 : vector<8x128xf32>, i32 -> vector<8x128xf32>
    %1007 = vector.extract_strided_slice %4 {offsets = [2, 0, 0, 0], sizes = [1, 1, 1, 128], strides = [1, 1, 1, 1]} : vector<3x9x1x128xf32> to vector<1x1x1x128xf32>
    %1008 = vector.shape_cast %1007 : vector<1x1x1x128xf32> to vector<1x128xf32>
    %1009 = vector.broadcast %1008 : vector<1x128xf32> to vector<8x128xf32>
    %1010 = arith.mulf %1001, %1009 : vector<8x128xf32>
    %1011 = vector.extract_strided_slice %4 {offsets = [2, 1, 0, 0], sizes = [1, 1, 1, 128], strides = [1, 1, 1, 1]} : vector<3x9x1x128xf32> to vector<1x1x1x128xf32>
    %1012 = vector.shape_cast %1011 : vector<1x1x1x128xf32> to vector<1x128xf32>
    %1013 = vector.broadcast %1012 : vector<1x128xf32> to vector<8x128xf32>
    %1014 = arith.mulf %996, %1013 : vector<8x128xf32>
    %1015 = arith.addf %1010, %1014 : vector<8x128xf32>
    %1016 = vector.extract_strided_slice %4 {offsets = [2, 2, 0, 0], sizes = [1, 1, 1, 128], strides = [1, 1, 1, 1]} : vector<3x9x1x128xf32> to vector<1x1x1x128xf32>
    %1017 = vector.shape_cast %1016 : vector<1x1x1x128xf32> to vector<1x128xf32>
    %1018 = vector.broadcast %1017 : vector<1x128xf32> to vector<8x128xf32>
    %1019 = arith.mulf %1002, %1018 : vector<8x128xf32>
    %1020 = arith.addf %1015, %1019 : vector<8x128xf32>
    %1021 = vector.extract_strided_slice %4 {offsets = [2, 3, 0, 0], sizes = [1, 1, 1, 128], strides = [1, 1, 1, 1]} : vector<3x9x1x128xf32> to vector<1x1x1x128xf32>
    %1022 = vector.shape_cast %1021 : vector<1x1x1x128xf32> to vector<1x128xf32>
    %1023 = vector.broadcast %1022 : vector<1x128xf32> to vector<8x128xf32>
    %1024 = arith.mulf %1003, %1023 : vector<8x128xf32>
    %1025 = vector.extract_strided_slice %4 {offsets = [2, 4, 0, 0], sizes = [1, 1, 1, 128], strides = [1, 1, 1, 1]} : vector<3x9x1x128xf32> to vector<1x1x1x128xf32>
    %1026 = vector.shape_cast %1025 : vector<1x1x1x128xf32> to vector<1x128xf32>
    %1027 = vector.broadcast %1026 : vector<1x128xf32> to vector<8x128xf32>
    %1028 = arith.mulf %992, %1027 : vector<8x128xf32>
    %1029 = arith.addf %1024, %1028 : vector<8x128xf32>
    %1030 = vector.extract_strided_slice %4 {offsets = [2, 5, 0, 0], sizes = [1, 1, 1, 128], strides = [1, 1, 1, 1]} : vector<3x9x1x128xf32> to vector<1x1x1x128xf32>
    %1031 = vector.shape_cast %1030 : vector<1x1x1x128xf32> to vector<1x128xf32>
    %1032 = vector.broadcast %1031 : vector<1x128xf32> to vector<8x128xf32>
    %1033 = arith.mulf %1004, %1032 : vector<8x128xf32>
    %1034 = arith.addf %1029, %1033 : vector<8x128xf32>
    %1035 = vector.extract_strided_slice %4 {offsets = [2, 6, 0, 0], sizes = [1, 1, 1, 128], strides = [1, 1, 1, 1]} : vector<3x9x1x128xf32> to vector<1x1x1x128xf32>
    %1036 = vector.shape_cast %1035 : vector<1x1x1x128xf32> to vector<1x128xf32>
    %1037 = vector.broadcast %1036 : vector<1x128xf32> to vector<8x128xf32>
    %1038 = arith.mulf %1005, %1037 : vector<8x128xf32>
    %1039 = vector.extract_strided_slice %4 {offsets = [2, 7, 0, 0], sizes = [1, 1, 1, 128], strides = [1, 1, 1, 1]} : vector<3x9x1x128xf32> to vector<1x1x1x128xf32>
    %1040 = vector.shape_cast %1039 : vector<1x1x1x128xf32> to vector<1x128xf32>
    %1041 = vector.broadcast %1040 : vector<1x128xf32> to vector<8x128xf32>
    %1042 = arith.mulf %1000, %1041 : vector<8x128xf32>
    %1043 = arith.addf %1038, %1042 : vector<8x128xf32>
    %1044 = vector.extract_strided_slice %4 {offsets = [2, 8, 0, 0], sizes = [1, 1, 1, 128], strides = [1, 1, 1, 1]} : vector<3x9x1x128xf32> to vector<1x1x1x128xf32>
    %1045 = vector.shape_cast %1044 : vector<1x1x1x128xf32> to vector<1x128xf32>
    %1046 = vector.broadcast %1045 : vector<1x128xf32> to vector<8x128xf32>
    %1047 = arith.mulf %1006, %1046 : vector<8x128xf32>
    %1048 = arith.addf %1043, %1047 : vector<8x128xf32>
    %1049 = arith.addf %1020, %1034 : vector<8x128xf32>
    %1050 = arith.addf %1049, %1048 : vector<8x128xf32>
    %1051 = arith.addf %946, %1050 : vector<8x128xf32>
    %1052 = vector.broadcast %2 : vector<1x128xf32> to vector<8x128xf32>
    %1053 = arith.addf %1051, %1052 : vector<8x128xf32>
    %cst_129 = arith.constant 5.000000e-01 : f32
    %1054 = vector.broadcast %cst_129 : f32 to vector<8x128xf32>
    %1055 = arith.mulf %1054, %1053 : vector<8x128xf32>
    %cst_130 = arith.constant 0.707106769 : f32
    %1056 = vector.broadcast %cst_130 : f32 to vector<8x128xf32>
    %1057 = arith.mulf %1053, %1056 : vector<8x128xf32>
    %1058 = math.erf %1057 : vector<8x128xf32>
    %cst_131 = arith.constant 1.000000e+00 : f32
    %1059 = vector.broadcast %cst_131 : f32 to vector<8x128xf32>
    %1060 = arith.addf %1059, %1058 : vector<8x128xf32>
    %1061 = arith.mulf %1055, %1060 : vector<8x128xf32>
    %c0_132 = arith.constant 0 : index
    %c5_133 = arith.constant 5 : index
    %c0_134 = arith.constant 0 : index
    %c0_135 = arith.constant 0 : index
    %1062 = vector.load %arg7[%c0_132, %c5_133, %c0_134, %c0_135] : memref<1x8x8x128xf32, #tpu.memory_space<vmem>>, vector<1x1x8x128xf32>
    %1063 = vector.shape_cast %1062 : vector<1x1x8x128xf32> to vector<8x128xf32>
    %1064 = vector.shape_cast %1061 : vector<8x128xf32> to vector<1x1x8x128xf32>
    tpu.vector_store %arg7[%c0_132, %c5_133, %c0_134, %c0_135], %1064 {strides = array<i32>} : memref<1x8x8x128xf32, #tpu.memory_space<vmem>>, vector<1x1x8x128xf32>,
    %1065 = vector.extract_strided_slice %4 {offsets = [1, 0, 0, 0], sizes = [1, 1, 1, 128], strides = [1, 1, 1, 1]} : vector<3x9x1x128xf32> to vector<1x1x1x128xf32>
    %1066 = vector.shape_cast %1065 : vector<1x1x1x128xf32> to vector<1x128xf32>
    %1067 = vector.broadcast %1066 : vector<1x128xf32> to vector<8x128xf32>
    %1068 = arith.mulf %1001, %1067 : vector<8x128xf32>
    %1069 = vector.extract_strided_slice %4 {offsets = [1, 1, 0, 0], sizes = [1, 1, 1, 128], strides = [1, 1, 1, 1]} : vector<3x9x1x128xf32> to vector<1x1x1x128xf32>
    %1070 = vector.shape_cast %1069 : vector<1x1x1x128xf32> to vector<1x128xf32>
    %1071 = vector.broadcast %1070 : vector<1x128xf32> to vector<8x128xf32>
    %1072 = arith.mulf %996, %1071 : vector<8x128xf32>
    %1073 = arith.addf %1068, %1072 : vector<8x128xf32>
    %1074 = vector.extract_strided_slice %4 {offsets = [1, 2, 0, 0], sizes = [1, 1, 1, 128], strides = [1, 1, 1, 1]} : vector<3x9x1x128xf32> to vector<1x1x1x128xf32>
    %1075 = vector.shape_cast %1074 : vector<1x1x1x128xf32> to vector<1x128xf32>
    %1076 = vector.broadcast %1075 : vector<1x128xf32> to vector<8x128xf32>
    %1077 = arith.mulf %1002, %1076 : vector<8x128xf32>
    %1078 = arith.addf %1073, %1077 : vector<8x128xf32>
    %1079 = vector.extract_strided_slice %4 {offsets = [1, 3, 0, 0], sizes = [1, 1, 1, 128], strides = [1, 1, 1, 1]} : vector<3x9x1x128xf32> to vector<1x1x1x128xf32>
    %1080 = vector.shape_cast %1079 : vector<1x1x1x128xf32> to vector<1x128xf32>
    %1081 = vector.broadcast %1080 : vector<1x128xf32> to vector<8x128xf32>
    %1082 = arith.mulf %1003, %1081 : vector<8x128xf32>
    %1083 = vector.extract_strided_slice %4 {offsets = [1, 4, 0, 0], sizes = [1, 1, 1, 128], strides = [1, 1, 1, 1]} : vector<3x9x1x128xf32> to vector<1x1x1x128xf32>
    %1084 = vector.shape_cast %1083 : vector<1x1x1x128xf32> to vector<1x128xf32>
    %1085 = vector.broadcast %1084 : vector<1x128xf32> to vector<8x128xf32>
    %1086 = arith.mulf %992, %1085 : vector<8x128xf32>
    %1087 = arith.addf %1082, %1086 : vector<8x128xf32>
    %1088 = vector.extract_strided_slice %4 {offsets = [1, 5, 0, 0], sizes = [1, 1, 1, 128], strides = [1, 1, 1, 1]} : vector<3x9x1x128xf32> to vector<1x1x1x128xf32>
    %1089 = vector.shape_cast %1088 : vector<1x1x1x128xf32> to vector<1x128xf32>
    %1090 = vector.broadcast %1089 : vector<1x128xf32> to vector<8x128xf32>
    %1091 = arith.mulf %1004, %1090 : vector<8x128xf32>
    %1092 = arith.addf %1087, %1091 : vector<8x128xf32>
    %1093 = vector.extract_strided_slice %4 {offsets = [1, 6, 0, 0], sizes = [1, 1, 1, 128], strides = [1, 1, 1, 1]} : vector<3x9x1x128xf32> to vector<1x1x1x128xf32>
    %1094 = vector.shape_cast %1093 : vector<1x1x1x128xf32> to vector<1x128xf32>
    %1095 = vector.broadcast %1094 : vector<1x128xf32> to vector<8x128xf32>
    %1096 = arith.mulf %1005, %1095 : vector<8x128xf32>
    %1097 = vector.extract_strided_slice %4 {offsets = [1, 7, 0, 0], sizes = [1, 1, 1, 128], strides = [1, 1, 1, 1]} : vector<3x9x1x128xf32> to vector<1x1x1x128xf32>
    %1098 = vector.shape_cast %1097 : vector<1x1x1x128xf32> to vector<1x128xf32>
    %1099 = vector.broadcast %1098 : vector<1x128xf32> to vector<8x128xf32>
    %1100 = arith.mulf %1000, %1099 : vector<8x128xf32>
    %1101 = arith.addf %1096, %1100 : vector<8x128xf32>
    %1102 = vector.extract_strided_slice %4 {offsets = [1, 8, 0, 0], sizes = [1, 1, 1, 128], strides = [1, 1, 1, 1]} : vector<3x9x1x128xf32> to vector<1x1x1x128xf32>
    %1103 = vector.shape_cast %1102 : vector<1x1x1x128xf32> to vector<1x128xf32>
    %1104 = vector.broadcast %1103 : vector<1x128xf32> to vector<8x128xf32>
    %1105 = arith.mulf %1006, %1104 : vector<8x128xf32>
    %1106 = arith.addf %1101, %1105 : vector<8x128xf32>
    %1107 = arith.addf %1078, %1092 : vector<8x128xf32>
    %1108 = arith.addf %1107, %1106 : vector<8x128xf32>
    %1109 = arith.addf %990, %1108 : vector<8x128xf32>
    %1110 = vector.extract_strided_slice %4 {offsets = [0, 0, 0, 0], sizes = [1, 1, 1, 128], strides = [1, 1, 1, 1]} : vector<3x9x1x128xf32> to vector<1x1x1x128xf32>
    %1111 = vector.shape_cast %1110 : vector<1x1x1x128xf32> to vector<1x128xf32>
    %1112 = vector.broadcast %1111 : vector<1x128xf32> to vector<8x128xf32>
    %1113 = arith.mulf %1001, %1112 : vector<8x128xf32>
    %1114 = vector.extract_strided_slice %4 {offsets = [0, 1, 0, 0], sizes = [1, 1, 1, 128], strides = [1, 1, 1, 1]} : vector<3x9x1x128xf32> to vector<1x1x1x128xf32>
    %1115 = vector.shape_cast %1114 : vector<1x1x1x128xf32> to vector<1x128xf32>
    %1116 = vector.broadcast %1115 : vector<1x128xf32> to vector<8x128xf32>
    %1117 = arith.mulf %996, %1116 : vector<8x128xf32>
    %1118 = arith.addf %1113, %1117 : vector<8x128xf32>
    %1119 = vector.extract_strided_slice %4 {offsets = [0, 2, 0, 0], sizes = [1, 1, 1, 128], strides = [1, 1, 1, 1]} : vector<3x9x1x128xf32> to vector<1x1x1x128xf32>
    %1120 = vector.shape_cast %1119 : vector<1x1x1x128xf32> to vector<1x128xf32>
    %1121 = vector.broadcast %1120 : vector<1x128xf32> to vector<8x128xf32>
    %1122 = arith.mulf %1002, %1121 : vector<8x128xf32>
    %1123 = arith.addf %1118, %1122 : vector<8x128xf32>
    %1124 = vector.extract_strided_slice %4 {offsets = [0, 3, 0, 0], sizes = [1, 1, 1, 128], strides = [1, 1, 1, 1]} : vector<3x9x1x128xf32> to vector<1x1x1x128xf32>
    %1125 = vector.shape_cast %1124 : vector<1x1x1x128xf32> to vector<1x128xf32>
    %1126 = vector.broadcast %1125 : vector<1x128xf32> to vector<8x128xf32>
    %1127 = arith.mulf %1003, %1126 : vector<8x128xf32>
    %1128 = vector.extract_strided_slice %4 {offsets = [0, 4, 0, 0], sizes = [1, 1, 1, 128], strides = [1, 1, 1, 1]} : vector<3x9x1x128xf32> to vector<1x1x1x128xf32>
    %1129 = vector.shape_cast %1128 : vector<1x1x1x128xf32> to vector<1x128xf32>
    %1130 = vector.broadcast %1129 : vector<1x128xf32> to vector<8x128xf32>
    %1131 = arith.mulf %992, %1130 : vector<8x128xf32>
    %1132 = arith.addf %1127, %1131 : vector<8x128xf32>
    %1133 = vector.extract_strided_slice %4 {offsets = [0, 5, 0, 0], sizes = [1, 1, 1, 128], strides = [1, 1, 1, 1]} : vector<3x9x1x128xf32> to vector<1x1x1x128xf32>
    %1134 = vector.shape_cast %1133 : vector<1x1x1x128xf32> to vector<1x128xf32>
    %1135 = vector.broadcast %1134 : vector<1x128xf32> to vector<8x128xf32>
    %1136 = arith.mulf %1004, %1135 : vector<8x128xf32>
    %1137 = arith.addf %1132, %1136 : vector<8x128xf32>
    %1138 = vector.extract_strided_slice %4 {offsets = [0, 6, 0, 0], sizes = [1, 1, 1, 128], strides = [1, 1, 1, 1]} : vector<3x9x1x128xf32> to vector<1x1x1x128xf32>
    %1139 = vector.shape_cast %1138 : vector<1x1x1x128xf32> to vector<1x128xf32>
    %1140 = vector.broadcast %1139 : vector<1x128xf32> to vector<8x128xf32>
    %1141 = arith.mulf %1005, %1140 : vector<8x128xf32>
    %1142 = vector.extract_strided_slice %4 {offsets = [0, 7, 0, 0], sizes = [1, 1, 1, 128], strides = [1, 1, 1, 1]} : vector<3x9x1x128xf32> to vector<1x1x1x128xf32>
    %1143 = vector.shape_cast %1142 : vector<1x1x1x128xf32> to vector<1x128xf32>
    %1144 = vector.broadcast %1143 : vector<1x128xf32> to vector<8x128xf32>
    %1145 = arith.mulf %1000, %1144 : vector<8x128xf32>
    %1146 = arith.addf %1141, %1145 : vector<8x128xf32>
    %1147 = vector.extract_strided_slice %4 {offsets = [0, 8, 0, 0], sizes = [1, 1, 1, 128], strides = [1, 1, 1, 1]} : vector<3x9x1x128xf32> to vector<1x1x1x128xf32>
    %1148 = vector.shape_cast %1147 : vector<1x1x1x128xf32> to vector<1x128xf32>
    %1149 = vector.broadcast %1148 : vector<1x128xf32> to vector<8x128xf32>
    %1150 = arith.mulf %1006, %1149 : vector<8x128xf32>
    %1151 = arith.addf %1146, %1150 : vector<8x128xf32>
    %1152 = arith.addf %1123, %1137 : vector<8x128xf32>
    %1153 = arith.addf %1152, %1151 : vector<8x128xf32>
    %c0_136 = arith.constant 0 : index
    %c7 = arith.constant 7 : index
    %c0_137 = arith.constant 0 : index
    %c0_138 = arith.constant 0 : index
    %1154 = vector.load %arg2[%c0_136, %c7, %c0_137, %c0_138] : memref<1x8x8x128xf32, #tpu.memory_space<vmem>>, vector<1x1x8x128xf32>
    %1155 = vector.shape_cast %1154 : vector<1x1x8x128xf32> to vector<8x128xf32>
    %c1_i32_139 = arith.constant 1 : i32
    %1156 = tpu.dynamic_rotate %1155 by %c1_i32_139 dim 0 : vector<8x128xf32>, i32 -> vector<8x128xf32>
    %1157 = vector.shape_cast %7 : vector<8x1xi1> to vector<8x1xi1>
    %1158 = vector.broadcast %1157 : vector<8x1xi1> to vector<8x128xi1>
    %1159 = arith.select %1158, %1156, %3 : vector<8x128xi1>, vector<8x128xf32>
    %c7_i32_140 = arith.constant 7 : i32
    %1160 = tpu.dynamic_rotate %1155 by %c7_i32_140 dim 0 : vector<8x128xf32>, i32 -> vector<8x128xf32>
    %1161 = vector.shape_cast %9 : vector<8x1xi1> to vector<8x1xi1>
    %1162 = vector.broadcast %1161 : vector<8x1xi1> to vector<8x128xi1>
    %1163 = arith.select %1162, %1160, %3 : vector<8x128xi1>, vector<8x128xf32>
    %c16_i32_141 = arith.constant 16 : i32
    %1164 = tpu.dynamic_rotate %1159 by %c16_i32_141 dim 1 : vector<8x128xf32>, i32 -> vector<8x128xf32>
    %c112_i32_142 = arith.constant 112 : i32
    %1165 = tpu.dynamic_rotate %1159 by %c112_i32_142 dim 1 : vector<8x128xf32>, i32 -> vector<8x128xf32>
    %c16_i32_143 = arith.constant 16 : i32
    %1166 = tpu.dynamic_rotate %1155 by %c16_i32_143 dim 1 : vector<8x128xf32>, i32 -> vector<8x128xf32>
    %c112_i32_144 = arith.constant 112 : i32
    %1167 = tpu.dynamic_rotate %1155 by %c112_i32_144 dim 1 : vector<8x128xf32>, i32 -> vector<8x128xf32>
    %c16_i32_145 = arith.constant 16 : i32
    %1168 = tpu.dynamic_rotate %1163 by %c16_i32_145 dim 1 : vector<8x128xf32>, i32 -> vector<8x128xf32>
    %c112_i32_146 = arith.constant 112 : i32
    %1169 = tpu.dynamic_rotate %1163 by %c112_i32_146 dim 1 : vector<8x128xf32>, i32 -> vector<8x128xf32>
    %1170 = vector.extract_strided_slice %4 {offsets = [2, 0, 0, 0], sizes = [1, 1, 1, 128], strides = [1, 1, 1, 1]} : vector<3x9x1x128xf32> to vector<1x1x1x128xf32>
    %1171 = vector.shape_cast %1170 : vector<1x1x1x128xf32> to vector<1x128xf32>
    %1172 = vector.broadcast %1171 : vector<1x128xf32> to vector<8x128xf32>
    %1173 = arith.mulf %1164, %1172 : vector<8x128xf32>
    %1174 = vector.extract_strided_slice %4 {offsets = [2, 1, 0, 0], sizes = [1, 1, 1, 128], strides = [1, 1, 1, 1]} : vector<3x9x1x128xf32> to vector<1x1x1x128xf32>
    %1175 = vector.shape_cast %1174 : vector<1x1x1x128xf32> to vector<1x128xf32>
    %1176 = vector.broadcast %1175 : vector<1x128xf32> to vector<8x128xf32>
    %1177 = arith.mulf %1159, %1176 : vector<8x128xf32>
    %1178 = arith.addf %1173, %1177 : vector<8x128xf32>
    %1179 = vector.extract_strided_slice %4 {offsets = [2, 2, 0, 0], sizes = [1, 1, 1, 128], strides = [1, 1, 1, 1]} : vector<3x9x1x128xf32> to vector<1x1x1x128xf32>
    %1180 = vector.shape_cast %1179 : vector<1x1x1x128xf32> to vector<1x128xf32>
    %1181 = vector.broadcast %1180 : vector<1x128xf32> to vector<8x128xf32>
    %1182 = arith.mulf %1165, %1181 : vector<8x128xf32>
    %1183 = arith.addf %1178, %1182 : vector<8x128xf32>
    %1184 = vector.extract_strided_slice %4 {offsets = [2, 3, 0, 0], sizes = [1, 1, 1, 128], strides = [1, 1, 1, 1]} : vector<3x9x1x128xf32> to vector<1x1x1x128xf32>
    %1185 = vector.shape_cast %1184 : vector<1x1x1x128xf32> to vector<1x128xf32>
    %1186 = vector.broadcast %1185 : vector<1x128xf32> to vector<8x128xf32>
    %1187 = arith.mulf %1166, %1186 : vector<8x128xf32>
    %1188 = vector.extract_strided_slice %4 {offsets = [2, 4, 0, 0], sizes = [1, 1, 1, 128], strides = [1, 1, 1, 1]} : vector<3x9x1x128xf32> to vector<1x1x1x128xf32>
    %1189 = vector.shape_cast %1188 : vector<1x1x1x128xf32> to vector<1x128xf32>
    %1190 = vector.broadcast %1189 : vector<1x128xf32> to vector<8x128xf32>
    %1191 = arith.mulf %1155, %1190 : vector<8x128xf32>
    %1192 = arith.addf %1187, %1191 : vector<8x128xf32>
    %1193 = vector.extract_strided_slice %4 {offsets = [2, 5, 0, 0], sizes = [1, 1, 1, 128], strides = [1, 1, 1, 1]} : vector<3x9x1x128xf32> to vector<1x1x1x128xf32>
    %1194 = vector.shape_cast %1193 : vector<1x1x1x128xf32> to vector<1x128xf32>
    %1195 = vector.broadcast %1194 : vector<1x128xf32> to vector<8x128xf32>
    %1196 = arith.mulf %1167, %1195 : vector<8x128xf32>
    %1197 = arith.addf %1192, %1196 : vector<8x128xf32>
    %1198 = vector.extract_strided_slice %4 {offsets = [2, 6, 0, 0], sizes = [1, 1, 1, 128], strides = [1, 1, 1, 1]} : vector<3x9x1x128xf32> to vector<1x1x1x128xf32>
    %1199 = vector.shape_cast %1198 : vector<1x1x1x128xf32> to vector<1x128xf32>
    %1200 = vector.broadcast %1199 : vector<1x128xf32> to vector<8x128xf32>
    %1201 = arith.mulf %1168, %1200 : vector<8x128xf32>
    %1202 = vector.extract_strided_slice %4 {offsets = [2, 7, 0, 0], sizes = [1, 1, 1, 128], strides = [1, 1, 1, 1]} : vector<3x9x1x128xf32> to vector<1x1x1x128xf32>
    %1203 = vector.shape_cast %1202 : vector<1x1x1x128xf32> to vector<1x128xf32>
    %1204 = vector.broadcast %1203 : vector<1x128xf32> to vector<8x128xf32>
    %1205 = arith.mulf %1163, %1204 : vector<8x128xf32>
    %1206 = arith.addf %1201, %1205 : vector<8x128xf32>
    %1207 = vector.extract_strided_slice %4 {offsets = [2, 8, 0, 0], sizes = [1, 1, 1, 128], strides = [1, 1, 1, 1]} : vector<3x9x1x128xf32> to vector<1x1x1x128xf32>
    %1208 = vector.shape_cast %1207 : vector<1x1x1x128xf32> to vector<1x128xf32>
    %1209 = vector.broadcast %1208 : vector<1x128xf32> to vector<8x128xf32>
    %1210 = arith.mulf %1169, %1209 : vector<8x128xf32>
    %1211 = arith.addf %1206, %1210 : vector<8x128xf32>
    %1212 = arith.addf %1183, %1197 : vector<8x128xf32>
    %1213 = arith.addf %1212, %1211 : vector<8x128xf32>
    %1214 = arith.addf %1109, %1213 : vector<8x128xf32>
    %1215 = vector.broadcast %2 : vector<1x128xf32> to vector<8x128xf32>
    %1216 = arith.addf %1214, %1215 : vector<8x128xf32>
    %cst_147 = arith.constant 5.000000e-01 : f32
    %1217 = vector.broadcast %cst_147 : f32 to vector<8x128xf32>
    %1218 = arith.mulf %1217, %1216 : vector<8x128xf32>
    %cst_148 = arith.constant 0.707106769 : f32
    %1219 = vector.broadcast %cst_148 : f32 to vector<8x128xf32>
    %1220 = arith.mulf %1216, %1219 : vector<8x128xf32>
    %1221 = math.erf %1220 : vector<8x128xf32>
    %cst_149 = arith.constant 1.000000e+00 : f32
    %1222 = vector.broadcast %cst_149 : f32 to vector<8x128xf32>
    %1223 = arith.addf %1222, %1221 : vector<8x128xf32>
    %1224 = arith.mulf %1218, %1223 : vector<8x128xf32>
    %c0_150 = arith.constant 0 : index
    %c6_151 = arith.constant 6 : index
    %c0_152 = arith.constant 0 : index
    %c0_153 = arith.constant 0 : index
    %1225 = vector.load %arg7[%c0_150, %c6_151, %c0_152, %c0_153] : memref<1x8x8x128xf32, #tpu.memory_space<vmem>>, vector<1x1x8x128xf32>
    %1226 = vector.shape_cast %1225 : vector<1x1x8x128xf32> to vector<8x128xf32>
    %1227 = vector.shape_cast %1224 : vector<8x128xf32> to vector<1x1x8x128xf32>
    tpu.vector_store %arg7[%c0_150, %c6_151, %c0_152, %c0_153], %1227 {strides = array<i32>} : memref<1x8x8x128xf32, #tpu.memory_space<vmem>>, vector<1x1x8x128xf32>,
    %1228 = vector.extract_strided_slice %4 {offsets = [1, 0, 0, 0], sizes = [1, 1, 1, 128], strides = [1, 1, 1, 1]} : vector<3x9x1x128xf32> to vector<1x1x1x128xf32>
    %1229 = vector.shape_cast %1228 : vector<1x1x1x128xf32> to vector<1x128xf32>
    %1230 = vector.broadcast %1229 : vector<1x128xf32> to vector<8x128xf32>
    %1231 = arith.mulf %1164, %1230 : vector<8x128xf32>
    %1232 = vector.extract_strided_slice %4 {offsets = [1, 1, 0, 0], sizes = [1, 1, 1, 128], strides = [1, 1, 1, 1]} : vector<3x9x1x128xf32> to vector<1x1x1x128xf32>
    %1233 = vector.shape_cast %1232 : vector<1x1x1x128xf32> to vector<1x128xf32>
    %1234 = vector.broadcast %1233 : vector<1x128xf32> to vector<8x128xf32>
    %1235 = arith.mulf %1159, %1234 : vector<8x128xf32>
    %1236 = arith.addf %1231, %1235 : vector<8x128xf32>
    %1237 = vector.extract_strided_slice %4 {offsets = [1, 2, 0, 0], sizes = [1, 1, 1, 128], strides = [1, 1, 1, 1]} : vector<3x9x1x128xf32> to vector<1x1x1x128xf32>
    %1238 = vector.shape_cast %1237 : vector<1x1x1x128xf32> to vector<1x128xf32>
    %1239 = vector.broadcast %1238 : vector<1x128xf32> to vector<8x128xf32>
    %1240 = arith.mulf %1165, %1239 : vector<8x128xf32>
    %1241 = arith.addf %1236, %1240 : vector<8x128xf32>
    %1242 = vector.extract_strided_slice %4 {offsets = [1, 3, 0, 0], sizes = [1, 1, 1, 128], strides = [1, 1, 1, 1]} : vector<3x9x1x128xf32> to vector<1x1x1x128xf32>
    %1243 = vector.shape_cast %1242 : vector<1x1x1x128xf32> to vector<1x128xf32>
    %1244 = vector.broadcast %1243 : vector<1x128xf32> to vector<8x128xf32>
    %1245 = arith.mulf %1166, %1244 : vector<8x128xf32>
    %1246 = vector.extract_strided_slice %4 {offsets = [1, 4, 0, 0], sizes = [1, 1, 1, 128], strides = [1, 1, 1, 1]} : vector<3x9x1x128xf32> to vector<1x1x1x128xf32>
    %1247 = vector.shape_cast %1246 : vector<1x1x1x128xf32> to vector<1x128xf32>
    %1248 = vector.broadcast %1247 : vector<1x128xf32> to vector<8x128xf32>
    %1249 = arith.mulf %1155, %1248 : vector<8x128xf32>
    %1250 = arith.addf %1245, %1249 : vector<8x128xf32>
    %1251 = vector.extract_strided_slice %4 {offsets = [1, 5, 0, 0], sizes = [1, 1, 1, 128], strides = [1, 1, 1, 1]} : vector<3x9x1x128xf32> to vector<1x1x1x128xf32>
    %1252 = vector.shape_cast %1251 : vector<1x1x1x128xf32> to vector<1x128xf32>
    %1253 = vector.broadcast %1252 : vector<1x128xf32> to vector<8x128xf32>
    %1254 = arith.mulf %1167, %1253 : vector<8x128xf32>
    %1255 = arith.addf %1250, %1254 : vector<8x128xf32>
    %1256 = vector.extract_strided_slice %4 {offsets = [1, 6, 0, 0], sizes = [1, 1, 1, 128], strides = [1, 1, 1, 1]} : vector<3x9x1x128xf32> to vector<1x1x1x128xf32>
    %1257 = vector.shape_cast %1256 : vector<1x1x1x128xf32> to vector<1x128xf32>
    %1258 = vector.broadcast %1257 : vector<1x128xf32> to vector<8x128xf32>
    %1259 = arith.mulf %1168, %1258 : vector<8x128xf32>
    %1260 = vector.extract_strided_slice %4 {offsets = [1, 7, 0, 0], sizes = [1, 1, 1, 128], strides = [1, 1, 1, 1]} : vector<3x9x1x128xf32> to vector<1x1x1x128xf32>
    %1261 = vector.shape_cast %1260 : vector<1x1x1x128xf32> to vector<1x128xf32>
    %1262 = vector.broadcast %1261 : vector<1x128xf32> to vector<8x128xf32>
    %1263 = arith.mulf %1163, %1262 : vector<8x128xf32>
    %1264 = arith.addf %1259, %1263 : vector<8x128xf32>
    %1265 = vector.extract_strided_slice %4 {offsets = [1, 8, 0, 0], sizes = [1, 1, 1, 128], strides = [1, 1, 1, 1]} : vector<3x9x1x128xf32> to vector<1x1x1x128xf32>
    %1266 = vector.shape_cast %1265 : vector<1x1x1x128xf32> to vector<1x128xf32>
    %1267 = vector.broadcast %1266 : vector<1x128xf32> to vector<8x128xf32>
    %1268 = arith.mulf %1169, %1267 : vector<8x128xf32>
    %1269 = arith.addf %1264, %1268 : vector<8x128xf32>
    %1270 = arith.addf %1241, %1255 : vector<8x128xf32>
    %1271 = arith.addf %1270, %1269 : vector<8x128xf32>
    %1272 = arith.addf %1153, %1271 : vector<8x128xf32>
    %c0_154 = arith.constant 0 : index
    %c0_155 = arith.constant 0 : index
    %c0_156 = arith.constant 0 : index
    %c0_157 = arith.constant 0 : index
    %1273 = vector.load %arg4[%c0_154, %c0_155, %c0_156, %c0_157] : memref<1x1x8x128xf32, #tpu.memory_space<vmem>>, vector<1x1x8x128xf32>
    %1274 = vector.shape_cast %1273 : vector<1x1x8x128xf32> to vector<8x128xf32>
    %1275 = arith.select %1, %1274, %3 : vector<8x128xf32>
    %c1_i32_158 = arith.constant 1 : i32
    %1276 = tpu.dynamic_rotate %1275 by %c1_i32_158 dim 0 : vector<8x128xf32>, i32 -> vector<8x128xf32>
    %1277 = vector.shape_cast %7 : vector<8x1xi1> to vector<8x1xi1>
    %1278 = vector.broadcast %1277 : vector<8x1xi1> to vector<8x128xi1>
    %1279 = arith.select %1278, %1276, %3 : vector<8x128xi1>, vector<8x128xf32>
    %c7_i32_159 = arith.constant 7 : i32
    %1280 = tpu.dynamic_rotate %1275 by %c7_i32_159 dim 0 : vector<8x128xf32>, i32 -> vector<8x128xf32>
    %1281 = vector.shape_cast %9 : vector<8x1xi1> to vector<8x1xi1>
    %1282 = vector.broadcast %1281 : vector<8x1xi1> to vector<8x128xi1>
    %1283 = arith.select %1282, %1280, %3 : vector<8x128xi1>, vector<8x128xf32>
    %c16_i32_160 = arith.constant 16 : i32
    %1284 = tpu.dynamic_rotate %1279 by %c16_i32_160 dim 1 : vector<8x128xf32>, i32 -> vector<8x128xf32>
    %c112_i32_161 = arith.constant 112 : i32
    %1285 = tpu.dynamic_rotate %1279 by %c112_i32_161 dim 1 : vector<8x128xf32>, i32 -> vector<8x128xf32>
    %c16_i32_162 = arith.constant 16 : i32
    %1286 = tpu.dynamic_rotate %1275 by %c16_i32_162 dim 1 : vector<8x128xf32>, i32 -> vector<8x128xf32>
    %c112_i32_163 = arith.constant 112 : i32
    %1287 = tpu.dynamic_rotate %1275 by %c112_i32_163 dim 1 : vector<8x128xf32>, i32 -> vector<8x128xf32>
    %c16_i32_164 = arith.constant 16 : i32
    %1288 = tpu.dynamic_rotate %1283 by %c16_i32_164 dim 1 : vector<8x128xf32>, i32 -> vector<8x128xf32>
    %c112_i32_165 = arith.constant 112 : i32
    %1289 = tpu.dynamic_rotate %1283 by %c112_i32_165 dim 1 : vector<8x128xf32>, i32 -> vector<8x128xf32>
    %1290 = vector.extract_strided_slice %4 {offsets = [2, 0, 0, 0], sizes = [1, 1, 1, 128], strides = [1, 1, 1, 1]} : vector<3x9x1x128xf32> to vector<1x1x1x128xf32>
    %1291 = vector.shape_cast %1290 : vector<1x1x1x128xf32> to vector<1x128xf32>
    %1292 = vector.broadcast %1291 : vector<1x128xf32> to vector<8x128xf32>
    %1293 = arith.mulf %1284, %1292 : vector<8x128xf32>
    %1294 = vector.extract_strided_slice %4 {offsets = [2, 1, 0, 0], sizes = [1, 1, 1, 128], strides = [1, 1, 1, 1]} : vector<3x9x1x128xf32> to vector<1x1x1x128xf32>
    %1295 = vector.shape_cast %1294 : vector<1x1x1x128xf32> to vector<1x128xf32>
    %1296 = vector.broadcast %1295 : vector<1x128xf32> to vector<8x128xf32>
    %1297 = arith.mulf %1279, %1296 : vector<8x128xf32>
    %1298 = arith.addf %1293, %1297 : vector<8x128xf32>
    %1299 = vector.extract_strided_slice %4 {offsets = [2, 2, 0, 0], sizes = [1, 1, 1, 128], strides = [1, 1, 1, 1]} : vector<3x9x1x128xf32> to vector<1x1x1x128xf32>
    %1300 = vector.shape_cast %1299 : vector<1x1x1x128xf32> to vector<1x128xf32>
    %1301 = vector.broadcast %1300 : vector<1x128xf32> to vector<8x128xf32>
    %1302 = arith.mulf %1285, %1301 : vector<8x128xf32>
    %1303 = arith.addf %1298, %1302 : vector<8x128xf32>
    %1304 = vector.extract_strided_slice %4 {offsets = [2, 3, 0, 0], sizes = [1, 1, 1, 128], strides = [1, 1, 1, 1]} : vector<3x9x1x128xf32> to vector<1x1x1x128xf32>
    %1305 = vector.shape_cast %1304 : vector<1x1x1x128xf32> to vector<1x128xf32>
    %1306 = vector.broadcast %1305 : vector<1x128xf32> to vector<8x128xf32>
    %1307 = arith.mulf %1286, %1306 : vector<8x128xf32>
    %1308 = vector.extract_strided_slice %4 {offsets = [2, 4, 0, 0], sizes = [1, 1, 1, 128], strides = [1, 1, 1, 1]} : vector<3x9x1x128xf32> to vector<1x1x1x128xf32>
    %1309 = vector.shape_cast %1308 : vector<1x1x1x128xf32> to vector<1x128xf32>
    %1310 = vector.broadcast %1309 : vector<1x128xf32> to vector<8x128xf32>
    %1311 = arith.mulf %1275, %1310 : vector<8x128xf32>
    %1312 = arith.addf %1307, %1311 : vector<8x128xf32>
    %1313 = vector.extract_strided_slice %4 {offsets = [2, 5, 0, 0], sizes = [1, 1, 1, 128], strides = [1, 1, 1, 1]} : vector<3x9x1x128xf32> to vector<1x1x1x128xf32>
    %1314 = vector.shape_cast %1313 : vector<1x1x1x128xf32> to vector<1x128xf32>
    %1315 = vector.broadcast %1314 : vector<1x128xf32> to vector<8x128xf32>
    %1316 = arith.mulf %1287, %1315 : vector<8x128xf32>
    %1317 = arith.addf %1312, %1316 : vector<8x128xf32>
    %1318 = vector.extract_strided_slice %4 {offsets = [2, 6, 0, 0], sizes = [1, 1, 1, 128], strides = [1, 1, 1, 1]} : vector<3x9x1x128xf32> to vector<1x1x1x128xf32>
    %1319 = vector.shape_cast %1318 : vector<1x1x1x128xf32> to vector<1x128xf32>
    %1320 = vector.broadcast %1319 : vector<1x128xf32> to vector<8x128xf32>
    %1321 = arith.mulf %1288, %1320 : vector<8x128xf32>
    %1322 = vector.extract_strided_slice %4 {offsets = [2, 7, 0, 0], sizes = [1, 1, 1, 128], strides = [1, 1, 1, 1]} : vector<3x9x1x128xf32> to vector<1x1x1x128xf32>
    %1323 = vector.shape_cast %1322 : vector<1x1x1x128xf32> to vector<1x128xf32>
    %1324 = vector.broadcast %1323 : vector<1x128xf32> to vector<8x128xf32>
    %1325 = arith.mulf %1283, %1324 : vector<8x128xf32>
    %1326 = arith.addf %1321, %1325 : vector<8x128xf32>
    %1327 = vector.extract_strided_slice %4 {offsets = [2, 8, 0, 0], sizes = [1, 1, 1, 128], strides = [1, 1, 1, 1]} : vector<3x9x1x128xf32> to vector<1x1x1x128xf32>
    %1328 = vector.shape_cast %1327 : vector<1x1x1x128xf32> to vector<1x128xf32>
    %1329 = vector.broadcast %1328 : vector<1x128xf32> to vector<8x128xf32>
    %1330 = arith.mulf %1289, %1329 : vector<8x128xf32>
    %1331 = arith.addf %1326, %1330 : vector<8x128xf32>
    %1332 = arith.addf %1303, %1317 : vector<8x128xf32>
    %1333 = arith.addf %1332, %1331 : vector<8x128xf32>
    %1334 = arith.addf %1272, %1333 : vector<8x128xf32>
    %1335 = vector.broadcast %2 : vector<1x128xf32> to vector<8x128xf32>
    %1336 = arith.addf %1334, %1335 : vector<8x128xf32>
    %cst_166 = arith.constant 5.000000e-01 : f32
    %1337 = vector.broadcast %cst_166 : f32 to vector<8x128xf32>
    %1338 = arith.mulf %1337, %1336 : vector<8x128xf32>
    %cst_167 = arith.constant 0.707106769 : f32
    %1339 = vector.broadcast %cst_167 : f32 to vector<8x128xf32>
    %1340 = arith.mulf %1336, %1339 : vector<8x128xf32>
    %1341 = math.erf %1340 : vector<8x128xf32>
    %cst_168 = arith.constant 1.000000e+00 : f32
    %1342 = vector.broadcast %cst_168 : f32 to vector<8x128xf32>
    %1343 = arith.addf %1342, %1341 : vector<8x128xf32>
    %1344 = arith.mulf %1338, %1343 : vector<8x128xf32>
    %c0_169 = arith.constant 0 : index
    %c7_170 = arith.constant 7 : index
    %c0_171 = arith.constant 0 : index
    %c0_172 = arith.constant 0 : index
    %1345 = vector.load %arg7[%c0_169, %c7_170, %c0_171, %c0_172] : memref<1x8x8x128xf32, #tpu.memory_space<vmem>>, vector<1x1x8x128xf32>
    %1346 = vector.shape_cast %1345 : vector<1x1x8x128xf32> to vector<8x128xf32>
    %1347 = vector.shape_cast %1344 : vector<8x128xf32> to vector<1x1x8x128xf32>
    tpu.vector_store %arg7[%c0_169, %c7_170, %c0_171, %c0_172], %1347 {strides = array<i32>} : memref<1x8x8x128xf32, #tpu.memory_space<vmem>>, vector<1x1x8x128xf32>,
    return
  }
  func.func @transform_0(%arg0: i32, %arg1: i32) -> (i32, i32, i32, i32) {
    %c0_i32 = arith.constant 0 : i32
    %c0_i32_0 = arith.constant 0 : i32
    %c0_i32_1 = arith.constant 0 : i32
    return %arg0, %arg1, %c0_i32, %c0_i32_0 : i32, i32, i32, i32
  }
  func.func @transform_1(%arg0: i32, %arg1: i32) -> (i32, i32, i32, i32) {
    %c8_i32 = arith.constant 8 : i32
    %0 = arith.muli %arg1, %c8_i32 : i32
    %c1_i32 = arith.constant 1 : i32
    %1 = arith.subi %0, %c1_i32 : i32
    %c0_i32 = arith.constant 0 : i32
    %2 = arith.maxsi %1, %c0_i32 : i32
    %c0_i32_0 = arith.constant 0 : i32
    %c0_i32_1 = arith.constant 0 : i32
    %c0_i32_2 = arith.constant 0 : i32
    return %arg0, %2, %c0_i32_0, %c0_i32_1 : i32, i32, i32, i32
  }
  func.func @transform_2(%arg0: i32, %arg1: i32) -> (i32, i32, i32, i32) {
    %c8_i32 = arith.constant 8 : i32
    %0 = arith.muli %arg1, %c8_i32 : i32
    %c8_i32_0 = arith.constant 8 : i32
    %1 = arith.addi %0, %c8_i32_0 : i32
    %c7_i32 = arith.constant 7 : i32
    %2 = arith.minsi %1, %c7_i32 : i32
    %c0_i32 = arith.constant 0 : i32
    %c0_i32_1 = arith.constant 0 : i32
    %c0_i32_2 = arith.constant 0 : i32
    return %arg0, %2, %c0_i32, %c0_i32_1 : i32, i32, i32, i32
  }
  func.func @transform_3(%arg0: i32, %arg1: i32) -> (i32, i32, i32, i32) {
    %c0_i32 = arith.constant 0 : i32
    %c0_i32_0 = arith.constant 0 : i32
    %c0_i32_1 = arith.constant 0 : i32
    %c0_i32_2 = arith.constant 0 : i32
    %c0_i32_3 = arith.constant 0 : i32
    return %c0_i32, %c0_i32_0, %c0_i32_1, %c0_i32_2 : i32, i32, i32, i32
  }
  func.func @transform_4(%arg0: i32, %arg1: i32) -> (i32, i32) {
    %c0_i32 = arith.constant 0 : i32
    %c0_i32_0 = arith.constant 0 : i32
    %c0_i32_1 = arith.constant 0 : i32
    return %c0_i32, %c0_i32_0 : i32, i32
  }
  func.func @transform_5(%arg0: i32, %arg1: i32) -> (i32, i32, i32, i32) {
    %c0_i32 = arith.constant 0 : i32
    %c0_i32_0 = arith.constant 0 : i32
    %c0_i32_1 = arith.constant 0 : i32
    return %arg0, %arg1, %c0_i32, %c0_i32_0 : i32, i32, i32, i32
  }
}

</mosaic_0001>

<llo_original>
// kernel: tpu_custom_call.1
$region0: #{tpu_custom_call.1}
  #allocation0 [shape = 'u32[]', space=smem, size = 0x4, offset = 0x4, fixed_abs, tag = 'smem constant byte address 0x4 - core index']
  #allocation1 [shape = 'u32[144,128]{1,0:T(1,128)}', space=vmem, size = 0x12000, scoped, tag = 'internal scratch']
  %s0 = inlined_call_operand.hbm [shape: f32[2,8,8,128], index: 0, kind: input, shape index: {}]
  %s1 = inlined_call_operand.hbm [shape: f32[2,8,8,128], index: 1, kind: input, shape index: {}]
  %s2 = inlined_call_operand.hbm [shape: f32[2,8,8,128], index: 2, kind: input, shape index: {}]
  %s3 = inlined_call_operand.hbm [shape: f32[3,9,1,128], index: 3, kind: input, shape index: {}]
  %s4 = inlined_call_operand.vmem [shape: f32[1,128], index: 4, kind: input, shape index: {}]
  %s5 = inlined_call_operand.hbm [shape: f32[2,8,8,128], index: 5, kind: output, shape index: {}]
  %s6 = sld [smem:[#allocation0]]
  $region69: #{tpu_custom_call.1} parent=0
    _
  %s8 = ssub.s32 1, %s6
  %s9 = scalar_select 0, %s8, %s6
  $region1: #{tpu_custom_call.1} parent=0
    #allocation2 [shape = 'u8[65536]{0}', space=vmem, size = 0x10000, scoped, tag = 'input window, operand 0']
    #allocation3 [shape = 's32[2]{0}', space=sflag, size = 0x8, scoped, tag = 'scoped memory for tpu_custom_call.1']
    #allocation4 [shape = 's32[2]{0}', space=sflag, size = 0x8, scoped, tag = 'scoped memory for tpu_custom_call.1']
    #allocation5 [shape = 'u8[8192]{0}', space=vmem, size = 0x2000, scoped, tag = 'input window, operand 1']
    #allocation6 [shape = 's32[2]{0}', space=sflag, size = 0x8, scoped, tag = 'scoped memory for tpu_custom_call.1']
    #allocation7 [shape = 'u8[8192]{0}', space=vmem, size = 0x2000, scoped, tag = 'input window, operand 2']
    #allocation8 [shape = 'u8[13824]{0}', space=vmem, size = 0x3800, scoped, tag = 'input window, operand 3, single buffered']
    #allocation9 [shape = 's32[1]{0}', space=sflag, size = 0x4, scoped, tag = 'scoped memory for tpu_custom_call.1']
    #allocation10 [shape = 'u8[65536]{0}', space=vmem, size = 0x10000, scoped, tag = 'output window, operand 0']
    %10 = vsyncpa [#allocation3], 0
    %s11 = scalar_lea.sflag [#allocation3], 1
    %12 = vsyncpa %s11, 0
    %13 = vsyncpa [#allocation6], 0
    %s14 = scalar_lea.sflag [#allocation6], 1
    %15 = vsyncpa %s14, 0
    %16 = vsyncpa [#allocation9], 0
    %17 = vsyncpa [#allocation4], 0
    %s18 = scalar_lea.sflag [#allocation4], 1
    %19 = vsyncpa %s18, 0
    loop: start=0, step=1, limit=4
    $region2: #{tpu_custom_call.1} parent=1 // loop_pre_header
      _
    $region3: #{tpu_custom_call.1} parent=1 // loop_header
      %s21 = sphi 0, %s25
      %p22 = scmp.ge.s32.totalorder %s21, 4
      %s28 = sphi 0, %s40
      %s29 = sphi 0, %s36
      %s30 = sphi 0, %s28
      %s31 = sphi 0, %s29
      %s32 = sphi 0, %s30
      %s33 = sphi 0, %s31
      %s45 = sphi 0, %s47
      %s48 = sphi 0, %s45
      %s49 = sphi 0, %s48
      %s65 = sphi 0, %s49
      %s81 = sphi 0, %s83
      %s84 = sphi 0, %s81
      %s85 = sphi 0, %s84
      %s101 = sphi 0, %s85
      %s117 = sphi 0, %s119
      %s120 = sphi 0, %s117
      %s121 = sphi 0, %s120
      %s137 = sphi 0, %s121
      %s141 = sphi 0, %s141
      %s143 = sphi 0, %s141
      %s144 = sphi 0, %s143
      %s158 = sphi 0, %s144
      %s162 = sphi 0, %s162
      %s164 = sphi 0, %s162
      %s165 = sphi 0, %s164
      %s179 = sphi 0, %s165
      %s187 = sphi 0, %s189
      %s190 = sphi 0, %s187
      %s191 = sphi 0, %s190
      %s207 = sphi 0, %s191
    $region4: #{tpu_custom_call.1} parent=1 // loop_header_branch
      %24 = sbr.rel (%p22) target = $region8
    $region5: #{tpu_custom_call.1} parent=1 // loop_body
      %s26 = ssub.s32 %s21, 1
      %s27 = ssub.s32 %s21, 2
      %s34 = sadd.s32 1, %s29
      %p35 = scmp.ge.s32.totalorder %s34, 1
      %s36 = scalar_select %p35, 0, %s34
      %s37 = sadd.s32 1, %s28
      %s38 = scalar_select %p35, %s37, %s28
      %p39 = scmp.ge.s32.totalorder %s38, 2
      %s40 = scalar_select %p39, 0, %s38
      %s41 = ssub.s32 %s28, %s40
      %s42 = ssub.s32 %s29, %s36
      %s43 = sor.u32 %s41, %s42
      %p44 = scmp.eq.s32.totalorder %s43, 0
      %s46 = sadd.s32 %s45, 1
      %s47 = scalar_select %p44, %s45, %s46
      %p50 = pneg %p44
      %p51 = scmp.eq.s32.totalorder %s21, 1
      %p52 = por %p50, %p51
      %p53 = scmp.ne.s32.totalorder %s45, %s48
      %p54 = scmp.eq.s32.totalorder %s21, 0
      %p55 = por %p53, %p54
      %p56 = scmp.ne.s32.totalorder %s45, %s48
      %p57 = scmp.eq.s32.totalorder %s26, 1
      %p58 = por %p56, %p57
      %p59 = scmp.ne.s32.totalorder %s48, %s49
      %p60 = scmp.eq.s32.totalorder %s26, 0
      %p61 = por %p59, %p60
      %p62 = scmp.ne.s32.totalorder %s48, %s49
      %p63 = scmp.eq.s32.totalorder %s27, 1
      %p64 = por %p62, %p63
      %p66 = scmp.ne.s32.totalorder %s49, %s65
      %p67 = scmp.eq.s32.totalorder %s27, 0
      %p68 = por %p66, %p67
      %s69 = smul.u32 %s29, 8
      %s70 = ssub.s32 %s69, 1
      %p71 = scmp.gt.s32.totalorder %s70, 0
      %s72 = scalar_select %p71, %s70, 0
      %s73 = smul.u32 %s36, 8
      %s74 = ssub.s32 %s73, 1
      %p75 = scmp.gt.s32.totalorder %s74, 0
      %s76 = scalar_select %p75, %s74, 0
      %s77 = ssub.s32 %s28, %s40
      %s78 = ssub.s32 %s72, %s76
      %s79 = sor.u32 %s77, %s78
      %p80 = scmp.eq.s32.totalorder %s79, 0
      %s82 = sadd.s32 %s81, 1
      %s83 = scalar_select %p80, %s81, %s82
      %p86 = pneg %p80
      %p87 = scmp.eq.s32.totalorder %s21, 1
      %p88 = por %p86, %p87
      %p89 = scmp.ne.s32.totalorder %s81, %s84
      %p90 = scmp.eq.s32.totalorder %s21, 0
      %p91 = por %p89, %p90
      %p92 = scmp.ne.s32.totalorder %s81, %s84
      %p93 = scmp.eq.s32.totalorder %s26, 1
      %p94 = por %p92, %p93
      %p95 = scmp.ne.s32.totalorder %s84, %s85
      %p96 = scmp.eq.s32.totalorder %s26, 0
      %p97 = por %p95, %p96
      %p98 = scmp.ne.s32.totalorder %s84, %s85
      %p99 = scmp.eq.s32.totalorder %s27, 1
      %p100 = por %p98, %p99
      %p102 = scmp.ne.s32.totalorder %s85, %s101
      %p103 = scmp.eq.s32.totalorder %s27, 0
      %p104 = por %p102, %p103
      %s105 = smul.u32 %s29, 8
      %s106 = sadd.s32 %s105, 8
      %p107 = scmp.lt.s32.totalorder %s106, 7
      %s108 = scalar_select %p107, %s106, 7
      %s109 = smul.u32 %s36, 8
      %s110 = sadd.s32 %s109, 8
      %p111 = scmp.lt.s32.totalorder %s110, 7
      %s112 = scalar_select %p111, %s110, 7
      %s113 = ssub.s32 %s28, %s40
      %s114 = ssub.s32 %s108, %s112
      %s115 = sor.u32 %s113, %s114
      %p116 = scmp.eq.s32.totalorder %s115, 0
      %s118 = sadd.s32 %s117, 1
      %s119 = scalar_select %p116, %s117, %s118
      %p122 = pneg %p116
      %p123 = scmp.eq.s32.totalorder %s21, 1
      %p124 = por %p122, %p123
      %p125 = scmp.ne.s32.totalorder %s117, %s120
      %p126 = scmp.eq.s32.totalorder %s21, 0
      %p127 = por %p125, %p126
      %p128 = scmp.ne.s32.totalorder %s117, %s120
      %p129 = scmp.eq.s32.totalorder %s26, 1
      %p130 = por %p128, %p129
      %p131 = scmp.ne.s32.totalorder %s120, %s121
      %p132 = scmp.eq.s32.totalorder %s26, 0
      %p133 = por %p131, %p132
      %p134 = scmp.ne.s32.totalorder %s120, %s121
      %p135 = scmp.eq.s32.totalorder %s27, 1
      %p136 = por %p134, %p135
      %p138 = scmp.ne.s32.totalorder %s121, %s137
      %p139 = scmp.eq.s32.totalorder %s27, 0
      %p140 = por %p138, %p139
      %s142 = sadd.s32 %s141, 1
      %p145 = scmp.eq.s32.totalorder %s21, 1
      %p146 = scmp.ne.s32.totalorder %s141, %s143
      %p147 = scmp.eq.s32.totalorder %s21, 0
      %p148 = por %p146, %p147
      %p149 = scmp.ne.s32.totalorder %s141, %s143
      %p150 = scmp.eq.s32.totalorder %s26, 1
      %p151 = por %p149, %p150
      %p152 = scmp.ne.s32.totalorder %s143, %s144
      %p153 = scmp.eq.s32.totalorder %s26, 0
      %p154 = por %p152, %p153
      %p155 = scmp.ne.s32.totalorder %s143, %s144
      %p156 = scmp.eq.s32.totalorder %s27, 1
      %p157 = por %p155, %p156
      %p159 = scmp.ne.s32.totalorder %s144, %s158
      %p160 = scmp.eq.s32.totalorder %s27, 0
      %p161 = por %p159, %p160
      %s163 = sadd.s32 %s162, 1
      %p166 = scmp.eq.s32.totalorder %s21, 1
      %p167 = scmp.ne.s32.totalorder %s162, %s164
      %p168 = scmp.eq.s32.totalorder %s21, 0
      %p169 = por %p167, %p168
      %p170 = scmp.ne.s32.totalorder %s162, %s164
      %p171 = scmp.eq.s32.totalorder %s26, 1
      %p172 = por %p170, %p171
      %p173 = scmp.ne.s32.totalorder %s164, %s165
      %p174 = scmp.eq.s32.totalorder %s26, 0
      %p175 = por %p173, %p174
      %p176 = scmp.ne.s32.totalorder %s164, %s165
      %p177 = scmp.eq.s32.totalorder %s27, 1
      %p178 = por %p176, %p177
      %p180 = scmp.ne.s32.totalorder %s165, %s179
      %p181 = scmp.eq.s32.totalorder %s27, 0
      %p182 = por %p180, %p181
      %s183 = ssub.s32 %s28, %s40
      %s184 = ssub.s32 %s29, %s36
      %s185 = sor.u32 %s183, %s184
      %p186 = scmp.eq.s32.totalorder %s185, 0
      %s188 = sadd.s32 %s187, 1
      %s189 = scalar_select %p186, %s187, %s188
      %p192 = pneg %p186
      %p193 = scmp.eq.s32.totalorder %s21, 1
      %p194 = por %p192, %p193
      %p195 = scmp.ne.s32.totalorder %s187, %s190
      %p196 = scmp.eq.s32.totalorder %s21, 0
      %p197 = por %p195, %p196
      %p198 = scmp.ne.s32.totalorder %s187, %s190
      %p199 = scmp.eq.s32.totalorder %s26, 1
      %p200 = por %p198, %p199
      %p201 = scmp.ne.s32.totalorder %s190, %s191
      %p202 = scmp.eq.s32.totalorder %s26, 0
      %p203 = por %p201, %p202
      %p204 = scmp.ne.s32.totalorder %s190, %s191
      %p205 = scmp.eq.s32.totalorder %s27, 1
      %p206 = por %p204, %p205
      %p208 = scmp.ne.s32.totalorder %s191, %s207
      %p209 = scmp.eq.s32.totalorder %s27, 0
      %p210 = por %p208, %p209
      %p211 = scmp.le.s32.totalorder 1, %s21
      %p212 = scmp.lt.s32.totalorder %s21, 3
      %p213 = pnand %p211, %p212
      %p214 = pneg %p213
      // Predicated region
      $region9: #{tpu_custom_call.1} parent=5 // pred_check
        _
      $region10: #{tpu_custom_call.1} parent=5 // pred_check_branch
        %216 = sbr.rel (%p213) target = $region12
      $region11: #{tpu_custom_call.1} parent=5 // pred_region
        %s217 = ssub.s32 %s21, 1
        // Predicated region
        $region13: #{tpu_custom_call.1} parent=11 // pred_check
          %p218 = pneg %p154
        $region14: #{tpu_custom_call.1} parent=11 // pred_check_branch
          %220 = sbr.rel (%p218) target = $region16
        $region15: #{tpu_custom_call.1} parent=11 // pred_region
          %s222 = ssub.s32 432, 432
          %223 = vsyncadd [#allocation9], %s222
          %s224 = sshll.u32 [#allocation8], 4
          %s225 = int_to_ptr.vmem [resolvable:$true] %s224
          %230 = dma.hbm_to_vmem [thread:$0]  %s3, 432, %s225, [#allocation9], 16, 16, 1
        $region16: #{tpu_custom_call.1} parent=11 // pred_fallthru
          _
        // Predicated region
        $region17: #{tpu_custom_call.1} parent=11 // pred_check
          %p231 = pneg %p175
        $region18: #{tpu_custom_call.1} parent=11 // pred_check_branch
          %233 = sbr.rel (%p231) target = $region20
        $region19: #{tpu_custom_call.1} parent=11 // pred_region
          _
        $region20: #{tpu_custom_call.1} parent=11 // pred_fallthru
          _
      $region12: #{tpu_custom_call.1} parent=5 // pred_fallthru
        _
      %p234 = scmp.lt.s32.totalorder %s21, 2
      // Predicated region
      $region21: #{tpu_custom_call.1} parent=5 // pred_check
        %p235 = pneg %p234
      $region22: #{tpu_custom_call.1} parent=5 // pred_check_branch
        %237 = sbr.rel (%p235) target = $region24
      $region23: #{tpu_custom_call.1} parent=5 // pred_region
        // Predicated region
        $region25: #{tpu_custom_call.1} parent=23 // pred_check
          %p238 = pneg %p55
        $region26: #{tpu_custom_call.1} parent=23 // pred_check_branch
          %240 = sbr.rel (%p238) target = $region28
        $region27: #{tpu_custom_call.1} parent=23 // pred_region
          %s241 = sand.u32 %s45, 1
          %s242 = scalar_lea.sflag [#allocation3], %s241
          %s243 = sand.u32 %s45, 1
          %s244 = smul.addr %s243, 64
          %s245 = scalar_lea.vmem [#allocation2], %s244
          %s246 = smul.u32 8, %s29
          %s248 = ssub.s32 1024, 1024
          %249 = vsyncadd %s242, %s248
          %s250 = smul.addr %s28, 8
          %s251 = sadd.s32 %s246, %s250
          %s252 = smul.addr %s251, 128
          %s253 = scalar_lea.hbm %s0, %s252
          %s254 = sshll.u32 %s245, 4
          %s255 = int_to_ptr.vmem [resolvable:$true] %s254
          %260 = dma.hbm_to_vmem [thread:$0]  %s253, 1024, %s255, %s242, 128, 128, 8
        $region28: #{tpu_custom_call.1} parent=23 // pred_fallthru
          _
        // Predicated region
        $region29: #{tpu_custom_call.1} parent=23 // pred_check
          %p261 = pneg %p91
        $region30: #{tpu_custom_call.1} parent=23 // pred_check_branch
          %263 = sbr.rel (%p261) target = $region32
        $region31: #{tpu_custom_call.1} parent=23 // pred_region
          %s264 = sand.u32 %s21, 1
          %s265 = scalar_lea.sflag [#allocation6], %s264
          %s266 = sand.u32 %s81, 1
          %s267 = smul.addr %s266, 8
          %s268 = scalar_lea.vmem [#allocation5], %s267
          %s269 = smul.u32 %s29, 8
          %s270 = ssub.s32 %s269, 1
          %p271 = scmp.gt.s32.totalorder %s270, 0
          %s272 = scalar_select %p271, %s270, 0
          %s274 = ssub.s32 128, 128
          %275 = vsyncadd %s265, %s274
          %s276 = smul.addr %s28, 8
          %s277 = sadd.s32 %s272, %s276
          %s278 = smul.addr %s277, 128
          %s279 = scalar_lea.hbm %s1, %s278
          %s281 = sshll.u32 %s268, 4
          %s282 = int_to_ptr.vmem [resolvable:$true] %s281
          %284 = dma.hbm_to_vmem [thread:$0]  %s279, 128, %s282, %s265
        $region32: #{tpu_custom_call.1} parent=23 // pred_fallthru
          _
        // Predicated region
        $region33: #{tpu_custom_call.1} parent=23 // pred_check
          %p285 = pneg %p127
        $region34: #{tpu_custom_call.1} parent=23 // pred_check_branch
          %287 = sbr.rel (%p285) target = $region36
        $region35: #{tpu_custom_call.1} parent=23 // pred_region
          %s288 = sand.u32 %s21, 1
          %s289 = scalar_lea.sflag [#allocation6], %s288
          %s290 = sand.u32 %s117, 1
          %s291 = smul.addr %s290, 8
          %s292 = scalar_lea.vmem [#allocation7], %s291
          %s293 = smul.u32 %s29, 8
          %s294 = sadd.s32 %s293, 8
          %p295 = scmp.lt.s32.totalorder %s294, 7
          %s296 = scalar_select %p295, %s294, 7
          %s298 = ssub.s32 128, 128
          %299 = vsyncadd %s289, %s298
          %s300 = smul.addr %s28, 8
          %s301 = sadd.s32 %s296, %s300
          %s302 = smul.addr %s301, 128
          %s303 = scalar_lea.hbm %s2, %s302
          %s305 = sshll.u32 %s292, 4
          %s306 = int_to_ptr.vmem [resolvable:$true] %s305
          %308 = dma.hbm_to_vmem [thread:$0]  %s303, 128, %s306, %s289
        $region36: #{tpu_custom_call.1} parent=23 // pred_fallthru
          _
      $region24: #{tpu_custom_call.1} parent=5 // pred_fallthru
        _
      %p309 = scmp.le.s32.totalorder 1, %s21
      %p310 = scmp.lt.s32.totalorder %s21, 3
      %p311 = pnand %p309, %p310
      %p312 = pneg %p311
      // Predicated region
      $region37: #{tpu_custom_call.1} parent=5 // pred_check
        _
      $region38: #{tpu_custom_call.1} parent=5 // pred_check_branch
        %314 = sbr.rel (%p311) target = $region40
      $region39: #{tpu_custom_call.1} parent=5 // pred_region
        %s315 = ssub.s32 %s21, 1
        %s316 = sand.u32 %s48, 1
        %s317 = scalar_lea.sflag [#allocation3], %s316
        %s318 = sand.u32 %s48, 1
        %s319 = smul.addr %s318, 64
        %s320 = scalar_lea.vmem [#allocation2], %s319
        // Predicated region
        $region41: #{tpu_custom_call.1} parent=39 // pred_check
          %p321 = pneg %p61
        $region42: #{tpu_custom_call.1} parent=39 // pred_check_branch
          %323 = sbr.rel (%p321) target = $region44
        $region43: #{tpu_custom_call.1} parent=39 // pred_region
          %324 = dma.done %s317, 1024
        $region44: #{tpu_custom_call.1} parent=39 // pred_fallthru
          _
        %s325 = sand.u32 %s26, 1
        %s326 = scalar_lea.sflag [#allocation6], %s325
        %s327 = sand.u32 %s84, 1
        %s328 = smul.addr %s327, 8
        %s329 = scalar_lea.vmem [#allocation5], %s328
        // Predicated region
        $region45: #{tpu_custom_call.1} parent=39 // pred_check
          %p330 = pneg %p97
        $region46: #{tpu_custom_call.1} parent=39 // pred_check_branch
          %332 = sbr.rel (%p330) target = $region48
        $region47: #{tpu_custom_call.1} parent=39 // pred_region
          %333 = dma.done %s326, 128
        $region48: #{tpu_custom_call.1} parent=39 // pred_fallthru
          _
        %s334 = sand.u32 %s26, 1
        %s335 = scalar_lea.sflag [#allocation6], %s334
        %s336 = sand.u32 %s120, 1
        %s337 = smul.addr %s336, 8
        %s338 = scalar_lea.vmem [#allocation7], %s337
        // Predicated region
        $region49: #{tpu_custom_call.1} parent=39 // pred_check
          %p339 = pneg %p133
        $region50: #{tpu_custom_call.1} parent=39 // pred_check_branch
          %341 = sbr.rel (%p339) target = $region52
        $region51: #{tpu_custom_call.1} parent=39 // pred_region
          %342 = dma.done %s335, 128
        $region52: #{tpu_custom_call.1} parent=39 // pred_fallthru
          _
        // Predicated region
        $region53: #{tpu_custom_call.1} parent=39 // pred_check
          %p343 = pneg %p154
        $region54: #{tpu_custom_call.1} parent=39 // pred_check_branch
          %345 = sbr.rel (%p343) target = $region56
        $region55: #{tpu_custom_call.1} parent=39 // pred_region
          %346 = dma.done [#allocation9], 432
        $region56: #{tpu_custom_call.1} parent=39 // pred_fallthru
          _
        %s347 = sand.u32 %s48, 1
        %s348 = scalar_lea.sflag [#allocation3], %s347
        %s349 = sand.u32 %s48, 1
        %s350 = smul.addr %s349, 64
        %s351 = scalar_lea.vmem [#allocation2], %s350
        %p352 = pneg %p61
        %p353 = pneg %p58
        %s354 = sand.u32 %s26, 1
        %s355 = scalar_lea.sflag [#allocation6], %s354
        %s356 = sand.u32 %s84, 1
        %s357 = smul.addr %s356, 8
        %s358 = scalar_lea.vmem [#allocation5], %s357
        %p359 = pneg %p97
        %p360 = pneg %p94
        %s361 = sand.u32 %s26, 1
        %s362 = scalar_lea.sflag [#allocation6], %s361
        %s363 = sand.u32 %s120, 1
        %s364 = smul.addr %s363, 8
        %s365 = scalar_lea.vmem [#allocation7], %s364
        %p366 = pneg %p133
        %p367 = pneg %p130
        %p368 = pneg %p154
        %p369 = pneg %p151
        %p370 = pneg %p175
        %p371 = pneg %p172
        %p372 = pneg %p203
        %p373 = pneg %p200
        %s374 = sand.u32 %s190, 1
        %s375 = scalar_lea.sflag [#allocation4], %s374
        %s376 = sand.u32 %s190, 1
        %s377 = smul.addr %s376, 64
        %s378 = scalar_lea.vmem [#allocation10], %s377
        %s379 = smul.u32 8, %s31
        %s380 = smul.u32 %s31, 8
        %s381 = ssub.s32 %s380, 1
        %p382 = scmp.gt.s32.totalorder %s381, 0
        %s383 = scalar_select %p382, %s381, 0
        %s384 = smul.u32 %s31, 8
        %s385 = sadd.s32 %s384, 8
        %p386 = scmp.lt.s32.totalorder %s385, 7
        %s387 = scalar_select %p386, %s385, 7
        %s388 = smul.u32 8, %s31
        %p389 = scmp.gt.s32.totalorder %s31, 0
        %p390 = scmp.lt.s32.totalorder %s31, 0
        %v391 = vld [vmem:[%s4] sm:$0x1]
        %v392 = vld [vmem:[#allocation8] sm:$0x1]
        %v393 = vld [vmem:[#allocation8 + $0x1] sm:$0x1]
        %v394 = vld [vmem:[#allocation8 + $0x2] sm:$0x1]
        %v395 = vld [vmem:[#allocation8 + $0x3] sm:$0x1]
        %v396 = vld [vmem:[#allocation8 + $0x4] sm:$0x1]
        %v397 = vld [vmem:[#allocation8 + $0x5] sm:$0x1]
        %v398 = vld [vmem:[#allocation8 + $0x6] sm:$0x1]
        %v399 = vld [vmem:[#allocation8 + $0x7] sm:$0x1]
        %v400 = vld [vmem:[#allocation8 + $0x8] sm:$0x1]
        %v401 = vld [vmem:[#allocation8 + $0x9] sm:$0x1]
        %v402 = vld [vmem:[#allocation8 + $0xa] sm:$0x1]
        %v403 = vld [vmem:[#allocation8 + $0xb] sm:$0x1]
        %v404 = vld [vmem:[#allocation8 + $0xc] sm:$0x1]
        %v405 = vld [vmem:[#allocation8 + $0xd] sm:$0x1]
        %v406 = vld [vmem:[#allocation8 + $0xe] sm:$0x1]
        %v407 = vld [vmem:[#allocation8 + $0xf] sm:$0x1]
        %v408 = vld [vmem:[#allocation8 + $0x10] sm:$0x1]
        %v409 = vld [vmem:[#allocation8 + $0x11] sm:$0x1]
        %v410 = vld [vmem:[#allocation8 + $0x12] sm:$0x1]
        %v411 = vld [vmem:[#allocation8 + $0x13] sm:$0x1]
        %v412 = vld [vmem:[#allocation8 + $0x14] sm:$0x1]
        %v413 = vld [vmem:[#allocation8 + $0x15] sm:$0x1]
        %v414 = vld [vmem:[#allocation8 + $0x16] sm:$0x1]
        %v415 = vld [vmem:[#allocation8 + $0x17] sm:$0x1]
        %v416 = vld [vmem:[#allocation8 + $0x18] sm:$0x1]
        %v417 = vld [vmem:[#allocation8 + $0x19] sm:$0x1]
        %v418 = vld [vmem:[#allocation8 + $0x1a] sm:$0x1]
        %v419 = vlaneseq
        %v420 = vshrl.u32 %v419, 7
        %vm421 = vcmp.gt.s32.totalorder %v420, 0
        %vm422 = vcmp.lt.s32.totalorder %v420, 7
        %v423 = vld [vmem:[%s329] sm:$0xff]
        %s424 = scalar_select %p389, 1, 0
        %v425 = vstv %s424
        %vm426 = vcmp.eq.s32.totalorder %v425, 1
        %v427 = vsel %vm426, %v423, 0.0
        %v428 = vrot.slane %v427, 7
        %v429 = vsel %vm421, 1, 0
        %vm430 = vcmp.eq.s32.totalorder %v429, 1
        %v431 = vsel %vm430, %v428, 0.0
        %v432 = vrot.slane %v427, 1
        %v433 = vsel %vm422, 1, 0
        %vm434 = vcmp.eq.s32.totalorder %v433, 1
        %v435 = vsel %vm434, %v432, 0.0
        %436 = vrot.lane.b32.xlu0 %v431, 16
        %v437 = vpop.permute.xlu0 %436
        %438 = vrot.lane.b32.xlu0 %v431, 112
        %v439 = vpop.permute.xlu0 %438
        %440 = vrot.lane.b32.xlu0 %v427, 16
        %v441 = vpop.permute.xlu0 %440
        %442 = vrot.lane.b32.xlu0 %v427, 112
        %v443 = vpop.permute.xlu0 %442
        %444 = vrot.lane.b32.xlu0 %v435, 16
        %v445 = vpop.permute.xlu0 %444
        %446 = vrot.lane.b32.xlu0 %v435, 112
        %v447 = vpop.permute.xlu0 %446
        %v448 = vld [vmem:[%s320] sm:$0xff]
        %v449 = vrot.slane %v448, 7
        %v450 = vsel %vm430, %v449, 0.0
        %v451 = vrot.slane %v448, 1
        %v452 = vsel %vm434, %v451, 0.0
        %453 = vrot.lane.b32.xlu0 %v450, 16
        %v454 = vpop.permute.xlu0 %453
        %455 = vrot.lane.b32.xlu0 %v450, 112
        %v456 = vpop.permute.xlu0 %455
        %457 = vrot.lane.b32.xlu0 %v448, 16
        %v458 = vpop.permute.xlu0 %457
        %459 = vrot.lane.b32.xlu0 %v448, 112
        %v460 = vpop.permute.xlu0 %459
        %461 = vrot.lane.b32.xlu0 %v452, 16
        %v462 = vpop.permute.xlu0 %461
        %463 = vrot.lane.b32.xlu0 %v452, 112
        %v464 = vpop.permute.xlu0 %463
        %v466 = vlaneseq
        %v467 = vshrl.u32 %v466, 7
        %v468 = vsub.s32 0, %v467
        %v469 = vrot.slane %v392, %v468
        %v471 = vmul.f32 %v437, %v469
        %v473 = vlaneseq
        %v474 = vshrl.u32 %v473, 7
        %v475 = vsub.s32 0, %v474
        %v476 = vrot.slane %v393, %v475
        %v478 = vmul.f32 %v431, %v476
        %v479 = vadd.f32 %v471, %v478
        %v481 = vlaneseq
        %v482 = vshrl.u32 %v481, 7
        %v483 = vsub.s32 0, %v482
        %v484 = vrot.slane %v394, %v483
        %v486 = vmul.f32 %v439, %v484
        %v487 = vadd.f32 %v479, %v486
        %v489 = vlaneseq
        %v490 = vshrl.u32 %v489, 7
        %v491 = vsub.s32 0, %v490
        %v492 = vrot.slane %v395, %v491
        %v494 = vmul.f32 %v441, %v492
        %v496 = vlaneseq
        %v497 = vshrl.u32 %v496, 7
        %v498 = vsub.s32 0, %v497
        %v499 = vrot.slane %v396, %v498
        %v501 = vmul.f32 %v427, %v499
        %v502 = vadd.f32 %v494, %v501
        %v504 = vlaneseq
        %v505 = vshrl.u32 %v504, 7
        %v506 = vsub.s32 0, %v505
        %v507 = vrot.slane %v397, %v506
        %v509 = vmul.f32 %v443, %v507
        %v510 = vadd.f32 %v502, %v509
        %v512 = vlaneseq
        %v513 = vshrl.u32 %v512, 7
        %v514 = vsub.s32 0, %v513
        %v515 = vrot.slane %v398, %v514
        %v517 = vmul.f32 %v445, %v515
        %v519 = vlaneseq
        %v520 = vshrl.u32 %v519, 7
        %v521 = vsub.s32 0, %v520
        %v522 = vrot.slane %v399, %v521
        %v524 = vmul.f32 %v435, %v522
        %v525 = vadd.f32 %v517, %v524
        %v527 = vlaneseq
        %v528 = vshrl.u32 %v527, 7
        %v529 = vsub.s32 0, %v528
        %v530 = vrot.slane %v400, %v529
        %v532 = vmul.f32 %v447, %v530
        %v533 = vadd.f32 %v525, %v532
        %v534 = vadd.f32 %v487, %v510
        %v535 = vadd.f32 %v534, %v533
        %v537 = vlaneseq
        %v538 = vshrl.u32 %v537, 7
        %v539 = vsub.s32 0, %v538
        %v540 = vrot.slane %v401, %v539
        %v542 = vmul.f32 %v454, %v540
        %v544 = vlaneseq
        %v545 = vshrl.u32 %v544, 7
        %v546 = vsub.s32 0, %v545
        %v547 = vrot.slane %v402, %v546
        %v549 = vmul.f32 %v450, %v547
        %v550 = vadd.f32 %v542, %v549
        %v552 = vlaneseq
        %v553 = vshrl.u32 %v552, 7
        %v554 = vsub.s32 0, %v553
        %v555 = vrot.slane %v403, %v554
        %v557 = vmul.f32 %v456, %v555
        %v558 = vadd.f32 %v550, %v557
        %v560 = vlaneseq
        %v561 = vshrl.u32 %v560, 7
        %v562 = vsub.s32 0, %v561
        %v563 = vrot.slane %v404, %v562
        %v565 = vmul.f32 %v458, %v563
        %v567 = vlaneseq
        %v568 = vshrl.u32 %v567, 7
        %v569 = vsub.s32 0, %v568
        %v570 = vrot.slane %v405, %v569
        %v572 = vmul.f32 %v448, %v570
        %v573 = vadd.f32 %v565, %v572
        %v575 = vlaneseq
        %v576 = vshrl.u32 %v575, 7
        %v577 = vsub.s32 0, %v576
        %v578 = vrot.slane %v406, %v577
        %v580 = vmul.f32 %v460, %v578
        %v581 = vadd.f32 %v573, %v580
        %v583 = vlaneseq
        %v584 = vshrl.u32 %v583, 7
        %v585 = vsub.s32 0, %v584
        %v586 = vrot.slane %v407, %v585
        %v588 = vmul.f32 %v462, %v586
        %v590 = vlaneseq
        %v591 = vshrl.u32 %v590, 7
        %v592 = vsub.s32 0, %v591
        %v593 = vrot.slane %v408, %v592
        %v595 = vmul.f32 %v452, %v593
        %v596 = vadd.f32 %v588, %v595
        %v598 = vlaneseq
        %v599 = vshrl.u32 %v598, 7
        %v600 = vsub.s32 0, %v599
        %v601 = vrot.slane %v409, %v600
        %v603 = vmul.f32 %v464, %v601
        %v604 = vadd.f32 %v596, %v603
        %v605 = vadd.f32 %v558, %v581
        %v606 = vadd.f32 %v605, %v604
        %v607 = vadd.f32 %v535, %v606
        %v608 = vmul.f32 %v454, %v469
        %v609 = vmul.f32 %v450, %v476
        %v610 = vadd.f32 %v608, %v609
        %v611 = vmul.f32 %v456, %v484
        %v612 = vadd.f32 %v610, %v611
        %v613 = vmul.f32 %v458, %v492
        %v614 = vmul.f32 %v448, %v499
        %v615 = vadd.f32 %v613, %v614
        %v616 = vmul.f32 %v460, %v507
        %v617 = vadd.f32 %v615, %v616
        %v618 = vmul.f32 %v462, %v515
        %v619 = vmul.f32 %v452, %v522
        %v620 = vadd.f32 %v618, %v619
        %v621 = vmul.f32 %v464, %v530
        %v622 = vadd.f32 %v620, %v621
        %v623 = vadd.f32 %v612, %v617
        %v624 = vadd.f32 %v623, %v622
        %s625 = scalar_lea.vmem %s320, 8 [#allocation2]
        %v626 = vld [vmem:[%s625] sm:$0xff]
        %v627 = vrot.slane %v626, 7
        %v628 = vsel %vm430, %v627, 0.0
        %v629 = vrot.slane %v626, 1
        %v630 = vsel %vm434, %v629, 0.0
        %631 = vrot.lane.b32.xlu0 %v628, 16
        %v632 = vpop.permute.xlu0 %631
        %633 = vrot.lane.b32.xlu0 %v628, 112
        %v634 = vpop.permute.xlu0 %633
        %635 = vrot.lane.b32.xlu0 %v626, 16
        %v636 = vpop.permute.xlu0 %635
        %637 = vrot.lane.b32.xlu0 %v626, 112
        %v638 = vpop.permute.xlu0 %637
        %639 = vrot.lane.b32.xlu0 %v630, 16
        %v640 = vpop.permute.xlu0 %639
        %641 = vrot.lane.b32.xlu0 %v630, 112
        %v642 = vpop.permute.xlu0 %641
        %v644 = vlaneseq
        %v645 = vshrl.u32 %v644, 7
        %v646 = vsub.s32 0, %v645
        %v647 = vrot.slane %v410, %v646
        %v649 = vmul.f32 %v632, %v647
        %v651 = vlaneseq
        %v652 = vshrl.u32 %v651, 7
        %v653 = vsub.s32 0, %v652
        %v654 = vrot.slane %v411, %v653
        %v656 = vmul.f32 %v628, %v654
        %v657 = vadd.f32 %v649, %v656
        %v659 = vlaneseq
        %v660 = vshrl.u32 %v659, 7
        %v661 = vsub.s32 0, %v660
        %v662 = vrot.slane %v412, %v661
        %v664 = vmul.f32 %v634, %v662
        %v665 = vadd.f32 %v657, %v664
        %v667 = vlaneseq
        %v668 = vshrl.u32 %v667, 7
        %v669 = vsub.s32 0, %v668
        %v670 = vrot.slane %v413, %v669
        %v672 = vmul.f32 %v636, %v670
        %v674 = vlaneseq
        %v675 = vshrl.u32 %v674, 7
        %v676 = vsub.s32 0, %v675
        %v677 = vrot.slane %v414, %v676
        %v679 = vmul.f32 %v626, %v677
        %v680 = vadd.f32 %v672, %v679
        %v682 = vlaneseq
        %v683 = vshrl.u32 %v682, 7
        %v684 = vsub.s32 0, %v683
        %v685 = vrot.slane %v415, %v684
        %v687 = vmul.f32 %v638, %v685
        %v688 = vadd.f32 %v680, %v687
        %v690 = vlaneseq
        %v691 = vshrl.u32 %v690, 7
        %v692 = vsub.s32 0, %v691
        %v693 = vrot.slane %v416, %v692
        %v695 = vmul.f32 %v640, %v693
        %v697 = vlaneseq
        %v698 = vshrl.u32 %v697, 7
        %v699 = vsub.s32 0, %v698
        %v700 = vrot.slane %v417, %v699
        %v702 = vmul.f32 %v630, %v700
        %v703 = vadd.f32 %v695, %v702
        %v705 = vlaneseq
        %v706 = vshrl.u32 %v705, 7
        %v707 = vsub.s32 0, %v706
        %v708 = vrot.slane %v418, %v707
        %v710 = vmul.f32 %v642, %v708
        %v711 = vadd.f32 %v703, %v710
        %v712 = vadd.f32 %v665, %v688
        %v713 = vadd.f32 %v712, %v711
        %v714 = vadd.f32 %v607, %v713
        %v716 = vlaneseq
        %v717 = vshrl.u32 %v716, 7
        %v718 = vsub.s32 0, %v717
        %v719 = vrot.slane %v391, %v718
        %v721 = vadd.f32 %v714, %v719
        %v722 = vmul.f32 %v721, 0.5
        %v723 = vmul.f32 %v721, 0.70710677
        %v724 = verf.f32.pop %v723
        %v725 = vadd.f32 %v724, 1.0
        %v726 = vmul.f32 %v722, %v725
        %727 = vst [vmem:[%s378] sm:$0xff] %v726
        %v728 = vmul.f32 %v632, %v540
        %v729 = vmul.f32 %v628, %v547
        %v730 = vadd.f32 %v728, %v729
        %v731 = vmul.f32 %v634, %v555
        %v732 = vadd.f32 %v730, %v731
        %v733 = vmul.f32 %v636, %v563
        %v734 = vmul.f32 %v626, %v570
        %v735 = vadd.f32 %v733, %v734
        %v736 = vmul.f32 %v638, %v578
        %v737 = vadd.f32 %v735, %v736
        %v738 = vmul.f32 %v640, %v586
        %v739 = vmul.f32 %v630, %v593
        %v740 = vadd.f32 %v738, %v739
        %v741 = vmul.f32 %v642, %v601
        %v742 = vadd.f32 %v740, %v741
        %v743 = vadd.f32 %v732, %v737
        %v744 = vadd.f32 %v743, %v742
        %v745 = vadd.f32 %v624, %v744
        %v746 = vmul.f32 %v632, %v469
        %v747 = vmul.f32 %v628, %v476
        %v748 = vadd.f32 %v746, %v747
        %v749 = vmul.f32 %v634, %v484
        %v750 = vadd.f32 %v748, %v749
        %v751 = vmul.f32 %v636, %v492
        %v752 = vmul.f32 %v626, %v499
        %v753 = vadd.f32 %v751, %v752
        %v754 = vmul.f32 %v638, %v507
        %v755 = vadd.f32 %v753, %v754
        %v756 = vmul.f32 %v640, %v515
        %v757 = vmul.f32 %v630, %v522
        %v758 = vadd.f32 %v756, %v757
        %v759 = vmul.f32 %v642, %v530
        %v760 = vadd.f32 %v758, %v759
        %v761 = vadd.f32 %v750, %v755
        %v762 = vadd.f32 %v761, %v760
        %s763 = scalar_lea.vmem %s320, 16 [#allocation2]
        %v764 = vld [vmem:[%s763] sm:$0xff]
        %v765 = vrot.slane %v764, 7
        %v766 = vsel %vm430, %v765, 0.0
        %v767 = vrot.slane %v764, 1
        %v768 = vsel %vm434, %v767, 0.0
        %769 = vrot.lane.b32.xlu0 %v766, 16
        %v770 = vpop.permute.xlu0 %769
        %771 = vrot.lane.b32.xlu0 %v766, 112
        %v772 = vpop.permute.xlu0 %771
        %773 = vrot.lane.b32.xlu0 %v764, 16
        %v774 = vpop.permute.xlu0 %773
        %775 = vrot.lane.b32.xlu0 %v764, 112
        %v776 = vpop.permute.xlu0 %775
        %777 = vrot.lane.b32.xlu0 %v768, 16
        %v778 = vpop.permute.xlu0 %777
        %779 = vrot.lane.b32.xlu0 %v768, 112
        %v780 = vpop.permute.xlu0 %779
        %v781 = vmul.f32 %v770, %v647
        %v782 = vmul.f32 %v766, %v654
        %v783 = vadd.f32 %v781, %v782
        %v784 = vmul.f32 %v772, %v662
        %v785 = vadd.f32 %v783, %v784
        %v786 = vmul.f32 %v774, %v670
        %v787 = vmul.f32 %v764, %v677
        %v788 = vadd.f32 %v786, %v787
        %v789 = vmul.f32 %v776, %v685
        %v790 = vadd.f32 %v788, %v789
        %v791 = vmul.f32 %v778, %v693
        %v792 = vmul.f32 %v768, %v700
        %v793 = vadd.f32 %v791, %v792
        %v794 = vmul.f32 %v780, %v708
        %v795 = vadd.f32 %v793, %v794
        %v796 = vadd.f32 %v785, %v790
        %v797 = vadd.f32 %v796, %v795
        %v798 = vadd.f32 %v745, %v797
        %v799 = vadd.f32 %v798, %v719
        %v800 = vmul.f32 %v799, 0.5
        %v801 = vmul.f32 %v799, 0.70710677
        %v802 = verf.f32.pop %v801
        %v803 = vadd.f32 %v802, 1.0
        %v804 = vmul.f32 %v800, %v803
        %s805 = scalar_lea.vmem %s378, 8 [#allocation10]
        %806 = vst [vmem:[%s805] sm:$0xff] %v804
        %v807 = vmul.f32 %v770, %v540
        %v808 = vmul.f32 %v766, %v547
        %v809 = vadd.f32 %v807, %v808
        %v810 = vmul.f32 %v772, %v555
        %v811 = vadd.f32 %v809, %v810
        %v812 = vmul.f32 %v774, %v563
        %v813 = vmul.f32 %v764, %v570
        %v814 = vadd.f32 %v812, %v813
        %v815 = vmul.f32 %v776, %v578
        %v816 = vadd.f32 %v814, %v815
        %v817 = vmul.f32 %v778, %v586
        %v818 = vmul.f32 %v768, %v593
        %v819 = vadd.f32 %v817, %v818
        %v820 = vmul.f32 %v780, %v601
        %v821 = vadd.f32 %v819, %v820
        %v822 = vadd.f32 %v811, %v816
        %v823 = vadd.f32 %v822, %v821
        %v824 = vadd.f32 %v762, %v823
        %v825 = vmul.f32 %v770, %v469
        %v826 = vmul.f32 %v766, %v476
        %v827 = vadd.f32 %v825, %v826
        %v828 = vmul.f32 %v772, %v484
        %v829 = vadd.f32 %v827, %v828
        %v830 = vmul.f32 %v774, %v492
        %v831 = vmul.f32 %v764, %v499
        %v832 = vadd.f32 %v830, %v831
        %v833 = vmul.f32 %v776, %v507
        %v834 = vadd.f32 %v832, %v833
        %v835 = vmul.f32 %v778, %v515
        %v836 = vmul.f32 %v768, %v522
        %v837 = vadd.f32 %v835, %v836
        %v838 = vmul.f32 %v780, %v530
        %v839 = vadd.f32 %v837, %v838
        %v840 = vadd.f32 %v829, %v834
        %v841 = vadd.f32 %v840, %v839
        %s842 = scalar_lea.vmem %s320, 24 [#allocation2]
        %v843 = vld [vmem:[%s842] sm:$0xff]
        %v844 = vrot.slane %v843, 7
        %v845 = vsel %vm430, %v844, 0.0
        %v846 = vrot.slane %v843, 1
        %v847 = vsel %vm434, %v846, 0.0
        %848 = vrot.lane.b32.xlu0 %v845, 16
        %v849 = vpop.permute.xlu0 %848
        %850 = vrot.lane.b32.xlu0 %v845, 112
        %v851 = vpop.permute.xlu0 %850
        %852 = vrot.lane.b32.xlu0 %v843, 16
        %v853 = vpop.permute.xlu0 %852
        %854 = vrot.lane.b32.xlu0 %v843, 112
        %v855 = vpop.permute.xlu0 %854
        %856 = vrot.lane.b32.xlu0 %v847, 16
        %v857 = vpop.permute.xlu0 %856
        %858 = vrot.lane.b32.xlu0 %v847, 112
        %v859 = vpop.permute.xlu0 %858
        %v860 = vmul.f32 %v849, %v647
        %v861 = vmul.f32 %v845, %v654
        %v862 = vadd.f32 %v860, %v861
        %v863 = vmul.f32 %v851, %v662
        %v864 = vadd.f32 %v862, %v863
        %v865 = vmul.f32 %v853, %v670
        %v866 = vmul.f32 %v843, %v677
        %v867 = vadd.f32 %v865, %v866
        %v868 = vmul.f32 %v855, %v685
        %v869 = vadd.f32 %v867, %v868
        %v870 = vmul.f32 %v857, %v693
        %v871 = vmul.f32 %v847, %v700
        %v872 = vadd.f32 %v870, %v871
        %v873 = vmul.f32 %v859, %v708
        %v874 = vadd.f32 %v872, %v873
        %v875 = vadd.f32 %v864, %v869
        %v876 = vadd.f32 %v875, %v874
        %v877 = vadd.f32 %v824, %v876
        %v878 = vadd.f32 %v877, %v719
        %v879 = vmul.f32 %v878, 0.5
        %v880 = vmul.f32 %v878, 0.70710677
        %v881 = verf.f32.pop %v880
        %v882 = vadd.f32 %v881, 1.0
        %v883 = vmul.f32 %v879, %v882
        %s884 = scalar_lea.vmem %s378, 16 [#allocation10]
        %885 = vst [vmem:[%s884] sm:$0xff] %v883
        %v886 = vmul.f32 %v849, %v540
        %v887 = vmul.f32 %v845, %v547
        %v888 = vadd.f32 %v886, %v887
        %v889 = vmul.f32 %v851, %v555
        %v890 = vadd.f32 %v888, %v889
        %v891 = vmul.f32 %v853, %v563
        %v892 = vmul.f32 %v843, %v570
        %v893 = vadd.f32 %v891, %v892
        %v894 = vmul.f32 %v855, %v578
        %v895 = vadd.f32 %v893, %v894
        %v896 = vmul.f32 %v857, %v586
        %v897 = vmul.f32 %v847, %v593
        %v898 = vadd.f32 %v896, %v897
        %v899 = vmul.f32 %v859, %v601
        %v900 = vadd.f32 %v898, %v899
        %v901 = vadd.f32 %v890, %v895
        %v902 = vadd.f32 %v901, %v900
        %v903 = vadd.f32 %v841, %v902
        %v904 = vmul.f32 %v849, %v469
        %v905 = vmul.f32 %v845, %v476
        %v906 = vadd.f32 %v904, %v905
        %v907 = vmul.f32 %v851, %v484
        %v908 = vadd.f32 %v906, %v907
        %v909 = vmul.f32 %v853, %v492
        %v910 = vmul.f32 %v843, %v499
        %v911 = vadd.f32 %v909, %v910
        %v912 = vmul.f32 %v855, %v507
        %v913 = vadd.f32 %v911, %v912
        %v914 = vmul.f32 %v857, %v515
        %v915 = vmul.f32 %v847, %v522
        %v916 = vadd.f32 %v914, %v915
        %v917 = vmul.f32 %v859, %v530
        %v918 = vadd.f32 %v916, %v917
        %v919 = vadd.f32 %v908, %v913
        %v920 = vadd.f32 %v919, %v918
        %s921 = scalar_lea.vmem %s320, 32 [#allocation2]
        %v922 = vld [vmem:[%s921] sm:$0xff]
        %v923 = vrot.slane %v922, 7
        %v924 = vsel %vm430, %v923, 0.0
        %v925 = vrot.slane %v922, 1
        %v926 = vsel %vm434, %v925, 0.0
        %927 = vrot.lane.b32.xlu0 %v924, 16
        %v928 = vpop.permute.xlu0 %927
        %929 = vrot.lane.b32.xlu0 %v924, 112
        %v930 = vpop.permute.xlu0 %929
        %931 = vrot.lane.b32.xlu0 %v922, 16
        %v932 = vpop.permute.xlu0 %931
        %933 = vrot.lane.b32.xlu0 %v922, 112
        %v934 = vpop.permute.xlu0 %933
        %935 = vrot.lane.b32.xlu0 %v926, 16
        %v936 = vpop.permute.xlu0 %935
        %937 = vrot.lane.b32.xlu0 %v926, 112
        %v938 = vpop.permute.xlu0 %937
        %v939 = vmul.f32 %v928, %v647
        %v940 = vmul.f32 %v924, %v654
        %v941 = vadd.f32 %v939, %v940
        %v942 = vmul.f32 %v930, %v662
        %v943 = vadd.f32 %v941, %v942
        %v944 = vmul.f32 %v932, %v670
        %v945 = vmul.f32 %v922, %v677
        %v946 = vadd.f32 %v944, %v945
        %v947 = vmul.f32 %v934, %v685
        %v948 = vadd.f32 %v946, %v947
        %v949 = vmul.f32 %v936, %v693
        %v950 = vmul.f32 %v926, %v700
        %v951 = vadd.f32 %v949, %v950
        %v952 = vmul.f32 %v938, %v708
        %v953 = vadd.f32 %v951, %v952
        %v954 = vadd.f32 %v943, %v948
        %v955 = vadd.f32 %v954, %v953
        %v956 = vadd.f32 %v903, %v955
        %v957 = vadd.f32 %v956, %v719
        %v958 = vmul.f32 %v957, 0.5
        %v959 = vmul.f32 %v957, 0.70710677
        %v960 = verf.f32.pop %v959
        %v961 = vadd.f32 %v960, 1.0
        %v962 = vmul.f32 %v958, %v961
        %s963 = scalar_lea.vmem %s378, 24 [#allocation10]
        %964 = vst [vmem:[%s963] sm:$0xff] %v962
        %v965 = vmul.f32 %v928, %v540
        %v966 = vmul.f32 %v924, %v547
        %v967 = vadd.f32 %v965, %v966
        %v968 = vmul.f32 %v930, %v555
        %v969 = vadd.f32 %v967, %v968
        %v970 = vmul.f32 %v932, %v563
        %v971 = vmul.f32 %v922, %v570
        %v972 = vadd.f32 %v970, %v971
        %v973 = vmul.f32 %v934, %v578
        %v974 = vadd.f32 %v972, %v973
        %v975 = vmul.f32 %v936, %v586
        %v976 = vmul.f32 %v926, %v593
        %v977 = vadd.f32 %v975, %v976
        %v978 = vmul.f32 %v938, %v601
        %v979 = vadd.f32 %v977, %v978
        %v980 = vadd.f32 %v969, %v974
        %v981 = vadd.f32 %v980, %v979
        %v982 = vadd.f32 %v920, %v981
        %v983 = vmul.f32 %v928, %v469
        %v984 = vmul.f32 %v924, %v476
        %v985 = vadd.f32 %v983, %v984
        %v986 = vmul.f32 %v930, %v484
        %v987 = vadd.f32 %v985, %v986
        %v988 = vmul.f32 %v932, %v492
        %v989 = vmul.f32 %v922, %v499
        %v990 = vadd.f32 %v988, %v989
        %v991 = vmul.f32 %v934, %v507
        %v992 = vadd.f32 %v990, %v991
        %v993 = vmul.f32 %v936, %v515
        %v994 = vmul.f32 %v926, %v522
        %v995 = vadd.f32 %v993, %v994
        %v996 = vmul.f32 %v938, %v530
        %v997 = vadd.f32 %v995, %v996
        %v998 = vadd.f32 %v987, %v992
        %v999 = vadd.f32 %v998, %v997
        %s1000 = scalar_lea.vmem %s320, 40 [#allocation2]
        %v1001 = vld [vmem:[%s1000] sm:$0xff]
        %v1002 = vrot.slane %v1001, 7
        %v1003 = vsel %vm430, %v1002, 0.0
        %v1004 = vrot.slane %v1001, 1
        %v1005 = vsel %vm434, %v1004, 0.0
        %1006 = vrot.lane.b32.xlu0 %v1003, 16
        %v1007 = vpop.permute.xlu0 %1006
        %1008 = vrot.lane.b32.xlu0 %v1003, 112
        %v1009 = vpop.permute.xlu0 %1008
        %1010 = vrot.lane.b32.xlu0 %v1001, 16
        %v1011 = vpop.permute.xlu0 %1010
        %1012 = vrot.lane.b32.xlu0 %v1001, 112
        %v1013 = vpop.permute.xlu0 %1012
        %1014 = vrot.lane.b32.xlu0 %v1005, 16
        %v1015 = vpop.permute.xlu0 %1014
        %1016 = vrot.lane.b32.xlu0 %v1005, 112
        %v1017 = vpop.permute.xlu0 %1016
        %v1018 = vmul.f32 %v1007, %v647
        %v1019 = vmul.f32 %v1003, %v654
        %v1020 = vadd.f32 %v1018, %v1019
        %v1021 = vmul.f32 %v1009, %v662
        %v1022 = vadd.f32 %v1020, %v1021
        %v1023 = vmul.f32 %v1011, %v670
        %v1024 = vmul.f32 %v1001, %v677
        %v1025 = vadd.f32 %v1023, %v1024
        %v1026 = vmul.f32 %v1013, %v685
        %v1027 = vadd.f32 %v1025, %v1026
        %v1028 = vmul.f32 %v1015, %v693
        %v1029 = vmul.f32 %v1005, %v700
        %v1030 = vadd.f32 %v1028, %v1029
        %v1031 = vmul.f32 %v1017, %v708
        %v1032 = vadd.f32 %v1030, %v1031
        %v1033 = vadd.f32 %v1022, %v1027
        %v1034 = vadd.f32 %v1033, %v1032
        %v1035 = vadd.f32 %v982, %v1034
        %v1036 = vadd.f32 %v1035, %v719
        %v1037 = vmul.f32 %v1036, 0.5
        %v1038 = vmul.f32 %v1036, 0.70710677
        %v1039 = verf.f32.pop %v1038
        %v1040 = vadd.f32 %v1039, 1.0
        %v1041 = vmul.f32 %v1037, %v1040
        %s1042 = scalar_lea.vmem %s378, 32 [#allocation10]
        %1043 = vst [vmem:[%s1042] sm:$0xff] %v1041
        %v1044 = vmul.f32 %v1007, %v540
        %v1045 = vmul.f32 %v1003, %v547
        %v1046 = vadd.f32 %v1044, %v1045
        %v1047 = vmul.f32 %v1009, %v555
        %v1048 = vadd.f32 %v1046, %v1047
        %v1049 = vmul.f32 %v1011, %v563
        %v1050 = vmul.f32 %v1001, %v570
        %v1051 = vadd.f32 %v1049, %v1050
        %v1052 = vmul.f32 %v1013, %v578
        %v1053 = vadd.f32 %v1051, %v1052
        %v1054 = vmul.f32 %v1015, %v586
        %v1055 = vmul.f32 %v1005, %v593
        %v1056 = vadd.f32 %v1054, %v1055
        %v1057 = vmul.f32 %v1017, %v601
        %v1058 = vadd.f32 %v1056, %v1057
        %v1059 = vadd.f32 %v1048, %v1053
        %v1060 = vadd.f32 %v1059, %v1058
        %v1061 = vadd.f32 %v999, %v1060
        %v1062 = vmul.f32 %v1007, %v469
        %v1063 = vmul.f32 %v1003, %v476
        %v1064 = vadd.f32 %v1062, %v1063
        %v1065 = vmul.f32 %v1009, %v484
        %v1066 = vadd.f32 %v1064, %v1065
        %v1067 = vmul.f32 %v1011, %v492
        %v1068 = vmul.f32 %v1001, %v499
        %v1069 = vadd.f32 %v1067, %v1068
        %v1070 = vmul.f32 %v1013, %v507
        %v1071 = vadd.f32 %v1069, %v1070
        %v1072 = vmul.f32 %v1015, %v515
        %v1073 = vmul.f32 %v1005, %v522
        %v1074 = vadd.f32 %v1072, %v1073
        %v1075 = vmul.f32 %v1017, %v530
        %v1076 = vadd.f32 %v1074, %v1075
        %v1077 = vadd.f32 %v1066, %v1071
        %v1078 = vadd.f32 %v1077, %v1076
        %s1079 = scalar_lea.vmem %s320, 48 [#allocation2]
        %v1080 = vld [vmem:[%s1079] sm:$0xff]
        %v1081 = vrot.slane %v1080, 7
        %v1082 = vsel %vm430, %v1081, 0.0
        %v1083 = vrot.slane %v1080, 1
        %v1084 = vsel %vm434, %v1083, 0.0
        %1085 = vrot.lane.b32.xlu0 %v1082, 16
        %v1086 = vpop.permute.xlu0 %1085
        %1087 = vrot.lane.b32.xlu0 %v1082, 112
        %v1088 = vpop.permute.xlu0 %1087
        %1089 = vrot.lane.b32.xlu0 %v1080, 16
        %v1090 = vpop.permute.xlu0 %1089
        %1091 = vrot.lane.b32.xlu0 %v1080, 112
        %v1092 = vpop.permute.xlu0 %1091
        %1093 = vrot.lane.b32.xlu0 %v1084, 16
        %v1094 = vpop.permute.xlu0 %1093
        %1095 = vrot.lane.b32.xlu0 %v1084, 112
        %v1096 = vpop.permute.xlu0 %1095
        %v1097 = vmul.f32 %v1086, %v647
        %v1098 = vmul.f32 %v1082, %v654
        %v1099 = vadd.f32 %v1097, %v1098
        %v1100 = vmul.f32 %v1088, %v662
        %v1101 = vadd.f32 %v1099, %v1100
        %v1102 = vmul.f32 %v1090, %v670
        %v1103 = vmul.f32 %v1080, %v677
        %v1104 = vadd.f32 %v1102, %v1103
        %v1105 = vmul.f32 %v1092, %v685
        %v1106 = vadd.f32 %v1104, %v1105
        %v1107 = vmul.f32 %v1094, %v693
        %v1108 = vmul.f32 %v1084, %v700
        %v1109 = vadd.f32 %v1107, %v1108
        %v1110 = vmul.f32 %v1096, %v708
        %v1111 = vadd.f32 %v1109, %v1110
        %v1112 = vadd.f32 %v1101, %v1106
        %v1113 = vadd.f32 %v1112, %v1111
        %v1114 = vadd.f32 %v1061, %v1113
        %v1115 = vadd.f32 %v1114, %v719
        %v1116 = vmul.f32 %v1115, 0.5
        %v1117 = vmul.f32 %v1115, 0.70710677
        %v1118 = verf.f32.pop %v1117
        %v1119 = vadd.f32 %v1118, 1.0
        %v1120 = vmul.f32 %v1116, %v1119
        %s1121 = scalar_lea.vmem %s378, 40 [#allocation10]
        %1122 = vst [vmem:[%s1121] sm:$0xff] %v1120
        %v1123 = vmul.f32 %v1086, %v540
        %v1124 = vmul.f32 %v1082, %v547
        %v1125 = vadd.f32 %v1123, %v1124
        %v1126 = vmul.f32 %v1088, %v555
        %v1127 = vadd.f32 %v1125, %v1126
        %v1128 = vmul.f32 %v1090, %v563
        %v1129 = vmul.f32 %v1080, %v570
        %v1130 = vadd.f32 %v1128, %v1129
        %v1131 = vmul.f32 %v1092, %v578
        %v1132 = vadd.f32 %v1130, %v1131
        %v1133 = vmul.f32 %v1094, %v586
        %v1134 = vmul.f32 %v1084, %v593
        %v1135 = vadd.f32 %v1133, %v1134
        %v1136 = vmul.f32 %v1096, %v601
        %v1137 = vadd.f32 %v1135, %v1136
        %v1138 = vadd.f32 %v1127, %v1132
        %v1139 = vadd.f32 %v1138, %v1137
        %v1140 = vadd.f32 %v1078, %v1139
        %v1141 = vmul.f32 %v1086, %v469
        %v1142 = vmul.f32 %v1082, %v476
        %v1143 = vadd.f32 %v1141, %v1142
        %v1144 = vmul.f32 %v1088, %v484
        %v1145 = vadd.f32 %v1143, %v1144
        %v1146 = vmul.f32 %v1090, %v492
        %v1147 = vmul.f32 %v1080, %v499
        %v1148 = vadd.f32 %v1146, %v1147
        %v1149 = vmul.f32 %v1092, %v507
        %v1150 = vadd.f32 %v1148, %v1149
        %v1151 = vmul.f32 %v1094, %v515
        %v1152 = vmul.f32 %v1084, %v522
        %v1153 = vadd.f32 %v1151, %v1152
        %v1154 = vmul.f32 %v1096, %v530
        %v1155 = vadd.f32 %v1153, %v1154
        %v1156 = vadd.f32 %v1145, %v1150
        %v1157 = vadd.f32 %v1156, %v1155
        %s1158 = scalar_lea.vmem %s320, 56 [#allocation2]
        %v1159 = vld [vmem:[%s1158] sm:$0xff]
        %v1160 = vrot.slane %v1159, 7
        %v1161 = vsel %vm430, %v1160, 0.0
        %v1162 = vrot.slane %v1159, 1
        %v1163 = vsel %vm434, %v1162, 0.0
        %1164 = vrot.lane.b32.xlu0 %v1161, 16
        %v1165 = vpop.permute.xlu0 %1164
        %1166 = vrot.lane.b32.xlu0 %v1161, 112
        %v1167 = vpop.permute.xlu0 %1166
        %1168 = vrot.lane.b32.xlu0 %v1159, 16
        %v1169 = vpop.permute.xlu0 %1168
        %1170 = vrot.lane.b32.xlu0 %v1159, 112
        %v1171 = vpop.permute.xlu0 %1170
        %1172 = vrot.lane.b32.xlu0 %v1163, 16
        %v1173 = vpop.permute.xlu0 %1172
        %1174 = vrot.lane.b32.xlu0 %v1163, 112
        %v1175 = vpop.permute.xlu0 %1174
        %v1176 = vmul.f32 %v1165, %v647
        %v1177 = vmul.f32 %v1161, %v654
        %v1178 = vadd.f32 %v1176, %v1177
        %v1179 = vmul.f32 %v1167, %v662
        %v1180 = vadd.f32 %v1178, %v1179
        %v1181 = vmul.f32 %v1169, %v670
        %v1182 = vmul.f32 %v1159, %v677
        %v1183 = vadd.f32 %v1181, %v1182
        %v1184 = vmul.f32 %v1171, %v685
        %v1185 = vadd.f32 %v1183, %v1184
        %v1186 = vmul.f32 %v1173, %v693
        %v1187 = vmul.f32 %v1163, %v700
        %v1188 = vadd.f32 %v1186, %v1187
        %v1189 = vmul.f32 %v1175, %v708
        %v1190 = vadd.f32 %v1188, %v1189
        %v1191 = vadd.f32 %v1180, %v1185
        %v1192 = vadd.f32 %v1191, %v1190
        %v1193 = vadd.f32 %v1140, %v1192
        %v1194 = vadd.f32 %v1193, %v719
        %v1195 = vmul.f32 %v1194, 0.5
        %v1196 = vmul.f32 %v1194, 0.70710677
        %v1197 = verf.f32.pop %v1196
        %v1198 = vadd.f32 %v1197, 1.0
        %v1199 = vmul.f32 %v1195, %v1198
        %s1200 = scalar_lea.vmem %s378, 48 [#allocation10]
        %1201 = vst [vmem:[%s1200] sm:$0xff] %v1199
        %v1202 = vmul.f32 %v1165, %v540
        %v1203 = vmul.f32 %v1161, %v547
        %v1204 = vadd.f32 %v1202, %v1203
        %v1205 = vmul.f32 %v1167, %v555
        %v1206 = vadd.f32 %v1204, %v1205
        %v1207 = vmul.f32 %v1169, %v563
        %v1208 = vmul.f32 %v1159, %v570
        %v1209 = vadd.f32 %v1207, %v1208
        %v1210 = vmul.f32 %v1171, %v578
        %v1211 = vadd.f32 %v1209, %v1210
        %v1212 = vmul.f32 %v1173, %v586
        %v1213 = vmul.f32 %v1163, %v593
        %v1214 = vadd.f32 %v1212, %v1213
        %v1215 = vmul.f32 %v1175, %v601
        %v1216 = vadd.f32 %v1214, %v1215
        %v1217 = vadd.f32 %v1206, %v1211
        %v1218 = vadd.f32 %v1217, %v1216
        %v1219 = vadd.f32 %v1157, %v1218
        %v1220 = vld [vmem:[%s338] sm:$0xff]
        %s1221 = scalar_select %p390, 1, 0
        %v1222 = vstv %s1221
        %vm1223 = vcmp.eq.s32.totalorder %v1222, 1
        %v1224 = vsel %vm1223, %v1220, 0.0
        %v1225 = vrot.slane %v1224, 7
        %v1226 = vsel %vm430, %v1225, 0.0
        %v1227 = vrot.slane %v1224, 1
        %v1228 = vsel %vm434, %v1227, 0.0
        %1229 = vrot.lane.b32.xlu0 %v1226, 16
        %v1230 = vpop.permute.xlu0 %1229
        %1231 = vrot.lane.b32.xlu0 %v1226, 112
        %v1232 = vpop.permute.xlu0 %1231
        %1233 = vrot.lane.b32.xlu0 %v1224, 16
        %v1234 = vpop.permute.xlu0 %1233
        %1235 = vrot.lane.b32.xlu0 %v1224, 112
        %v1236 = vpop.permute.xlu0 %1235
        %1237 = vrot.lane.b32.xlu0 %v1228, 16
        %v1238 = vpop.permute.xlu0 %1237
        %1239 = vrot.lane.b32.xlu0 %v1228, 112
        %v1240 = vpop.permute.xlu0 %1239
        %v1241 = vmul.f32 %v1230, %v647
        %v1242 = vmul.f32 %v1226, %v654
        %v1243 = vadd.f32 %v1241, %v1242
        %v1244 = vmul.f32 %v1232, %v662
        %v1245 = vadd.f32 %v1243, %v1244
        %v1246 = vmul.f32 %v1234, %v670
        %v1247 = vmul.f32 %v1224, %v677
        %v1248 = vadd.f32 %v1246, %v1247
        %v1249 = vmul.f32 %v1236, %v685
        %v1250 = vadd.f32 %v1248, %v1249
        %v1251 = vmul.f32 %v1238, %v693
        %v1252 = vmul.f32 %v1228, %v700
        %v1253 = vadd.f32 %v1251, %v1252
        %v1254 = vmul.f32 %v1240, %v708
        %v1255 = vadd.f32 %v1253, %v1254
        %v1256 = vadd.f32 %v1245, %v1250
        %v1257 = vadd.f32 %v1256, %v1255
        %v1258 = vadd.f32 %v1219, %v1257
        %v1259 = vadd.f32 %v1258, %v719
        %v1260 = vmul.f32 %v1259, 0.5
        %v1261 = vmul.f32 %v1259, 0.70710677
        %v1262 = verf.f32.pop %v1261
        %v1263 = vadd.f32 %v1262, 1.0
        %v1264 = vmul.f32 %v1260, %v1263
        %s1265 = scalar_lea.vmem %s378, 56 [#allocation10]
        %1266 = vst [vmem:[%s1265] sm:$0xff] %v1264
        %s1267 = sand.u32 %s190, 1
        %s1268 = scalar_lea.sflag [#allocation4], %s1267
        %s1269 = sand.u32 %s190, 1
        %s1270 = smul.addr %s1269, 64
        %s1271 = scalar_lea.vmem [#allocation10], %s1270
        // Predicated region
        $region57: #{tpu_custom_call.1} parent=39 // pred_check
          %p1272 = pneg %p200
        $region58: #{tpu_custom_call.1} parent=39 // pred_check_branch
          %1274 = sbr.rel (%p1272) target = $region60
        $region59: #{tpu_custom_call.1} parent=39 // pred_region
          %s1275 = smul.u32 8, %s31
          %s1277 = ssub.s32 1024, 1024
          %1278 = vsyncadd %s1268, %s1277
          %s1279 = smul.addr %s30, 8
          %s1280 = sadd.s32 %s1275, %s1279
          %s1281 = smul.addr %s1280, 128
          %s1282 = scalar_lea.hbm %s5, %s1281
          %s1283 = sshll.u32 %s1271, 4
          %s1284 = int_to_ptr.vmem [resolvable:$true] %s1283
          %1289 = dma.vmem_to_hbm [thread:$0]  %s1284, 1024, %s1282, %s1268, 128, 128, 8
        $region60: #{tpu_custom_call.1} parent=39 // pred_fallthru
          _
      $region40: #{tpu_custom_call.1} parent=5 // pred_fallthru
        _
      %p1290 = scmp.le.s32.totalorder 2, %s21
      // Predicated region
      $region61: #{tpu_custom_call.1} parent=5 // pred_check
        %p1291 = pneg %p1290
      $region62: #{tpu_custom_call.1} parent=5 // pred_check_branch
        %1293 = sbr.rel (%p1291) target = $region64
      $region63: #{tpu_custom_call.1} parent=5 // pred_region
        %s1294 = ssub.s32 %s21, 2
        // Predicated region
        $region65: #{tpu_custom_call.1} parent=63 // pred_check
          %p1295 = pneg %p206
        $region66: #{tpu_custom_call.1} parent=63 // pred_check_branch
          %1297 = sbr.rel (%p1295) target = $region68
        $region67: #{tpu_custom_call.1} parent=63 // pred_region
          %s1298 = sand.u32 %s191, 1
          %s1299 = scalar_lea.sflag [#allocation4], %s1298
          %s1300 = sand.u32 %s191, 1
          %s1301 = smul.addr %s1300, 64
          %s1302 = scalar_lea.vmem [#allocation10], %s1301
          %1303 = dma.done %s1299, 1024
        $region68: #{tpu_custom_call.1} parent=63 // pred_fallthru
          _
      $region64: #{tpu_custom_call.1} parent=5 // pred_fallthru
        _
    $region6: #{tpu_custom_call.1} parent=1 // loop_footer
      %s25 = sadd.s32 1, %s21
    $region7: #{tpu_custom_call.1} parent=1 // loop_footer_branch
      %20 = sbr.rel target = $region3
    $region8: #{tpu_custom_call.1} parent=1 // loop_exit
      _
    %1304 = vsyncpa [#allocation3], 1
    %s1305 = scalar_lea.sflag [#allocation3], 1
    %1306 = vsyncpa %s1305, 1
    %1307 = vsyncpa [#allocation6], 1
    %s1308 = scalar_lea.sflag [#allocation6], 1
    %1309 = vsyncpa %s1308, 1
    %1310 = vsyncpa [#allocation9], 1
    %1311 = vsyncpa [#allocation4], 1
    %s1312 = scalar_lea.sflag [#allocation4], 1
    %1313 = vsyncpa %s1312, 1

</llo_original>
